<compile_context>
chip_gen: v7x
topology: tpu7x:2x2x1
jax: 0.10.0
libtpu: 0.0.40
codegen_flags: <defaults>
</compile_context>

<pallas_src>
import math
import numpy as np

import jax
import jax.numpy as jnp
from jax.experimental import pallas as pl
from jax.experimental.pallas import tpu as pltpu

# ----------------------------- static config --------------------------------
N_CTX = 8                      # n_context
D_MODEL = 768                  # BERT hidden size (fixed by the module)
D_ENTI = 256                   # entity text-embedding dim (Linear(512,...) => 2*256)
MAX_L = 24                     # max_txt_len = 1 + n_ctx + suffix tokens
N_SUF = MAX_L - 1 - N_CTX      # suffix token count = 15
NUM_BASE = 6
NUM_NOVEL = 3
N_CLS_TOTAL = 1 + NUM_BASE + NUM_NOVEL   # predicate classes incl. background id 0
N_ENTI = 12                    # number of entity classes (rows of enti_txt_embds)
SCALE = 1.0 / math.sqrt(float(D_MODEL))


def specify_clsids_range(split):
    split = split.lower()
    if split == 'base':
        return list(range(1, NUM_BASE + 1))
    elif split == 'novel':
        return list(range(NUM_BASE + 1, NUM_BASE + NUM_NOVEL + 1))
    elif split == 'all':
        return list(range(1, NUM_BASE + NUM_NOVEL + 1))
    raise AssertionError('split must be base, novel, or all')


# --------------------------- fused Pallas kernel ------------------------------
def _fused_kernel(so_ref, w1_ref, b1_ref, w2_ref, meta_ref,
                  subj_base_ref, obj_base_ref,
                  subj_out_ref, obj_out_ref):
    # ---- per-pair MLP: Linear(512,256) + ReLU -> Linear(256,1536, no bias) ----
    so = so_ref[0]                                                    # (1, 512)
    h = jnp.dot(so, w1_ref[...], preferred_element_type=jnp.float32) + b1_ref[...]
    h = jnp.maximum(h, 0.0)                                           # (1, 256)
    proj = jnp.dot(h, w2_ref[...], preferred_element_type=jnp.float32)  # (1, 1536)

    k = meta_ref[...]                                                 # (N_CTX, 768)

    def attend(q):                                                    # q: (1, 768)
        logits = jax.lax.dot_general(
            q, k, (((1,), (1,)), ((), ())),
            preferred_element_type=jnp.float32) * SCALE               # (1, N_CTX)
        m = jnp.max(logits, axis=-1, keepdims=True)
        e = jnp.exp(logits - m)
        attn = e / jnp.sum(e, axis=-1, keepdims=True)
        return jnp.dot(attn, k, preferred_element_type=jnp.float32)   # (1, 768)

    s_vec = attend(proj[:, :D_MODEL])                                 # (1, 768)
    o_vec = attend(proj[:, D_MODEL:])                                 # (1, 768)

    # ---- context-row mask: rows [1, 1+N_CTX) receive the attention vector ----
    row = jax.lax.broadcasted_iota(jnp.int32, (MAX_L, 1), 0)
    ctx_mask = jnp.logical_and(row >= 1, row < 1 + N_CTX).astype(jnp.float32)
    s_add = ctx_mask * s_vec                                          # (MAX_L, 768)
    o_add = ctx_mask * o_vec                                          # (MAX_L, 768)

    # ---- single broadcast-add + full-ref store per branch (no concats) ----
    subj_out_ref[...] = subj_base_ref[...] + s_add[None, :, :]        # (n_cls, MAX_L, 768)
    obj_out_ref[...] = obj_base_ref[...] + o_add[None, :, :]


def _fused_call(so_embds, subj_base, obj_base, params, n_pair, n_cls):
    out_sd = jax.ShapeDtypeStruct((n_pair * n_cls, MAX_L, D_MODEL), jnp.float32)

    flops = n_pair * 2 * (2 * D_ENTI * 256 + 256 * 2 * D_MODEL + 2 * 2 * N_CTX * D_MODEL)
    bytes_in = 4 * (so_embds.size + params['w1'].size + params['b1'].size +
                    params['w2'].size + params['meta_ctx'].size +
                    subj_base.size + obj_base.size)
    bytes_out = 4 * 2 * n_pair * n_cls * MAX_L * D_MODEL

    subj_tok, obj_tok = pl.pallas_call(
        _fused_kernel,
        out_shape=(out_sd, out_sd),
        grid=(n_pair,),
        in_specs=[
            # per-pair entity embedding row
            pl.BlockSpec((1, 1, 2 * D_ENTI), lambda p: (p, 0, 0)),
            # weights / contexts / base slabs: constant block index -> resident
            pl.BlockSpec((2 * D_ENTI, 256), lambda p: (0, 0)),
            pl.BlockSpec((1, 256), lambda p: (0, 0)),
            pl.BlockSpec((256, 2 * D_MODEL), lambda p: (0, 0)),
            pl.BlockSpec((N_CTX, D_MODEL), lambda p: (0, 0)),
            pl.BlockSpec((n_cls, MAX_L, D_MODEL), lambda p: (0, 0, 0)),
            pl.BlockSpec((n_cls, MAX_L, D_MODEL), lambda p: (0, 0, 0)),
        ],
        out_specs=(
            pl.BlockSpec((n_cls, MAX_L, D_MODEL), lambda p: (p, 0, 0)),
            pl.BlockSpec((n_cls, MAX_L, D_MODEL), lambda p: (p, 0, 0)),
        ),
        compiler_params=pltpu.CompilerParams(
            dimension_semantics=("parallel",),
            vmem_limit_bytes=12 * 1024 * 1024),
        cost_estimate=pl.CostEstimate(flops=flops,
                                      transcendentals=n_pair * 2 * N_CTX,
                                      bytes_accessed=bytes_in + bytes_out),
    )(so_embds, params['w1'], params['b1'], params['w2'], params['meta_ctx'],
      subj_base, obj_base)
    return subj_tok, obj_tok


# ------------------------------ forward --------------------------------------
def prompt_learner_forward(params, split, so_cls_ids):
    n_pair = int(so_cls_ids.shape[0])
    # entity-embedding gather + concat (glue, plain JAX — 2 tiny rows each)
    s_embd = params['enti_txt_embds'][so_cls_ids[:, 0], :]
    o_embd = params['enti_txt_embds'][so_cls_ids[:, 1], :]
    so_embds = jnp.concatenate([s_embd, o_embd], axis=-1)          # (n_pair, 512)
    so_embds = so_embds.reshape(n_pair, 1, 2 * D_ENTI)             # (n_pair, 1, 512)

    pids = specify_clsids_range(split)
    n_cls = len(pids)
    pids = jnp.asarray(pids, dtype=jnp.int32)
    prefix_sel = params['prefix_embds'][pids]                      # (n_cls, 1, 768)
    suffix_sel = params['suffix_embds'][pids]                      # (n_cls, N_SUF, 768)
    mask_sel = params['token_mask'][pids]                          # (n_cls, MAX_L)

    # loop-invariant base slabs [prefix | branch_ctx | suffix], built ONCE outside
    # the kernel (pair-independent), so the kernel does a single add+store per branch
    subj_ctx_b = jnp.broadcast_to(params['subj_ctx'][None], (n_cls, N_CTX, D_MODEL))
    obj_ctx_b = jnp.broadcast_to(params['obj_ctx'][None], (n_cls, N_CTX, D_MODEL))
    subj_base = jnp.concatenate([prefix_sel, subj_ctx_b, suffix_sel], axis=1)
    obj_base = jnp.concatenate([prefix_sel, obj_ctx_b, suffix_sel], axis=1)

    # fused hot path: MLP + attention + prompt assembly (one Pallas call, grid over pairs)
    subj_tok, obj_tok = _fused_call(so_embds, subj_base, obj_base,
                                    params, n_pair, n_cls)
    token_mask = jnp.tile(mask_sel, (n_pair, 1))                   # (n_pair*n_cls, MAX_L)
    return subj_tok, obj_tok, token_mask


# --------------------------- pure-JAX reference -------------------------------
def reference_forward(params, split, so_cls_ids):
    n_pair = so_cls_ids.shape[0]
    s_embd = params['enti_txt_embds'][so_cls_ids[:, 0]]
    o_embd = params['enti_txt_embds'][so_cls_ids[:, 1]]
    so = jnp.concatenate([s_embd, o_embd], -1)
    h = jnp.maximum(so @ params['w1'] + params['b1'], 0.0)
    proj = h @ params['w2']
    s_q, o_q = proj[:, :D_MODEL], proj[:, D_MODEL:]
    k = params['meta_ctx']
    s_vec = jax.nn.softmax((s_q @ k.T) * SCALE, axis=-1) @ k
    o_vec = jax.nn.softmax((o_q @ k.T) * SCALE, axis=-1) @ k
    s_ctx = params['subj_ctx'][None] + s_vec[:, None, :]
    o_ctx = params['obj_ctx'][None] + o_vec[:, None, :]
    pids = jnp.asarray(specify_clsids_range(split), jnp.int32)
    n_cls = pids.shape[0]
    prefix = jnp.broadcast_to(params['prefix_embds'][pids][None],
                              (n_pair, n_cls, 1, D_MODEL))
    suffix = jnp.broadcast_to(params['suffix_embds'][pids][None],
                              (n_pair, n_cls, N_SUF, D_MODEL))
    s_ctx_e = jnp.broadcast_to(s_ctx[:, None], (n_pair, n_cls, N_CTX, D_MODEL))
    o_ctx_e = jnp.broadcast_to(o_ctx[:, None], (n_pair, n_cls, N_CTX, D_MODEL))
    subj = jnp.concatenate([prefix, s_ctx_e, suffix], axis=2)
    obj = jnp.concatenate([prefix, o_ctx_e, suffix], axis=2)
    subj = subj.reshape(n_pair * n_cls, MAX_L, D_MODEL)
    obj = obj.reshape(n_pair * n_cls, MAX_L, D_MODEL)
    mask = jnp.tile(params['token_mask'][pids], (n_pair, 1))
    return subj, obj, mask


# ------------------------------- main -----------------------------------------
if __name__ == "__main__":
    key = jax.random.PRNGKey(0)
    ks = jax.random.split(key, 12)

    # synthetic deterministic parameters (shapes from the module's __init__)
    # TODO(synk): BERT tokenizer + pretrained word-embedding lookup and the
    # .npy entity-embedding load are replaced by synthetic tensors of the same
    # shapes (no checkpoint / file IO). relpos2embd is unused in forward.
    lengths = 1 + N_CTX + (jnp.arange(N_CLS_TOTAL) % 3) + 1    # per-class valid length
    token_mask = (jnp.arange(MAX_L)[None, :] < lengths[:, None]).astype(jnp.int32)
    params = {
        'enti_txt_embds': jax.random.normal(ks[0], (N_ENTI, D_ENTI), jnp.float32),
        'w1': 0.02 * jax.random.normal(ks[1], (2 * D_ENTI, 256), jnp.float32),
        'b1': 0.02 * jax.random.normal(ks[2], (1, 256), jnp.float32),
        'w2': 0.02 * jax.random.normal(ks[3], (256, 2 * D_MODEL), jnp.float32),
        'meta_ctx': 0.02 * jax.random.normal(ks[4], (N_CTX, D_MODEL), jnp.float32),
        'subj_ctx': 0.02 * jax.random.normal(ks[5], (N_CTX, D_MODEL), jnp.float32),
        'obj_ctx': 0.02 * jax.random.normal(ks[6], (N_CTX, D_MODEL), jnp.float32),
        'prefix_embds': 0.02 * jax.random.normal(ks[7], (N_CLS_TOTAL, 1, D_MODEL), jnp.float32),
        'suffix_embds': 0.02 * jax.random.normal(ks[8], (N_CLS_TOTAL, N_SUF, D_MODEL), jnp.float32),
        'token_mask': token_mask,
    }

    n_pair = 2
    so_cls_ids = jnp.array([[1, 3], [5, 2]], dtype=jnp.int32)   # (n_pair, 2)

    subj_tok, obj_tok, mask = prompt_learner_forward(params, 'base', so_cls_ids)
    jax.block_until_ready((subj_tok, obj_tok, mask))

    # correctness check against a plain-JAX reference
    subj_ref, obj_ref, mask_ref = reference_forward(params, 'base', so_cls_ids)
    n_cls = NUM_BASE
    assert subj_tok.shape == (n_pair * n_cls, MAX_L, D_MODEL), subj_tok.shape
    assert obj_tok.shape == (n_pair * n_cls, MAX_L, D_MODEL), obj_tok.shape
    assert mask.shape == (n_pair * n_cls, MAX_L), mask.shape
    np.testing.assert_allclose(np.asarray(subj_tok), np.asarray(subj_ref),
                               rtol=1e-3, atol=1e-4)
    np.testing.assert_allclose(np.asarray(obj_tok), np.asarray(obj_ref),
                               rtol=1e-3, atol=1e-4)
    np.testing.assert_array_equal(np.asarray(mask), np.asarray(mask_ref))

    print("KERNEL_OK")
</pallas_src>

<mosaic_0001>
module attributes {stable_mosaic.version = 11 : i64} {
  func.func @_fused_kernel(%arg0: i32, %arg1: memref<1x1x512xf32, #tpu.memory_space<vmem>>, %arg2: memref<512x256xf32, #tpu.memory_space<vmem>>, %arg3: memref<1x256xf32, #tpu.memory_space<vmem>>, %arg4: memref<256x1536xf32, #tpu.memory_space<vmem>>, %arg5: memref<8x768xf32, #tpu.memory_space<vmem>>, %arg6: memref<6x24x768xf32, #tpu.memory_space<vmem>>, %arg7: memref<6x24x768xf32, #tpu.memory_space<vmem>>, %arg8: memref<6x24x768xf32, #tpu.memory_space<vmem>>, %arg9: memref<6x24x768xf32, #tpu.memory_space<vmem>>) attributes {dimension_semantics = [#tpu.dimension_semantics<parallel>], iteration_bounds = array<i64: 2>, scalar_prefetch = 0 : i64, scratch_operands = 0 : i64, tpu.core_type = #tpu.core_type<tc>, window_params = [{transform_indices = @transform_0, window_bounds = array<i64: 1, 1, 512>}, {pipeline_mode = #tpu.pipeline_mode<synchronous>, transform_indices = @transform_1, window_bounds = array<i64: 512, 256>}, {pipeline_mode = #tpu.pipeline_mode<synchronous>, transform_indices = @transform_2, window_bounds = array<i64: 1, 256>}, {pipeline_mode = #tpu.pipeline_mode<synchronous>, transform_indices = @transform_3, window_bounds = array<i64: 256, 1536>}, {pipeline_mode = #tpu.pipeline_mode<synchronous>, transform_indices = @transform_4, window_bounds = array<i64: 8, 768>}, {pipeline_mode = #tpu.pipeline_mode<synchronous>, transform_indices = @transform_5, window_bounds = array<i64: 6, 24, 768>}, {pipeline_mode = #tpu.pipeline_mode<synchronous>, transform_indices = @transform_6, window_bounds = array<i64: 6, 24, 768>}, {transform_indices = @transform_7, window_bounds = array<i64: 6, 24, 768>}, {transform_indices = @transform_8, window_bounds = array<i64: 6, 24, 768>}]} {
    %c0 = arith.constant 0 : index
    %c0_0 = arith.constant 0 : index
    %c0_1 = arith.constant 0 : index
    %0 = vector.load %arg1[%c0, %c0_0, %c0_1] : memref<1x1x512xf32, #tpu.memory_space<vmem>>, vector<1x1x512xf32>
    %1 = vector.shape_cast %0 : vector<1x1x512xf32> to vector<1x512xf32>
    %c0_2 = arith.constant 0 : index
    %c0_3 = arith.constant 0 : index
    %2 = vector.load %arg2[%c0_2, %c0_3] : memref<512x256xf32, #tpu.memory_space<vmem>>, vector<512x256xf32>
    %cst = arith.constant dense<0.000000e+00> : vector<1x256xf32>
    %3 = tpu.matmul %1, %2, %cst {dimension_numbers = #tpu.dot_dimension_numbers<[1], [0], [0], [1], [0, 0, 1, 1], [], []>} : vector<1x512xf32>, vector<512x256xf32>, vector<1x256xf32> -> vector<1x256xf32>
    %c0_4 = arith.constant 0 : index
    %c0_5 = arith.constant 0 : index
    %4 = vector.load %arg3[%c0_4, %c0_5] : memref<1x256xf32, #tpu.memory_space<vmem>>, vector<1x256xf32>
    %5 = arith.addf %3, %4 : vector<1x256xf32>
    %cst_6 = arith.constant 0.000000e+00 : f32
    %6 = vector.broadcast %cst_6 : f32 to vector<1x256xf32>
    %7 = arith.maximumf %5, %6 : vector<1x256xf32>
    %c0_7 = arith.constant 0 : index
    %c0_8 = arith.constant 0 : index
    %8 = vector.load %arg4[%c0_7, %c0_8] : memref<256x1536xf32, #tpu.memory_space<vmem>>, vector<256x1536xf32>
    %cst_9 = arith.constant dense<0.000000e+00> : vector<1x1536xf32>
    %9 = tpu.matmul %7, %8, %cst_9 {dimension_numbers = #tpu.dot_dimension_numbers<[1], [0], [0], [1], [0, 0, 1, 1], [], []>} : vector<1x256xf32>, vector<256x1536xf32>, vector<1x1536xf32> -> vector<1x1536xf32>
    %c0_10 = arith.constant 0 : index
    %c0_11 = arith.constant 0 : index
    %10 = vector.load %arg5[%c0_10, %c0_11] : memref<8x768xf32, #tpu.memory_space<vmem>>, vector<8x768xf32>
    %11 = vector.extract_strided_slice %9 {offsets = [0, 0], sizes = [1, 768], strides = [1, 1]} : vector<1x1536xf32> to vector<1x768xf32>
    %cst_12 = arith.constant dense<0.000000e+00> : vector<1x8xf32>
    %12 = tpu.matmul %11, %10, %cst_12 {dimension_numbers = #tpu.dot_dimension_numbers<[1], [1], [0], [0], [0, 0, 1, 0], [], []>} : vector<1x768xf32>, vector<8x768xf32>, vector<1x8xf32> -> vector<1x8xf32>
    %cst_13 = arith.constant 0.0360843912 : f32
    %13 = vector.broadcast %cst_13 : f32 to vector<1x8xf32>
    %14 = arith.mulf %12, %13 : vector<1x8xf32>
    %cst_14 = arith.constant dense<0xFF800000> : vector<1xf32>
    %15 = vector.multi_reduction <maximumf>, %14, %cst_14 [1] : vector<1x8xf32> to vector<1xf32>
    %16 = vector.shape_cast %15 : vector<1xf32> to vector<1x1xf32>
    %17 = vector.broadcast %16 : vector<1x1xf32> to vector<1x8xf32>
    %18 = arith.subf %14, %17 : vector<1x8xf32>
    %19 = math.exp %18 : vector<1x8xf32>
    %cst_15 = arith.constant dense<0.000000e+00> : vector<1xf32>
    %20 = vector.multi_reduction <add>, %19, %cst_15 [1] : vector<1x8xf32> to vector<1xf32>
    %21 = vector.shape_cast %20 : vector<1xf32> to vector<1x1xf32>
    %22 = vector.broadcast %21 : vector<1x1xf32> to vector<1x8xf32>
    %23 = arith.divf %19, %22 : vector<1x8xf32>
    %cst_16 = arith.constant dense<0.000000e+00> : vector<1x768xf32>
    %24 = tpu.matmul %23, %10, %cst_16 {dimension_numbers = #tpu.dot_dimension_numbers<[1], [0], [0], [1], [0, 0, 1, 1], [], []>} : vector<1x8xf32>, vector<8x768xf32>, vector<1x768xf32> -> vector<1x768xf32>
    %25 = vector.extract_strided_slice %9 {offsets = [0, 768], sizes = [1, 768], strides = [1, 1]} : vector<1x1536xf32> to vector<1x768xf32>
    %cst_17 = arith.constant dense<0.000000e+00> : vector<1x8xf32>
    %26 = tpu.matmul %25, %10, %cst_17 {dimension_numbers = #tpu.dot_dimension_numbers<[1], [1], [0], [0], [0, 0, 1, 0], [], []>} : vector<1x768xf32>, vector<8x768xf32>, vector<1x8xf32> -> vector<1x8xf32>
    %cst_18 = arith.constant 0.0360843912 : f32
    %27 = vector.broadcast %cst_18 : f32 to vector<1x8xf32>
    %28 = arith.mulf %26, %27 : vector<1x8xf32>
    %cst_19 = arith.constant dense<0xFF800000> : vector<1xf32>
    %29 = vector.multi_reduction <maximumf>, %28, %cst_19 [1] : vector<1x8xf32> to vector<1xf32>
    %30 = vector.shape_cast %29 : vector<1xf32> to vector<1x1xf32>
    %31 = vector.broadcast %30 : vector<1x1xf32> to vector<1x8xf32>
    %32 = arith.subf %28, %31 : vector<1x8xf32>
    %33 = math.exp %32 : vector<1x8xf32>
    %cst_20 = arith.constant dense<0.000000e+00> : vector<1xf32>
    %34 = vector.multi_reduction <add>, %33, %cst_20 [1] : vector<1x8xf32> to vector<1xf32>
    %35 = vector.shape_cast %34 : vector<1xf32> to vector<1x1xf32>
    %36 = vector.broadcast %35 : vector<1x1xf32> to vector<1x8xf32>
    %37 = arith.divf %33, %36 : vector<1x8xf32>
    %cst_21 = arith.constant dense<0.000000e+00> : vector<1x768xf32>
    %38 = tpu.matmul %37, %10, %cst_21 {dimension_numbers = #tpu.dot_dimension_numbers<[1], [0], [0], [1], [0, 0, 1, 1], [], []>} : vector<1x8xf32>, vector<8x768xf32>, vector<1x768xf32> -> vector<1x768xf32>
    %39 = tpu.iota {dimensions = array<i32: 0>} : vector<24x1xi32>
    %c1_i32 = arith.constant 1 : i32
    %40 = vector.broadcast %c1_i32 : i32 to vector<24x1xi32>
    %41 = arith.cmpi sge, %39, %40 : vector<24x1xi32>
    %c9_i32 = arith.constant 9 : i32
    %42 = vector.broadcast %c9_i32 : i32 to vector<24x1xi32>
    %43 = arith.cmpi slt, %39, %42 : vector<24x1xi32>
    %44 = arith.andi %41, %43 : vector<24x1xi1>
    %45 = arith.extui %44 : vector<24x1xi1> to vector<24x1xi32>
    %46 = arith.sitofp %45 : vector<24x1xi32> to vector<24x1xf32>
    %47 = vector.broadcast %46 : vector<24x1xf32> to vector<24x768xf32>
    %48 = vector.broadcast %24 : vector<1x768xf32> to vector<24x768xf32>
    %49 = arith.mulf %47, %48 : vector<24x768xf32>
    %50 = vector.broadcast %46 : vector<24x1xf32> to vector<24x768xf32>
    %51 = vector.broadcast %38 : vector<1x768xf32> to vector<24x768xf32>
    %52 = arith.mulf %50, %51 : vector<24x768xf32>
    %c0_22 = arith.constant 0 : index
    %c0_23 = arith.constant 0 : index
    %c0_24 = arith.constant 0 : index
    %53 = vector.load %arg6[%c0_22, %c0_23, %c0_24] : memref<6x24x768xf32, #tpu.memory_space<vmem>>, vector<6x24x768xf32>
    %54 = vector.shape_cast %49 : vector<24x768xf32> to vector<1x24x768xf32>
    %55 = vector.broadcast %54 : vector<1x24x768xf32> to vector<6x24x768xf32>
    %56 = arith.addf %53, %55 : vector<6x24x768xf32>
    %c0_25 = arith.constant 0 : index
    %c0_26 = arith.constant 0 : index
    %c0_27 = arith.constant 0 : index
    %57 = vector.load %arg8[%c0_25, %c0_26, %c0_27] : memref<6x24x768xf32, #tpu.memory_space<vmem>>, vector<6x24x768xf32>
    tpu.vector_store %arg8[%c0_25, %c0_26, %c0_27], %56 {strides = array<i32>} : memref<6x24x768xf32, #tpu.memory_space<vmem>>, vector<6x24x768xf32>,
    %c0_28 = arith.constant 0 : index
    %c0_29 = arith.constant 0 : index
    %c0_30 = arith.constant 0 : index
    %58 = vector.load %arg7[%c0_28, %c0_29, %c0_30] : memref<6x24x768xf32, #tpu.memory_space<vmem>>, vector<6x24x768xf32>
    %59 = vector.shape_cast %52 : vector<24x768xf32> to vector<1x24x768xf32>
    %60 = vector.broadcast %59 : vector<1x24x768xf32> to vector<6x24x768xf32>
    %61 = arith.addf %58, %60 : vector<6x24x768xf32>
    %c0_31 = arith.constant 0 : index
    %c0_32 = arith.constant 0 : index
    %c0_33 = arith.constant 0 : index
    %62 = vector.load %arg9[%c0_31, %c0_32, %c0_33] : memref<6x24x768xf32, #tpu.memory_space<vmem>>, vector<6x24x768xf32>
    tpu.vector_store %arg9[%c0_31, %c0_32, %c0_33], %61 {strides = array<i32>} : memref<6x24x768xf32, #tpu.memory_space<vmem>>, vector<6x24x768xf32>,
    return
  }
  func.func @transform_0(%arg0: i32) -> (i32, i32, i32) {
    %c0_i32 = arith.constant 0 : i32
    %c0_i32_0 = arith.constant 0 : i32
    %c0_i32_1 = arith.constant 0 : i32
    return %arg0, %c0_i32, %c0_i32_0 : i32, i32, i32
  }
  func.func @transform_1(%arg0: i32) -> (i32, i32) {
    %c0_i32 = arith.constant 0 : i32
    %c0_i32_0 = arith.constant 0 : i32
    %c0_i32_1 = arith.constant 0 : i32
    return %c0_i32, %c0_i32_0 : i32, i32
  }
  func.func @transform_2(%arg0: i32) -> (i32, i32) {
    %c0_i32 = arith.constant 0 : i32
    %c0_i32_0 = arith.constant 0 : i32
    %c0_i32_1 = arith.constant 0 : i32
    return %c0_i32, %c0_i32_0 : i32, i32
  }
  func.func @transform_3(%arg0: i32) -> (i32, i32) {
    %c0_i32 = arith.constant 0 : i32
    %c0_i32_0 = arith.constant 0 : i32
    %c0_i32_1 = arith.constant 0 : i32
    return %c0_i32, %c0_i32_0 : i32, i32
  }
  func.func @transform_4(%arg0: i32) -> (i32, i32) {
    %c0_i32 = arith.constant 0 : i32
    %c0_i32_0 = arith.constant 0 : i32
    %c0_i32_1 = arith.constant 0 : i32
    return %c0_i32, %c0_i32_0 : i32, i32
  }
  func.func @transform_5(%arg0: i32) -> (i32, i32, i32) {
    %c0_i32 = arith.constant 0 : i32
    %c0_i32_0 = arith.constant 0 : i32
    %c0_i32_1 = arith.constant 0 : i32
    %c0_i32_2 = arith.constant 0 : i32
    return %c0_i32, %c0_i32_0, %c0_i32_1 : i32, i32, i32
  }
  func.func @transform_6(%arg0: i32) -> (i32, i32, i32) {
    %c0_i32 = arith.constant 0 : i32
    %c0_i32_0 = arith.constant 0 : i32
    %c0_i32_1 = arith.constant 0 : i32
    %c0_i32_2 = arith.constant 0 : i32
    return %c0_i32, %c0_i32_0, %c0_i32_1 : i32, i32, i32
  }
  func.func @transform_7(%arg0: i32) -> (i32, i32, i32) {
    %c0_i32 = arith.constant 0 : i32
    %c0_i32_0 = arith.constant 0 : i32
    %c0_i32_1 = arith.constant 0 : i32
    return %arg0, %c0_i32, %c0_i32_0 : i32, i32, i32
  }
  func.func @transform_8(%arg0: i32) -> (i32, i32, i32) {
    %c0_i32 = arith.constant 0 : i32
    %c0_i32_0 = arith.constant 0 : i32
    %c0_i32_1 = arith.constant 0 : i32
    return %arg0, %c0_i32, %c0_i32_0 : i32, i32, i32
  }
}

</mosaic_0001>

<llo_original>
// kernel: tpu_custom_call.1
$region0: #{tpu_custom_call.1}
  #allocation0 [shape = 'u32[]', space=smem, size = 0x4, offset = 0x4, fixed_abs, tag = 'smem constant byte address 0x4 - core index']
  #allocation1 [shape = 'u32[144,128]{1,0:T(1,128)}', space=vmem, size = 0x12000, scoped, tag = 'internal scratch']
  %s0 = inlined_call_operand.hbm [shape: f32[2,1,512], index: 0, kind: input, shape index: {}]
  %s1 = inlined_call_operand.hbm [shape: f32[512,256], index: 1, kind: input, shape index: {}]
  %s2 = inlined_call_operand.hbm [shape: f32[1,256], index: 2, kind: input, shape index: {}]
  %s3 = inlined_call_operand.hbm [shape: f32[256,1536], index: 3, kind: input, shape index: {}]
  %s4 = inlined_call_operand.hbm [shape: f32[8,768], index: 4, kind: input, shape index: {}]
  %s5 = inlined_call_operand.hbm [shape: f32[6,24,768], index: 5, kind: input, shape index: {}]
  %s6 = inlined_call_operand.hbm [shape: f32[6,24,768], index: 6, kind: input, shape index: {}]
  %s7 = inlined_call_operand.hbm [shape: f32[12,24,768], index: 7, kind: output, shape index: {0}]
  %s8 = inlined_call_operand.hbm [shape: f32[12,24,768], index: 8, kind: output, shape index: {1}]
  %9 = xla_tuple %s7, %s8
  %s10 = sld [smem:[#allocation0]]
  $region97: #{tpu_custom_call.1} parent=0
    _
  %s12 = ssub.s32 1, %s10
  %s13 = scalar_select 0, %s12, %s10
  $region1: #{tpu_custom_call.1} parent=0
    #allocation2 [shape = 'u8[4096]{0}', space=vmem, size = 0x1000, scoped, tag = 'input window, operand 0']
    #allocation3 [shape = 's32[2]{0}', space=sflag, size = 0x8, scoped, tag = 'scoped memory for tpu_custom_call.1']
    #allocation4 [shape = 's32[2]{0}', space=sflag, size = 0x8, scoped, tag = 'scoped memory for tpu_custom_call.1']
    #allocation5 [shape = 'u8[524288]{0}', space=vmem, size = 0x80000, scoped, tag = 'input window, operand 1, single buffered']
    #allocation6 [shape = 's32[1]{0}', space=sflag, size = 0x4, scoped, tag = 'scoped memory for tpu_custom_call.1']
    #allocation7 [shape = 'u8[1024]{0}', space=vmem, size = 0x400, scoped, tag = 'input window, operand 2, single buffered']
    #allocation8 [shape = 'u8[1572864]{0}', space=vmem, size = 0x180000, scoped, tag = 'input window, operand 3, single buffered']
    #allocation9 [shape = 's32[1]{0}', space=sflag, size = 0x4, scoped, tag = 'scoped memory for tpu_custom_call.1']
    #allocation10 [shape = 'u8[24576]{0}', space=vmem, size = 0x6000, scoped, tag = 'input window, operand 4, single buffered']
    #allocation11 [shape = 'u8[442368]{0}', space=vmem, size = 0x6c000, scoped, tag = 'input window, operand 5, single buffered']
    #allocation12 [shape = 's32[1]{0}', space=sflag, size = 0x4, scoped, tag = 'scoped memory for tpu_custom_call.1']
    #allocation13 [shape = 'u8[442368]{0}', space=vmem, size = 0x6c000, scoped, tag = 'input window, operand 6, single buffered']
    #allocation14 [shape = 'u8[884736]{0}', space=vmem, size = 0xd8000, scoped, tag = 'output window, operand 0']
    #allocation15 [shape = 'u8[884736]{0}', space=vmem, size = 0xd8000, scoped, tag = 'output window, operand 1']
    #allocation16 [shape = 's32[2]{0}', space=sflag, size = 0x8, scoped, tag = 'scoped memory for tpu_custom_call.1']
    %14 = vsyncpa [#allocation3], 0
    %s15 = scalar_lea.sflag [#allocation3], 1
    %16 = vsyncpa %s15, 0
    %17 = vsyncpa [#allocation6], 0
    %18 = vsyncpa [#allocation9], 0
    %19 = vsyncpa [#allocation12], 0
    %20 = vsyncpa [#allocation4], 0
    %s21 = scalar_lea.sflag [#allocation4], 1
    %22 = vsyncpa %s21, 0
    %23 = vsyncpa [#allocation16], 0
    %s24 = scalar_lea.sflag [#allocation16], 1
    %25 = vsyncpa %s24, 0
    loop: start=0, step=1, limit=4
    $region2: #{tpu_custom_call.1} parent=1 // loop_pre_header
      _
    $region3: #{tpu_custom_call.1} parent=1 // loop_header
      %s27 = sphi 0, %s31
      %p28 = scmp.ge.s32.totalorder %s27, 4
      %s37 = sphi 0, %s39
      %s40 = sphi 0, %s37
      %s41 = sphi 0, %s40
      %s57 = sphi 0, %s41
      %s61 = sphi 0, %s61
      %s63 = sphi 0, %s61
      %s64 = sphi 0, %s63
      %s78 = sphi 0, %s64
      %s82 = sphi 0, %s82
      %s84 = sphi 0, %s82
      %s85 = sphi 0, %s84
      %s99 = sphi 0, %s85
      %s103 = sphi 0, %s103
      %s105 = sphi 0, %s103
      %s106 = sphi 0, %s105
      %s120 = sphi 0, %s106
      %s124 = sphi 0, %s124
      %s126 = sphi 0, %s124
      %s127 = sphi 0, %s126
      %s141 = sphi 0, %s127
      %s145 = sphi 0, %s145
      %s147 = sphi 0, %s145
      %s148 = sphi 0, %s147
      %s162 = sphi 0, %s148
      %s166 = sphi 0, %s166
      %s168 = sphi 0, %s166
      %s169 = sphi 0, %s168
      %s183 = sphi 0, %s169
      %s189 = sphi 0, %s191
      %s192 = sphi 0, %s189
      %s193 = sphi 0, %s192
      %s209 = sphi 0, %s193
      %s215 = sphi 0, %s217
      %s218 = sphi 0, %s215
      %s219 = sphi 0, %s218
      %s235 = sphi 0, %s219
    $region4: #{tpu_custom_call.1} parent=1 // loop_header_branch
      %30 = sbr.rel (%p28) target = $region8
    $region5: #{tpu_custom_call.1} parent=1 // loop_body
      %s32 = ssub.s32 %s27, 1
      %s33 = ssub.s32 %s27, 2
      %s34 = sadd.s32 %s27, 1
      %s35 = ssub.s32 %s27, %s34
      %p36 = scmp.eq.s32.totalorder %s35, 0
      %s38 = sadd.s32 %s37, 1
      %s39 = scalar_select %p36, %s37, %s38
      %p42 = pneg %p36
      %p43 = scmp.eq.s32.totalorder %s27, 1
      %p44 = por %p42, %p43
      %p45 = scmp.ne.s32.totalorder %s37, %s40
      %p46 = scmp.eq.s32.totalorder %s27, 0
      %p47 = por %p45, %p46
      %p48 = scmp.ne.s32.totalorder %s37, %s40
      %p49 = scmp.eq.s32.totalorder %s32, 1
      %p50 = por %p48, %p49
      %p51 = scmp.ne.s32.totalorder %s40, %s41
      %p52 = scmp.eq.s32.totalorder %s32, 0
      %p53 = por %p51, %p52
      %p54 = scmp.ne.s32.totalorder %s40, %s41
      %p55 = scmp.eq.s32.totalorder %s33, 1
      %p56 = por %p54, %p55
      %p58 = scmp.ne.s32.totalorder %s41, %s57
      %p59 = scmp.eq.s32.totalorder %s33, 0
      %p60 = por %p58, %p59
      %s62 = sadd.s32 %s61, 1
      %p65 = scmp.eq.s32.totalorder %s27, 1
      %p66 = scmp.ne.s32.totalorder %s61, %s63
      %p67 = scmp.eq.s32.totalorder %s27, 0
      %p68 = por %p66, %p67
      %p69 = scmp.ne.s32.totalorder %s61, %s63
      %p70 = scmp.eq.s32.totalorder %s32, 1
      %p71 = por %p69, %p70
      %p72 = scmp.ne.s32.totalorder %s63, %s64
      %p73 = scmp.eq.s32.totalorder %s32, 0
      %p74 = por %p72, %p73
      %p75 = scmp.ne.s32.totalorder %s63, %s64
      %p76 = scmp.eq.s32.totalorder %s33, 1
      %p77 = por %p75, %p76
      %p79 = scmp.ne.s32.totalorder %s64, %s78
      %p80 = scmp.eq.s32.totalorder %s33, 0
      %p81 = por %p79, %p80
      %s83 = sadd.s32 %s82, 1
      %p86 = scmp.eq.s32.totalorder %s27, 1
      %p87 = scmp.ne.s32.totalorder %s82, %s84
      %p88 = scmp.eq.s32.totalorder %s27, 0
      %p89 = por %p87, %p88
      %p90 = scmp.ne.s32.totalorder %s82, %s84
      %p91 = scmp.eq.s32.totalorder %s32, 1
      %p92 = por %p90, %p91
      %p93 = scmp.ne.s32.totalorder %s84, %s85
      %p94 = scmp.eq.s32.totalorder %s32, 0
      %p95 = por %p93, %p94
      %p96 = scmp.ne.s32.totalorder %s84, %s85
      %p97 = scmp.eq.s32.totalorder %s33, 1
      %p98 = por %p96, %p97
      %p100 = scmp.ne.s32.totalorder %s85, %s99
      %p101 = scmp.eq.s32.totalorder %s33, 0
      %p102 = por %p100, %p101
      %s104 = sadd.s32 %s103, 1
      %p107 = scmp.eq.s32.totalorder %s27, 1
      %p108 = scmp.ne.s32.totalorder %s103, %s105
      %p109 = scmp.eq.s32.totalorder %s27, 0
      %p110 = por %p108, %p109
      %p111 = scmp.ne.s32.totalorder %s103, %s105
      %p112 = scmp.eq.s32.totalorder %s32, 1
      %p113 = por %p111, %p112
      %p114 = scmp.ne.s32.totalorder %s105, %s106
      %p115 = scmp.eq.s32.totalorder %s32, 0
      %p116 = por %p114, %p115
      %p117 = scmp.ne.s32.totalorder %s105, %s106
      %p118 = scmp.eq.s32.totalorder %s33, 1
      %p119 = por %p117, %p118
      %p121 = scmp.ne.s32.totalorder %s106, %s120
      %p122 = scmp.eq.s32.totalorder %s33, 0
      %p123 = por %p121, %p122
      %s125 = sadd.s32 %s124, 1
      %p128 = scmp.eq.s32.totalorder %s27, 1
      %p129 = scmp.ne.s32.totalorder %s124, %s126
      %p130 = scmp.eq.s32.totalorder %s27, 0
      %p131 = por %p129, %p130
      %p132 = scmp.ne.s32.totalorder %s124, %s126
      %p133 = scmp.eq.s32.totalorder %s32, 1
      %p134 = por %p132, %p133
      %p135 = scmp.ne.s32.totalorder %s126, %s127
      %p136 = scmp.eq.s32.totalorder %s32, 0
      %p137 = por %p135, %p136
      %p138 = scmp.ne.s32.totalorder %s126, %s127
      %p139 = scmp.eq.s32.totalorder %s33, 1
      %p140 = por %p138, %p139
      %p142 = scmp.ne.s32.totalorder %s127, %s141
      %p143 = scmp.eq.s32.totalorder %s33, 0
      %p144 = por %p142, %p143
      %s146 = sadd.s32 %s145, 1
      %p149 = scmp.eq.s32.totalorder %s27, 1
      %p150 = scmp.ne.s32.totalorder %s145, %s147
      %p151 = scmp.eq.s32.totalorder %s27, 0
      %p152 = por %p150, %p151
      %p153 = scmp.ne.s32.totalorder %s145, %s147
      %p154 = scmp.eq.s32.totalorder %s32, 1
      %p155 = por %p153, %p154
      %p156 = scmp.ne.s32.totalorder %s147, %s148
      %p157 = scmp.eq.s32.totalorder %s32, 0
      %p158 = por %p156, %p157
      %p159 = scmp.ne.s32.totalorder %s147, %s148
      %p160 = scmp.eq.s32.totalorder %s33, 1
      %p161 = por %p159, %p160
      %p163 = scmp.ne.s32.totalorder %s148, %s162
      %p164 = scmp.eq.s32.totalorder %s33, 0
      %p165 = por %p163, %p164
      %s167 = sadd.s32 %s166, 1
      %p170 = scmp.eq.s32.totalorder %s27, 1
      %p171 = scmp.ne.s32.totalorder %s166, %s168
      %p172 = scmp.eq.s32.totalorder %s27, 0
      %p173 = por %p171, %p172
      %p174 = scmp.ne.s32.totalorder %s166, %s168
      %p175 = scmp.eq.s32.totalorder %s32, 1
      %p176 = por %p174, %p175
      %p177 = scmp.ne.s32.totalorder %s168, %s169
      %p178 = scmp.eq.s32.totalorder %s32, 0
      %p179 = por %p177, %p178
      %p180 = scmp.ne.s32.totalorder %s168, %s169
      %p181 = scmp.eq.s32.totalorder %s33, 1
      %p182 = por %p180, %p181
      %p184 = scmp.ne.s32.totalorder %s169, %s183
      %p185 = scmp.eq.s32.totalorder %s33, 0
      %p186 = por %p184, %p185
      %s187 = ssub.s32 %s27, %s34
      %p188 = scmp.eq.s32.totalorder %s187, 0
      %s190 = sadd.s32 %s189, 1
      %s191 = scalar_select %p188, %s189, %s190
      %p194 = pneg %p188
      %p195 = scmp.eq.s32.totalorder %s27, 1
      %p196 = por %p194, %p195
      %p197 = scmp.ne.s32.totalorder %s189, %s192
      %p198 = scmp.eq.s32.totalorder %s27, 0
      %p199 = por %p197, %p198
      %p200 = scmp.ne.s32.totalorder %s189, %s192
      %p201 = scmp.eq.s32.totalorder %s32, 1
      %p202 = por %p200, %p201
      %p203 = scmp.ne.s32.totalorder %s192, %s193
      %p204 = scmp.eq.s32.totalorder %s32, 0
      %p205 = por %p203, %p204
      %p206 = scmp.ne.s32.totalorder %s192, %s193
      %p207 = scmp.eq.s32.totalorder %s33, 1
      %p208 = por %p206, %p207
      %p210 = scmp.ne.s32.totalorder %s193, %s209
      %p211 = scmp.eq.s32.totalorder %s33, 0
      %p212 = por %p210, %p211
      %s213 = ssub.s32 %s27, %s34
      %p214 = scmp.eq.s32.totalorder %s213, 0
      %s216 = sadd.s32 %s215, 1
      %s217 = scalar_select %p214, %s215, %s216
      %p220 = pneg %p214
      %p221 = scmp.eq.s32.totalorder %s27, 1
      %p222 = por %p220, %p221
      %p223 = scmp.ne.s32.totalorder %s215, %s218
      %p224 = scmp.eq.s32.totalorder %s27, 0
      %p225 = por %p223, %p224
      %p226 = scmp.ne.s32.totalorder %s215, %s218
      %p227 = scmp.eq.s32.totalorder %s32, 1
      %p228 = por %p226, %p227
      %p229 = scmp.ne.s32.totalorder %s218, %s219
      %p230 = scmp.eq.s32.totalorder %s32, 0
      %p231 = por %p229, %p230
      %p232 = scmp.ne.s32.totalorder %s218, %s219
      %p233 = scmp.eq.s32.totalorder %s33, 1
      %p234 = por %p232, %p233
      %p236 = scmp.ne.s32.totalorder %s219, %s235
      %p237 = scmp.eq.s32.totalorder %s33, 0
      %p238 = por %p236, %p237
      %p239 = scmp.le.s32.totalorder 1, %s27
      %p240 = scmp.lt.s32.totalorder %s27, 3
      %p241 = pnand %p239, %p240
      %p242 = pneg %p241
      // Predicated region
      $region9: #{tpu_custom_call.1} parent=5 // pred_check
        _
      $region10: #{tpu_custom_call.1} parent=5 // pred_check_branch
        %244 = sbr.rel (%p241) target = $region12
      $region11: #{tpu_custom_call.1} parent=5 // pred_region
        %s245 = ssub.s32 %s27, 1
        // Predicated region
        $region13: #{tpu_custom_call.1} parent=11 // pred_check
          %p246 = pneg %p74
        $region14: #{tpu_custom_call.1} parent=11 // pred_check_branch
          %248 = sbr.rel (%p246) target = $region16
        $region15: #{tpu_custom_call.1} parent=11 // pred_region
          %s250 = ssub.s32 16384, 16384
          %251 = vsyncadd [#allocation6], %s250
          %s252 = sshll.u32 [#allocation5], 4
          %s253 = int_to_ptr.vmem [resolvable:$true] %s252
          %258 = dma.hbm_to_vmem [thread:$0]  %s1, 16384, %s253, [#allocation6], 256, 256, 16
        $region16: #{tpu_custom_call.1} parent=11 // pred_fallthru
          _
        // Predicated region
        $region17: #{tpu_custom_call.1} parent=11 // pred_check
          %p259 = pneg %p95
        $region18: #{tpu_custom_call.1} parent=11 // pred_check_branch
          %261 = sbr.rel (%p259) target = $region20
        $region19: #{tpu_custom_call.1} parent=11 // pred_region
          %s263 = ssub.s32 32, 32
          %264 = vsyncadd [#allocation6], %s263
          %s266 = sshll.u32 [#allocation7], 4
          %s267 = int_to_ptr.vmem [resolvable:$true] %s266
          %269 = dma.hbm_to_vmem [thread:$0]  %s2, 32, %s267, [#allocation6]
        $region20: #{tpu_custom_call.1} parent=11 // pred_fallthru
          _
        // Predicated region
        $region21: #{tpu_custom_call.1} parent=11 // pred_check
          %p270 = pneg %p116
        $region22: #{tpu_custom_call.1} parent=11 // pred_check_branch
          %272 = sbr.rel (%p270) target = $region24
        $region23: #{tpu_custom_call.1} parent=11 // pred_region
          %s274 = ssub.s32 49152, 49152
          %275 = vsyncadd [#allocation9], %s274
          %s276 = sshll.u32 [#allocation8], 4
          %s277 = int_to_ptr.vmem [resolvable:$true] %s276
          %282 = dma.hbm_to_vmem [thread:$0]  %s3, 49152, %s277, [#allocation9], 1536, 1536, 96
        $region24: #{tpu_custom_call.1} parent=11 // pred_fallthru
          _
        // Predicated region
        $region25: #{tpu_custom_call.1} parent=11 // pred_check
          %p283 = pneg %p137
        $region26: #{tpu_custom_call.1} parent=11 // pred_check_branch
          %285 = sbr.rel (%p283) target = $region28
        $region27: #{tpu_custom_call.1} parent=11 // pred_region
          %s287 = ssub.s32 768, 768
          %288 = vsyncadd [#allocation9], %s287
          %s290 = sshll.u32 [#allocation10], 4
          %s291 = int_to_ptr.vmem [resolvable:$true] %s290
          %293 = dma.hbm_to_vmem [thread:$0]  %s4, 768, %s291, [#allocation9]
        $region28: #{tpu_custom_call.1} parent=11 // pred_fallthru
          _
        // Predicated region
        $region29: #{tpu_custom_call.1} parent=11 // pred_check
          %p294 = pneg %p158
        $region30: #{tpu_custom_call.1} parent=11 // pred_check_branch
          %296 = sbr.rel (%p294) target = $region32
        $region31: #{tpu_custom_call.1} parent=11 // pred_region
          %s298 = ssub.s32 13824, 13824
          %299 = vsyncadd [#allocation12], %s298
          %s300 = sshll.u32 [#allocation11], 4
          %s301 = int_to_ptr.vmem [resolvable:$true] %s300
          %306 = dma.hbm_to_vmem [thread:$0]  %s5, 13824, %s301, [#allocation12], 768, 768, 48
        $region32: #{tpu_custom_call.1} parent=11 // pred_fallthru
          _
        // Predicated region
        $region33: #{tpu_custom_call.1} parent=11 // pred_check
          %p307 = pneg %p179
        $region34: #{tpu_custom_call.1} parent=11 // pred_check_branch
          %309 = sbr.rel (%p307) target = $region36
        $region35: #{tpu_custom_call.1} parent=11 // pred_region
          %s311 = ssub.s32 13824, 13824
          %312 = vsyncadd [#allocation12], %s311
          %s313 = sshll.u32 [#allocation13], 4
          %s314 = int_to_ptr.vmem [resolvable:$true] %s313
          %319 = dma.hbm_to_vmem [thread:$0]  %s6, 13824, %s314, [#allocation12], 768, 768, 48
        $region36: #{tpu_custom_call.1} parent=11 // pred_fallthru
          _
      $region12: #{tpu_custom_call.1} parent=5 // pred_fallthru
        _
      %p320 = scmp.lt.s32.totalorder %s27, 2
      // Predicated region
      $region37: #{tpu_custom_call.1} parent=5 // pred_check
        %p321 = pneg %p320
      $region38: #{tpu_custom_call.1} parent=5 // pred_check_branch
        %323 = sbr.rel (%p321) target = $region40
      $region39: #{tpu_custom_call.1} parent=5 // pred_region
        // Predicated region
        $region41: #{tpu_custom_call.1} parent=39 // pred_check
          %p324 = pneg %p47
        $region42: #{tpu_custom_call.1} parent=39 // pred_check_branch
          %326 = sbr.rel (%p324) target = $region44
        $region43: #{tpu_custom_call.1} parent=39 // pred_region
          %s327 = sand.u32 %s37, 1
          %s328 = scalar_lea.sflag [#allocation3], %s327
          %s329 = sand.u32 %s37, 1
          %s330 = smul.addr %s329, 4
          %s331 = scalar_lea.vmem [#allocation2], %s330
          %s333 = ssub.s32 64, 64
          %334 = vsyncadd %s328, %s333
          %s335 = smul.addr %s27, 4
          %s336 = smul.addr %s335, 16
          %s337 = scalar_lea.hbm %s0, %s336
          %s339 = sshll.u32 %s331, 4
          %s340 = int_to_ptr.vmem [resolvable:$true] %s339
          %342 = dma.hbm_to_vmem [thread:$0]  %s337, 64, %s340, %s328
        $region44: #{tpu_custom_call.1} parent=39 // pred_fallthru
          _
      $region40: #{tpu_custom_call.1} parent=5 // pred_fallthru
        _
      %p343 = scmp.le.s32.totalorder 1, %s27
      %p344 = scmp.lt.s32.totalorder %s27, 3
      %p345 = pnand %p343, %p344
      %p346 = pneg %p345
      // Predicated region
      $region45: #{tpu_custom_call.1} parent=5 // pred_check
        _
      $region46: #{tpu_custom_call.1} parent=5 // pred_check_branch
        %348 = sbr.rel (%p345) target = $region48
      $region47: #{tpu_custom_call.1} parent=5 // pred_region
        %s349 = ssub.s32 %s27, 1
        %s350 = sand.u32 %s40, 1
        %s351 = scalar_lea.sflag [#allocation3], %s350
        %s352 = sand.u32 %s40, 1
        %s353 = smul.addr %s352, 4
        %s354 = scalar_lea.vmem [#allocation2], %s353
        // Predicated region
        $region49: #{tpu_custom_call.1} parent=47 // pred_check
          %p355 = pneg %p53
        $region50: #{tpu_custom_call.1} parent=47 // pred_check_branch
          %357 = sbr.rel (%p355) target = $region52
        $region51: #{tpu_custom_call.1} parent=47 // pred_region
          %358 = dma.done %s351, 64
        $region52: #{tpu_custom_call.1} parent=47 // pred_fallthru
          _
        // Predicated region
        $region53: #{tpu_custom_call.1} parent=47 // pred_check
          %p359 = pneg %p74
        $region54: #{tpu_custom_call.1} parent=47 // pred_check_branch
          %361 = sbr.rel (%p359) target = $region56
        $region55: #{tpu_custom_call.1} parent=47 // pred_region
          %362 = dma.done [#allocation6], 16384
        $region56: #{tpu_custom_call.1} parent=47 // pred_fallthru
          _
        // Predicated region
        $region57: #{tpu_custom_call.1} parent=47 // pred_check
          %p363 = pneg %p95
        $region58: #{tpu_custom_call.1} parent=47 // pred_check_branch
          %365 = sbr.rel (%p363) target = $region60
        $region59: #{tpu_custom_call.1} parent=47 // pred_region
          %366 = dma.done [#allocation6], 32
        $region60: #{tpu_custom_call.1} parent=47 // pred_fallthru
          _
        // Predicated region
        $region61: #{tpu_custom_call.1} parent=47 // pred_check
          %p367 = pneg %p116
        $region62: #{tpu_custom_call.1} parent=47 // pred_check_branch
          %369 = sbr.rel (%p367) target = $region64
        $region63: #{tpu_custom_call.1} parent=47 // pred_region
          %370 = dma.done [#allocation9], 49152
        $region64: #{tpu_custom_call.1} parent=47 // pred_fallthru
          _
        // Predicated region
        $region65: #{tpu_custom_call.1} parent=47 // pred_check
          %p371 = pneg %p137
        $region66: #{tpu_custom_call.1} parent=47 // pred_check_branch
          %373 = sbr.rel (%p371) target = $region68
        $region67: #{tpu_custom_call.1} parent=47 // pred_region
          %374 = dma.done [#allocation9], 768
        $region68: #{tpu_custom_call.1} parent=47 // pred_fallthru
          _
        // Predicated region
        $region69: #{tpu_custom_call.1} parent=47 // pred_check
          %p375 = pneg %p158
        $region70: #{tpu_custom_call.1} parent=47 // pred_check_branch
          %377 = sbr.rel (%p375) target = $region72
        $region71: #{tpu_custom_call.1} parent=47 // pred_region
          %378 = dma.done [#allocation12], 13824
        $region72: #{tpu_custom_call.1} parent=47 // pred_fallthru
          _
        // Predicated region
        $region73: #{tpu_custom_call.1} parent=47 // pred_check
          %p379 = pneg %p179
        $region74: #{tpu_custom_call.1} parent=47 // pred_check_branch
          %381 = sbr.rel (%p379) target = $region76
        $region75: #{tpu_custom_call.1} parent=47 // pred_region
          %382 = dma.done [#allocation12], 13824
        $region76: #{tpu_custom_call.1} parent=47 // pred_fallthru
          _
        %s383 = sand.u32 %s40, 1
        %s384 = scalar_lea.sflag [#allocation3], %s383
        %s385 = sand.u32 %s40, 1
        %s386 = smul.addr %s385, 4
        %s387 = scalar_lea.vmem [#allocation2], %s386
        %p388 = pneg %p53
        %p389 = pneg %p50
        %p390 = pneg %p74
        %p391 = pneg %p71
        %p392 = pneg %p95
        %p393 = pneg %p92
        %p394 = pneg %p116
        %p395 = pneg %p113
        %p396 = pneg %p137
        %p397 = pneg %p134
        %p398 = pneg %p158
        %p399 = pneg %p155
        %p400 = pneg %p179
        %p401 = pneg %p176
        %p402 = pneg %p205
        %p403 = pneg %p202
        %s404 = sand.u32 %s192, 1
        %s405 = scalar_lea.sflag [#allocation4], %s404
        %s406 = sand.u32 %s192, 1
        %s407 = smul.addr %s406, 864
        %s408 = scalar_lea.vmem [#allocation14], %s407
        %p409 = pneg %p231
        %p410 = pneg %p228
        %s411 = sand.u32 %s218, 1
        %s412 = scalar_lea.sflag [#allocation16], %s411
        %s413 = sand.u32 %s218, 1
        %s414 = smul.addr %s413, 864
        %s415 = scalar_lea.vmem [#allocation15], %s414
        %s416 = smul.u32 6, %s32
        %s417 = smul.u32 6, %s32
        %v418 = vld [vmem:[%s354] sm:$0xf]
        %v419 = vld [vmem:[#allocation5] sm:$0xff]
        %v420 = vld [vmem:[#allocation5 + $0x8] sm:$0xff]
        %v421 = vld [vmem:[#allocation5 + $0x10] sm:$0xff]
        %v422 = vld [vmem:[#allocation5 + $0x18] sm:$0xff]
        %v423 = vld [vmem:[#allocation5 + $0x20] sm:$0xff]
        %v424 = vld [vmem:[#allocation5 + $0x28] sm:$0xff]
        %v425 = vld [vmem:[#allocation5 + $0x30] sm:$0xff]
        %v426 = vld [vmem:[#allocation5 + $0x38] sm:$0xff]
        %v427 = vld [vmem:[#allocation5 + $0x40] sm:$0xff]
        %v428 = vld [vmem:[#allocation5 + $0x48] sm:$0xff]
        %v429 = vld [vmem:[#allocation5 + $0x50] sm:$0xff]
        %v430 = vld [vmem:[#allocation5 + $0x58] sm:$0xff]
        %v431 = vld [vmem:[#allocation5 + $0x60] sm:$0xff]
        %v432 = vld [vmem:[#allocation5 + $0x68] sm:$0xff]
        %v433 = vld [vmem:[#allocation5 + $0x70] sm:$0xff]
        %v434 = vld [vmem:[#allocation5 + $0x78] sm:$0xff]
        %v435 = vld [vmem:[#allocation5 + $0x80] sm:$0xff]
        %v436 = vld [vmem:[#allocation5 + $0x88] sm:$0xff]
        %v437 = vld [vmem:[#allocation5 + $0x90] sm:$0xff]
        %v438 = vld [vmem:[#allocation5 + $0x98] sm:$0xff]
        %v439 = vld [vmem:[#allocation5 + $0xa0] sm:$0xff]
        %v440 = vld [vmem:[#allocation5 + $0xa8] sm:$0xff]
        %v441 = vld [vmem:[#allocation5 + $0xb0] sm:$0xff]
        %v442 = vld [vmem:[#allocation5 + $0xb8] sm:$0xff]
        %v443 = vld [vmem:[#allocation5 + $0xc0] sm:$0xff]
        %v444 = vld [vmem:[#allocation5 + $0xc8] sm:$0xff]
        %v445 = vld [vmem:[#allocation5 + $0xd0] sm:$0xff]
        %v446 = vld [vmem:[#allocation5 + $0xd8] sm:$0xff]
        %v447 = vld [vmem:[#allocation5 + $0xe0] sm:$0xff]
        %v448 = vld [vmem:[#allocation5 + $0xe8] sm:$0xff]
        %v449 = vld [vmem:[#allocation5 + $0xf0] sm:$0xff]
        %v450 = vld [vmem:[#allocation5 + $0xf8] sm:$0xff]
        %v451 = vld [vmem:[#allocation5 + $0x100] sm:$0xff]
        %v452 = vld [vmem:[#allocation5 + $0x108] sm:$0xff]
        %v453 = vld [vmem:[#allocation5 + $0x110] sm:$0xff]
        %v454 = vld [vmem:[#allocation5 + $0x118] sm:$0xff]
        %v455 = vld [vmem:[#allocation5 + $0x120] sm:$0xff]
        %v456 = vld [vmem:[#allocation5 + $0x128] sm:$0xff]
        %v457 = vld [vmem:[#allocation5 + $0x130] sm:$0xff]
        %v458 = vld [vmem:[#allocation5 + $0x138] sm:$0xff]
        %v459 = vld [vmem:[#allocation5 + $0x140] sm:$0xff]
        %v460 = vld [vmem:[#allocation5 + $0x148] sm:$0xff]
        %v461 = vld [vmem:[#allocation5 + $0x150] sm:$0xff]
        %v462 = vld [vmem:[#allocation5 + $0x158] sm:$0xff]
        %v463 = vld [vmem:[#allocation5 + $0x160] sm:$0xff]
        %v464 = vld [vmem:[#allocation5 + $0x168] sm:$0xff]
        %v465 = vld [vmem:[#allocation5 + $0x170] sm:$0xff]
        %v466 = vld [vmem:[#allocation5 + $0x178] sm:$0xff]
        %v467 = vld [vmem:[#allocation5 + $0x180] sm:$0xff]
        %v468 = vld [vmem:[#allocation5 + $0x188] sm:$0xff]
        %v469 = vld [vmem:[#allocation5 + $0x190] sm:$0xff]
        %v470 = vld [vmem:[#allocation5 + $0x198] sm:$0xff]
        %v471 = vld [vmem:[#allocation5 + $0x1a0] sm:$0xff]
        %v472 = vld [vmem:[#allocation5 + $0x1a8] sm:$0xff]
        %v473 = vld [vmem:[#allocation5 + $0x1b0] sm:$0xff]
        %v474 = vld [vmem:[#allocation5 + $0x1b8] sm:$0xff]
        %v475 = vld [vmem:[#allocation5 + $0x1c0] sm:$0xff]
        %v476 = vld [vmem:[#allocation5 + $0x1c8] sm:$0xff]
        %v477 = vld [vmem:[#allocation5 + $0x1d0] sm:$0xff]
        %v478 = vld [vmem:[#allocation5 + $0x1d8] sm:$0xff]
        %v479 = vld [vmem:[#allocation5 + $0x1e0] sm:$0xff]
        %v480 = vld [vmem:[#allocation5 + $0x1e8] sm:$0xff]
        %v481 = vld [vmem:[#allocation5 + $0x1f0] sm:$0xff]
        %v482 = vld [vmem:[#allocation5 + $0x1f8] sm:$0xff]
        %v483 = vld [vmem:[#allocation5 + $0x200] sm:$0xff]
        %v484 = vld [vmem:[#allocation5 + $0x208] sm:$0xff]
        %v485 = vld [vmem:[#allocation5 + $0x210] sm:$0xff]
        %v486 = vld [vmem:[#allocation5 + $0x218] sm:$0xff]
        %v487 = vld [vmem:[#allocation5 + $0x220] sm:$0xff]
        %v488 = vld [vmem:[#allocation5 + $0x228] sm:$0xff]
        %v489 = vld [vmem:[#allocation5 + $0x230] sm:$0xff]
        %v490 = vld [vmem:[#allocation5 + $0x238] sm:$0xff]
        %v491 = vld [vmem:[#allocation5 + $0x240] sm:$0xff]
        %v492 = vld [vmem:[#allocation5 + $0x248] sm:$0xff]
        %v493 = vld [vmem:[#allocation5 + $0x250] sm:$0xff]
        %v494 = vld [vmem:[#allocation5 + $0x258] sm:$0xff]
        %v495 = vld [vmem:[#allocation5 + $0x260] sm:$0xff]
        %v496 = vld [vmem:[#allocation5 + $0x268] sm:$0xff]
        %v497 = vld [vmem:[#allocation5 + $0x270] sm:$0xff]
        %v498 = vld [vmem:[#allocation5 + $0x278] sm:$0xff]
        %v499 = vld [vmem:[#allocation5 + $0x280] sm:$0xff]
        %v500 = vld [vmem:[#allocation5 + $0x288] sm:$0xff]
        %v501 = vld [vmem:[#allocation5 + $0x290] sm:$0xff]
        %v502 = vld [vmem:[#allocation5 + $0x298] sm:$0xff]
        %v503 = vld [vmem:[#allocation5 + $0x2a0] sm:$0xff]
        %v504 = vld [vmem:[#allocation5 + $0x2a8] sm:$0xff]
        %v505 = vld [vmem:[#allocation5 + $0x2b0] sm:$0xff]
        %v506 = vld [vmem:[#allocation5 + $0x2b8] sm:$0xff]
        %v507 = vld [vmem:[#allocation5 + $0x2c0] sm:$0xff]
        %v508 = vld [vmem:[#allocation5 + $0x2c8] sm:$0xff]
        %v509 = vld [vmem:[#allocation5 + $0x2d0] sm:$0xff]
        %v510 = vld [vmem:[#allocation5 + $0x2d8] sm:$0xff]
        %v511 = vld [vmem:[#allocation5 + $0x2e0] sm:$0xff]
        %v512 = vld [vmem:[#allocation5 + $0x2e8] sm:$0xff]
        %v513 = vld [vmem:[#allocation5 + $0x2f0] sm:$0xff]
        %v514 = vld [vmem:[#allocation5 + $0x2f8] sm:$0xff]
        %v515 = vld [vmem:[#allocation5 + $0x300] sm:$0xff]
        %v516 = vld [vmem:[#allocation5 + $0x308] sm:$0xff]
        %v517 = vld [vmem:[#allocation5 + $0x310] sm:$0xff]
        %v518 = vld [vmem:[#allocation5 + $0x318] sm:$0xff]
        %v519 = vld [vmem:[#allocation5 + $0x320] sm:$0xff]
        %v520 = vld [vmem:[#allocation5 + $0x328] sm:$0xff]
        %v521 = vld [vmem:[#allocation5 + $0x330] sm:$0xff]
        %v522 = vld [vmem:[#allocation5 + $0x338] sm:$0xff]
        %v523 = vld [vmem:[#allocation5 + $0x340] sm:$0xff]
        %v524 = vld [vmem:[#allocation5 + $0x348] sm:$0xff]
        %v525 = vld [vmem:[#allocation5 + $0x350] sm:$0xff]
        %v526 = vld [vmem:[#allocation5 + $0x358] sm:$0xff]
        %v527 = vld [vmem:[#allocation5 + $0x360] sm:$0xff]
        %v528 = vld [vmem:[#allocation5 + $0x368] sm:$0xff]
        %v529 = vld [vmem:[#allocation5 + $0x370] sm:$0xff]
        %v530 = vld [vmem:[#allocation5 + $0x378] sm:$0xff]
        %v531 = vld [vmem:[#allocation5 + $0x380] sm:$0xff]
        %v532 = vld [vmem:[#allocation5 + $0x388] sm:$0xff]
        %v533 = vld [vmem:[#allocation5 + $0x390] sm:$0xff]
        %v534 = vld [vmem:[#allocation5 + $0x398] sm:$0xff]
        %v535 = vld [vmem:[#allocation5 + $0x3a0] sm:$0xff]
        %v536 = vld [vmem:[#allocation5 + $0x3a8] sm:$0xff]
        %v537 = vld [vmem:[#allocation5 + $0x3b0] sm:$0xff]
        %v538 = vld [vmem:[#allocation5 + $0x3b8] sm:$0xff]
        %v539 = vld [vmem:[#allocation5 + $0x3c0] sm:$0xff]
        %v540 = vld [vmem:[#allocation5 + $0x3c8] sm:$0xff]
        %v541 = vld [vmem:[#allocation5 + $0x3d0] sm:$0xff]
        %v542 = vld [vmem:[#allocation5 + $0x3d8] sm:$0xff]
        %v543 = vld [vmem:[#allocation5 + $0x3e0] sm:$0xff]
        %v544 = vld [vmem:[#allocation5 + $0x3e8] sm:$0xff]
        %v545 = vld [vmem:[#allocation5 + $0x3f0] sm:$0xff]
        %v546 = vld [vmem:[#allocation5 + $0x3f8] sm:$0xff]
        %v547 = vld [vmem:[#allocation7] sm:$0x3]
        %v549 = vlaneseq
        %v550 = vshrl.u32 %v549, 7
        %v551 = vsub.s32 0, %v550
        %v552 = vrot.slane %v418, %v551
        %v553 = vlaneseq
        %v554 = vshrl.u32 %v553, 7
        %v555 = vsub.s32 1, %v554
        %v556 = vrot.slane %v418, %v555
        %v557 = vlaneseq
        %v558 = vshrl.u32 %v557, 7
        %v559 = vsub.s32 2, %v558
        %v560 = vrot.slane %v418, %v559
        %v561 = vlaneseq
        %v562 = vshrl.u32 %v561, 7
        %v563 = vsub.s32 3, %v562
        %v564 = vrot.slane %v418, %v563
        %v570 = vlaneseq
        %v571 = vshrl.u32 %v570, 7
        %v572 = vsub.s32 0, %v571
        %v573 = vrot.slane %v547, %v572
        %v574 = vlaneseq
        %v575 = vshrl.u32 %v574, 7
        %v576 = vsub.s32 1, %v575
        %v577 = vrot.slane %v547, %v576
        %580 = vmatprep.subr.mxu0 %v420
        %581 = vmatpush1.msra.mxu0 %v419
        %582 = vmatprep.subr.mxu0 %v422
        %583 = vmatpush1.msra.mxu0 %v421
        %584 = vmatprep.subr.mxu0 %v424
        %585 = vmatpush1.msra.mxu0 %v423
        %586 = vmatprep.subr.mxu0 %v426
        %587 = vmatpush1.msra.mxu0 %v425
        %588 = vmatprep.subr.mxu0 %v428
        %589 = vmatpush1.msra.mxu0 %v427
        %590 = vmatprep.subr.mxu0 %v430
        %591 = vmatpush1.msra.mxu0 %v429
        %592 = vmatprep.subr.mxu0 %v432
        %593 = vmatpush1.msra.mxu0 %v431
        %594 = vmatprep.subr.mxu0 %v434
        %595 = vmatpush1.msra.mxu0 %v433
        %596 = vmatprep.subr.mxu0 %v436
        %597 = vmatpush1.msra.mxu0 %v435
        %598 = vmatprep.subr.mxu0 %v438
        %599 = vmatpush1.msra.mxu0 %v437
        %600 = vmatprep.subr.mxu0 %v440
        %601 = vmatpush1.msra.mxu0 %v439
        %602 = vmatprep.subr.mxu0 %v442
        %603 = vmatpush1.msra.mxu0 %v441
        %604 = vmatprep.subr.mxu0 %v444
        %605 = vmatpush1.msra.mxu0 %v443
        %606 = vmatprep.subr.mxu0 %v446
        %607 = vmatpush1.msra.mxu0 %v445
        %608 = vmatprep.subr.mxu0 %v448
        %609 = vmatpush1.msra.mxu0 %v447
        %610 = vmatprep.subr.mxu0 %v450
        %611 = vmatpush1.msra.mxu0 %v449
        %612 = vmatprep.subr.mxu0 %v452
        %613 = vmatpush1.msra.mxu0 %v451
        %614 = vmatprep.subr.mxu0 %v454
        %615 = vmatpush1.msra.mxu0 %v453
        %616 = vmatprep.subr.mxu0 %v456
        %617 = vmatpush1.msra.mxu0 %v455
        %618 = vmatprep.subr.mxu0 %v458
        %619 = vmatpush1.msra.mxu0 %v457
        %620 = vmatprep.subr.mxu0 %v460
        %621 = vmatpush1.msra.mxu0 %v459
        %622 = vmatprep.subr.mxu0 %v462
        %623 = vmatpush1.msra.mxu0 %v461
        %624 = vmatprep.subr.mxu0 %v464
        %625 = vmatpush1.msra.mxu0 %v463
        %626 = vmatprep.subr.mxu0 %v466
        %627 = vmatpush1.msra.mxu0 %v465
        %628 = vmatprep.subr.mxu0 %v468
        %629 = vmatpush1.msra.mxu0 %v467
        %630 = vmatprep.subr.mxu0 %v470
        %631 = vmatpush1.msra.mxu0 %v469
        %632 = vmatprep.subr.mxu0 %v472
        %633 = vmatpush1.msra.mxu0 %v471
        %634 = vmatprep.subr.mxu0 %v474
        %635 = vmatpush1.msra.mxu0 %v473
        %636 = vmatprep.subr.mxu0 %v476
        %637 = vmatpush1.msra.mxu0 %v475
        %638 = vmatprep.subr.mxu0 %v478
        %639 = vmatpush1.msra.mxu0 %v477
        %640 = vmatprep.subr.mxu0 %v480
        %641 = vmatpush1.msra.mxu0 %v479
        %642 = vmatprep.subr.mxu0 %v482
        %643 = vmatpush1.msra.mxu0 %v481
        %644 = vmatprep.mubr.f32.mxu0 %v556
        %645 = vmatmul.mubr.f32.gmra.mrb[0].mxu0 %v552
        %v646 = vpop.f32.mrb[0].mxu0
        %v647 = vadd.f32 %v573, %v646
        %v648 = vpop.f32.mrb[0].mxu0
        %v649 = vadd.f32 %v577, %v648
        %650 = vdwg.mxu0
        %651 = vmatprep.subr.mxu0 %v484
        %652 = vmatpush1.msra.mxu0 %v483
        %653 = vmatprep.subr.mxu0 %v486
        %654 = vmatpush1.msra.mxu0 %v485
        %655 = vmatprep.subr.mxu0 %v488
        %656 = vmatpush1.msra.mxu0 %v487
        %657 = vmatprep.subr.mxu0 %v490
        %658 = vmatpush1.msra.mxu0 %v489
        %659 = vmatprep.subr.mxu0 %v492
        %660 = vmatpush1.msra.mxu0 %v491
        %661 = vmatprep.subr.mxu0 %v494
        %662 = vmatpush1.msra.mxu0 %v493
        %663 = vmatprep.subr.mxu0 %v496
        %664 = vmatpush1.msra.mxu0 %v495
        %665 = vmatprep.subr.mxu0 %v498
        %666 = vmatpush1.msra.mxu0 %v497
        %667 = vmatprep.subr.mxu0 %v500
        %668 = vmatpush1.msra.mxu0 %v499
        %669 = vmatprep.subr.mxu0 %v502
        %670 = vmatpush1.msra.mxu0 %v501
        %671 = vmatprep.subr.mxu0 %v504
        %672 = vmatpush1.msra.mxu0 %v503
        %673 = vmatprep.subr.mxu0 %v506
        %674 = vmatpush1.msra.mxu0 %v505
        %675 = vmatprep.subr.mxu0 %v508
        %676 = vmatpush1.msra.mxu0 %v507
        %677 = vmatprep.subr.mxu0 %v510
        %678 = vmatpush1.msra.mxu0 %v509
        %679 = vmatprep.subr.mxu0 %v512
        %680 = vmatpush1.msra.mxu0 %v511
        %681 = vmatprep.subr.mxu0 %v514
        %682 = vmatpush1.msra.mxu0 %v513
        %683 = vmatprep.subr.mxu0 %v516
        %684 = vmatpush1.msra.mxu0 %v515
        %685 = vmatprep.subr.mxu0 %v518
        %686 = vmatpush1.msra.mxu0 %v517
        %687 = vmatprep.subr.mxu0 %v520
        %688 = vmatpush1.msra.mxu0 %v519
        %689 = vmatprep.subr.mxu0 %v522
        %690 = vmatpush1.msra.mxu0 %v521
        %691 = vmatprep.subr.mxu0 %v524
        %692 = vmatpush1.msra.mxu0 %v523
        %693 = vmatprep.subr.mxu0 %v526
        %694 = vmatpush1.msra.mxu0 %v525
        %695 = vmatprep.subr.mxu0 %v528
        %696 = vmatpush1.msra.mxu0 %v527
        %697 = vmatprep.subr.mxu0 %v530
        %698 = vmatpush1.msra.mxu0 %v529
        %699 = vmatprep.subr.mxu0 %v532
        %700 = vmatpush1.msra.mxu0 %v531
        %701 = vmatprep.subr.mxu0 %v534
        %702 = vmatpush1.msra.mxu0 %v533
        %703 = vmatprep.subr.mxu0 %v536
        %704 = vmatpush1.msra.mxu0 %v535
        %705 = vmatprep.subr.mxu0 %v538
        %706 = vmatpush1.msra.mxu0 %v537
        %707 = vmatprep.subr.mxu0 %v540
        %708 = vmatpush1.msra.mxu0 %v539
        %709 = vmatprep.subr.mxu0 %v542
        %710 = vmatpush1.msra.mxu0 %v541
        %711 = vmatprep.subr.mxu0 %v544
        %712 = vmatpush1.msra.mxu0 %v543
        %713 = vmatprep.subr.mxu0 %v546
        %714 = vmatpush1.msra.mxu0 %v545
        %715 = vmatprep.mubr.f32.mxu0 %v564
        %716 = vmatmul.mubr.f32.gmra.mrb[0].mxu0 %v560
        %v717 = vpop.f32.mrb[0].mxu0
        %v718 = vadd.f32 %v647, %v717
        %v719 = vpop.f32.mrb[0].mxu0
        %v720 = vadd.f32 %v649, %v719
        %721 = vdwg.mxu0
        %v722 = vmax.f32 %v718, 0.0
        %v723 = vmax.f32 %v720, 0.0
        %v724 = vld [vmem:[#allocation8] sm:$0xff]
        %v725 = vld [vmem:[#allocation8 + $0x8] sm:$0xff]
        %v726 = vld [vmem:[#allocation8 + $0x10] sm:$0xff]
        %v727 = vld [vmem:[#allocation8 + $0x18] sm:$0xff]
        %v728 = vld [vmem:[#allocation8 + $0x20] sm:$0xff]
        %v729 = vld [vmem:[#allocation8 + $0x28] sm:$0xff]
        %v730 = vld [vmem:[#allocation8 + $0x30] sm:$0xff]
        %v731 = vld [vmem:[#allocation8 + $0x38] sm:$0xff]
        %v732 = vld [vmem:[#allocation8 + $0x40] sm:$0xff]
        %v733 = vld [vmem:[#allocation8 + $0x48] sm:$0xff]
        %v734 = vld [vmem:[#allocation8 + $0x50] sm:$0xff]
        %v735 = vld [vmem:[#allocation8 + $0x58] sm:$0xff]
        %v736 = vld [vmem:[#allocation8 + $0x60] sm:$0xff]
        %v737 = vld [vmem:[#allocation8 + $0x68] sm:$0xff]
        %v738 = vld [vmem:[#allocation8 + $0x70] sm:$0xff]
        %v739 = vld [vmem:[#allocation8 + $0x78] sm:$0xff]
        %v740 = vld [vmem:[#allocation8 + $0x80] sm:$0xff]
        %v741 = vld [vmem:[#allocation8 + $0x88] sm:$0xff]
        %v742 = vld [vmem:[#allocation8 + $0x90] sm:$0xff]
        %v743 = vld [vmem:[#allocation8 + $0x98] sm:$0xff]
        %v744 = vld [vmem:[#allocation8 + $0xa0] sm:$0xff]
        %v745 = vld [vmem:[#allocation8 + $0xa8] sm:$0xff]
        %v746 = vld [vmem:[#allocation8 + $0xb0] sm:$0xff]
        %v747 = vld [vmem:[#allocation8 + $0xb8] sm:$0xff]
        %v748 = vld [vmem:[#allocation8 + $0xc0] sm:$0xff]
        %v749 = vld [vmem:[#allocation8 + $0xc8] sm:$0xff]
        %v750 = vld [vmem:[#allocation8 + $0xd0] sm:$0xff]
        %v751 = vld [vmem:[#allocation8 + $0xd8] sm:$0xff]
        %v752 = vld [vmem:[#allocation8 + $0xe0] sm:$0xff]
        %v753 = vld [vmem:[#allocation8 + $0xe8] sm:$0xff]
        %v754 = vld [vmem:[#allocation8 + $0xf0] sm:$0xff]
        %v755 = vld [vmem:[#allocation8 + $0xf8] sm:$0xff]
        %v756 = vld [vmem:[#allocation8 + $0x100] sm:$0xff]
        %v757 = vld [vmem:[#allocation8 + $0x108] sm:$0xff]
        %v758 = vld [vmem:[#allocation8 + $0x110] sm:$0xff]
        %v759 = vld [vmem:[#allocation8 + $0x118] sm:$0xff]
        %v760 = vld [vmem:[#allocation8 + $0x120] sm:$0xff]
        %v761 = vld [vmem:[#allocation8 + $0x128] sm:$0xff]
        %v762 = vld [vmem:[#allocation8 + $0x130] sm:$0xff]
        %v763 = vld [vmem:[#allocation8 + $0x138] sm:$0xff]
        %v764 = vld [vmem:[#allocation8 + $0x140] sm:$0xff]
        %v765 = vld [vmem:[#allocation8 + $0x148] sm:$0xff]
        %v766 = vld [vmem:[#allocation8 + $0x150] sm:$0xff]
        %v767 = vld [vmem:[#allocation8 + $0x158] sm:$0xff]
        %v768 = vld [vmem:[#allocation8 + $0x160] sm:$0xff]
        %v769 = vld [vmem:[#allocation8 + $0x168] sm:$0xff]
        %v770 = vld [vmem:[#allocation8 + $0x170] sm:$0xff]
        %v771 = vld [vmem:[#allocation8 + $0x178] sm:$0xff]
        %v772 = vld [vmem:[#allocation8 + $0x180] sm:$0xff]
        %v773 = vld [vmem:[#allocation8 + $0x188] sm:$0xff]
        %v774 = vld [vmem:[#allocation8 + $0x190] sm:$0xff]
        %v775 = vld [vmem:[#allocation8 + $0x198] sm:$0xff]
        %v776 = vld [vmem:[#allocation8 + $0x1a0] sm:$0xff]
        %v777 = vld [vmem:[#allocation8 + $0x1a8] sm:$0xff]
        %v778 = vld [vmem:[#allocation8 + $0x1b0] sm:$0xff]
        %v779 = vld [vmem:[#allocation8 + $0x1b8] sm:$0xff]
        %v780 = vld [vmem:[#allocation8 + $0x1c0] sm:$0xff]
        %v781 = vld [vmem:[#allocation8 + $0x1c8] sm:$0xff]
        %v782 = vld [vmem:[#allocation8 + $0x1d0] sm:$0xff]
        %v783 = vld [vmem:[#allocation8 + $0x1d8] sm:$0xff]
        %v784 = vld [vmem:[#allocation8 + $0x1e0] sm:$0xff]
        %v785 = vld [vmem:[#allocation8 + $0x1e8] sm:$0xff]
        %v786 = vld [vmem:[#allocation8 + $0x1f0] sm:$0xff]
        %v787 = vld [vmem:[#allocation8 + $0x1f8] sm:$0xff]
        %v788 = vld [vmem:[#allocation8 + $0x200] sm:$0xff]
        %v789 = vld [vmem:[#allocation8 + $0x208] sm:$0xff]
        %v790 = vld [vmem:[#allocation8 + $0x210] sm:$0xff]
        %v791 = vld [vmem:[#allocation8 + $0x218] sm:$0xff]
        %v792 = vld [vmem:[#allocation8 + $0x220] sm:$0xff]
        %v793 = vld [vmem:[#allocation8 + $0x228] sm:$0xff]
        %v794 = vld [vmem:[#allocation8 + $0x230] sm:$0xff]
        %v795 = vld [vmem:[#allocation8 + $0x238] sm:$0xff]
        %v796 = vld [vmem:[#allocation8 + $0x240] sm:$0xff]
        %v797 = vld [vmem:[#allocation8 + $0x248] sm:$0xff]
        %v798 = vld [vmem:[#allocation8 + $0x250] sm:$0xff]
        %v799 = vld [vmem:[#allocation8 + $0x258] sm:$0xff]
        %v800 = vld [vmem:[#allocation8 + $0x260] sm:$0xff]
        %v801 = vld [vmem:[#allocation8 + $0x268] sm:$0xff]
        %v802 = vld [vmem:[#allocation8 + $0x270] sm:$0xff]
        %v803 = vld [vmem:[#allocation8 + $0x278] sm:$0xff]
        %v804 = vld [vmem:[#allocation8 + $0x280] sm:$0xff]
        %v805 = vld [vmem:[#allocation8 + $0x288] sm:$0xff]
        %v806 = vld [vmem:[#allocation8 + $0x290] sm:$0xff]
        %v807 = vld [vmem:[#allocation8 + $0x298] sm:$0xff]
        %v808 = vld [vmem:[#allocation8 + $0x2a0] sm:$0xff]
        %v809 = vld [vmem:[#allocation8 + $0x2a8] sm:$0xff]
        %v810 = vld [vmem:[#allocation8 + $0x2b0] sm:$0xff]
        %v811 = vld [vmem:[#allocation8 + $0x2b8] sm:$0xff]
        %v812 = vld [vmem:[#allocation8 + $0x2c0] sm:$0xff]
        %v813 = vld [vmem:[#allocation8 + $0x2c8] sm:$0xff]
        %v814 = vld [vmem:[#allocation8 + $0x2d0] sm:$0xff]
        %v815 = vld [vmem:[#allocation8 + $0x2d8] sm:$0xff]
        %v816 = vld [vmem:[#allocation8 + $0x2e0] sm:$0xff]
        %v817 = vld [vmem:[#allocation8 + $0x2e8] sm:$0xff]
        %v818 = vld [vmem:[#allocation8 + $0x2f0] sm:$0xff]
        %v819 = vld [vmem:[#allocation8 + $0x2f8] sm:$0xff]
        %v820 = vld [vmem:[#allocation8 + $0x300] sm:$0xff]
        %v821 = vld [vmem:[#allocation8 + $0x308] sm:$0xff]
        %v822 = vld [vmem:[#allocation8 + $0x310] sm:$0xff]
        %v823 = vld [vmem:[#allocation8 + $0x318] sm:$0xff]
        %v824 = vld [vmem:[#allocation8 + $0x320] sm:$0xff]
        %v825 = vld [vmem:[#allocation8 + $0x328] sm:$0xff]
        %v826 = vld [vmem:[#allocation8 + $0x330] sm:$0xff]
        %v827 = vld [vmem:[#allocation8 + $0x338] sm:$0xff]
        %v828 = vld [vmem:[#allocation8 + $0x340] sm:$0xff]
        %v829 = vld [vmem:[#allocation8 + $0x348] sm:$0xff]
        %v830 = vld [vmem:[#allocation8 + $0x350] sm:$0xff]
        %v831 = vld [vmem:[#allocation8 + $0x358] sm:$0xff]
        %v832 = vld [vmem:[#allocation8 + $0x360] sm:$0xff]
        %v833 = vld [vmem:[#allocation8 + $0x368] sm:$0xff]
        %v834 = vld [vmem:[#allocation8 + $0x370] sm:$0xff]
        %v835 = vld [vmem:[#allocation8 + $0x378] sm:$0xff]
        %v836 = vld [vmem:[#allocation8 + $0x380] sm:$0xff]
        %v837 = vld [vmem:[#allocation8 + $0x388] sm:$0xff]
        %v838 = vld [vmem:[#allocation8 + $0x390] sm:$0xff]
        %v839 = vld [vmem:[#allocation8 + $0x398] sm:$0xff]
        %v840 = vld [vmem:[#allocation8 + $0x3a0] sm:$0xff]
        %v841 = vld [vmem:[#allocation8 + $0x3a8] sm:$0xff]
        %v842 = vld [vmem:[#allocation8 + $0x3b0] sm:$0xff]
        %v843 = vld [vmem:[#allocation8 + $0x3b8] sm:$0xff]
        %v844 = vld [vmem:[#allocation8 + $0x3c0] sm:$0xff]
        %v845 = vld [vmem:[#allocation8 + $0x3c8] sm:$0xff]
        %v846 = vld [vmem:[#allocation8 + $0x3d0] sm:$0xff]
        %v847 = vld [vmem:[#allocation8 + $0x3d8] sm:$0xff]
        %v848 = vld [vmem:[#allocation8 + $0x3e0] sm:$0xff]
        %v849 = vld [vmem:[#allocation8 + $0x3e8] sm:$0xff]
        %v850 = vld [vmem:[#allocation8 + $0x3f0] sm:$0xff]
        %v851 = vld [vmem:[#allocation8 + $0x3f8] sm:$0xff]
        %v852 = vld [vmem:[#allocation8 + $0x400] sm:$0xff]
        %v853 = vld [vmem:[#allocation8 + $0x408] sm:$0xff]
        %v854 = vld [vmem:[#allocation8 + $0x410] sm:$0xff]
        %v855 = vld [vmem:[#allocation8 + $0x418] sm:$0xff]
        %v856 = vld [vmem:[#allocation8 + $0x420] sm:$0xff]
        %v857 = vld [vmem:[#allocation8 + $0x428] sm:$0xff]
        %v858 = vld [vmem:[#allocation8 + $0x430] sm:$0xff]
        %v859 = vld [vmem:[#allocation8 + $0x438] sm:$0xff]
        %v860 = vld [vmem:[#allocation8 + $0x440] sm:$0xff]
        %v861 = vld [vmem:[#allocation8 + $0x448] sm:$0xff]
        %v862 = vld [vmem:[#allocation8 + $0x450] sm:$0xff]
        %v863 = vld [vmem:[#allocation8 + $0x458] sm:$0xff]
        %v864 = vld [vmem:[#allocation8 + $0x460] sm:$0xff]
        %v865 = vld [vmem:[#allocation8 + $0x468] sm:$0xff]
        %v866 = vld [vmem:[#allocation8 + $0x470] sm:$0xff]
        %v867 = vld [vmem:[#allocation8 + $0x478] sm:$0xff]
        %v868 = vld [vmem:[#allocation8 + $0x480] sm:$0xff]
        %v869 = vld [vmem:[#allocation8 + $0x488] sm:$0xff]
        %v870 = vld [vmem:[#allocation8 + $0x490] sm:$0xff]
        %v871 = vld [vmem:[#allocation8 + $0x498] sm:$0xff]
        %v872 = vld [vmem:[#allocation8 + $0x4a0] sm:$0xff]
        %v873 = vld [vmem:[#allocation8 + $0x4a8] sm:$0xff]
        %v874 = vld [vmem:[#allocation8 + $0x4b0] sm:$0xff]
        %v875 = vld [vmem:[#allocation8 + $0x4b8] sm:$0xff]
        %v876 = vld [vmem:[#allocation8 + $0x4c0] sm:$0xff]
        %v877 = vld [vmem:[#allocation8 + $0x4c8] sm:$0xff]
        %v878 = vld [vmem:[#allocation8 + $0x4d0] sm:$0xff]
        %v879 = vld [vmem:[#allocation8 + $0x4d8] sm:$0xff]
        %v880 = vld [vmem:[#allocation8 + $0x4e0] sm:$0xff]
        %v881 = vld [vmem:[#allocation8 + $0x4e8] sm:$0xff]
        %v882 = vld [vmem:[#allocation8 + $0x4f0] sm:$0xff]
        %v883 = vld [vmem:[#allocation8 + $0x4f8] sm:$0xff]
        %v884 = vld [vmem:[#allocation8 + $0x500] sm:$0xff]
        %v885 = vld [vmem:[#allocation8 + $0x508] sm:$0xff]
        %v886 = vld [vmem:[#allocation8 + $0x510] sm:$0xff]
        %v887 = vld [vmem:[#allocation8 + $0x518] sm:$0xff]
        %v888 = vld [vmem:[#allocation8 + $0x520] sm:$0xff]
        %v889 = vld [vmem:[#allocation8 + $0x528] sm:$0xff]
        %v890 = vld [vmem:[#allocation8 + $0x530] sm:$0xff]
        %v891 = vld [vmem:[#allocation8 + $0x538] sm:$0xff]
        %v892 = vld [vmem:[#allocation8 + $0x540] sm:$0xff]
        %v893 = vld [vmem:[#allocation8 + $0x548] sm:$0xff]
        %v894 = vld [vmem:[#allocation8 + $0x550] sm:$0xff]
        %v895 = vld [vmem:[#allocation8 + $0x558] sm:$0xff]
        %v896 = vld [vmem:[#allocation8 + $0x560] sm:$0xff]
        %v897 = vld [vmem:[#allocation8 + $0x568] sm:$0xff]
        %v898 = vld [vmem:[#allocation8 + $0x570] sm:$0xff]
        %v899 = vld [vmem:[#allocation8 + $0x578] sm:$0xff]
        %v900 = vld [vmem:[#allocation8 + $0x580] sm:$0xff]
        %v901 = vld [vmem:[#allocation8 + $0x588] sm:$0xff]
        %v902 = vld [vmem:[#allocation8 + $0x590] sm:$0xff]
        %v903 = vld [vmem:[#allocation8 + $0x598] sm:$0xff]
        %v904 = vld [vmem:[#allocation8 + $0x5a0] sm:$0xff]
        %v905 = vld [vmem:[#allocation8 + $0x5a8] sm:$0xff]
        %v906 = vld [vmem:[#allocation8 + $0x5b0] sm:$0xff]
        %v907 = vld [vmem:[#allocation8 + $0x5b8] sm:$0xff]
        %v908 = vld [vmem:[#allocation8 + $0x5c0] sm:$0xff]
        %v909 = vld [vmem:[#allocation8 + $0x5c8] sm:$0xff]
        %v910 = vld [vmem:[#allocation8 + $0x5d0] sm:$0xff]
        %v911 = vld [vmem:[#allocation8 + $0x5d8] sm:$0xff]
        %v912 = vld [vmem:[#allocation8 + $0x5e0] sm:$0xff]
        %v913 = vld [vmem:[#allocation8 + $0x5e8] sm:$0xff]
        %v914 = vld [vmem:[#allocation8 + $0x5f0] sm:$0xff]
        %v915 = vld [vmem:[#allocation8 + $0x5f8] sm:$0xff]
        %v916 = vld [vmem:[#allocation8 + $0x600] sm:$0xff]
        %v917 = vld [vmem:[#allocation8 + $0x608] sm:$0xff]
        %v918 = vld [vmem:[#allocation8 + $0x610] sm:$0xff]
        %v919 = vld [vmem:[#allocation8 + $0x618] sm:$0xff]
        %v920 = vld [vmem:[#allocation8 + $0x620] sm:$0xff]
        %v921 = vld [vmem:[#allocation8 + $0x628] sm:$0xff]
        %v922 = vld [vmem:[#allocation8 + $0x630] sm:$0xff]
        %v923 = vld [vmem:[#allocation8 + $0x638] sm:$0xff]
        %v924 = vld [vmem:[#allocation8 + $0x640] sm:$0xff]
        %v925 = vld [vmem:[#allocation8 + $0x648] sm:$0xff]
        %v926 = vld [vmem:[#allocation8 + $0x650] sm:$0xff]
        %v927 = vld [vmem:[#allocation8 + $0x658] sm:$0xff]
        %v928 = vld [vmem:[#allocation8 + $0x660] sm:$0xff]
        %v929 = vld [vmem:[#allocation8 + $0x668] sm:$0xff]
        %v930 = vld [vmem:[#allocation8 + $0x670] sm:$0xff]
        %v931 = vld [vmem:[#allocation8 + $0x678] sm:$0xff]
        %v932 = vld [vmem:[#allocation8 + $0x680] sm:$0xff]
        %v933 = vld [vmem:[#allocation8 + $0x688] sm:$0xff]
        %v934 = vld [vmem:[#allocation8 + $0x690] sm:$0xff]
        %v935 = vld [vmem:[#allocation8 + $0x698] sm:$0xff]
        %v936 = vld [vmem:[#allocation8 + $0x6a0] sm:$0xff]
        %v937 = vld [vmem:[#allocation8 + $0x6a8] sm:$0xff]
        %v938 = vld [vmem:[#allocation8 + $0x6b0] sm:$0xff]
        %v939 = vld [vmem:[#allocation8 + $0x6b8] sm:$0xff]
        %v940 = vld [vmem:[#allocation8 + $0x6c0] sm:$0xff]
        %v941 = vld [vmem:[#allocation8 + $0x6c8] sm:$0xff]
        %v942 = vld [vmem:[#allocation8 + $0x6d0] sm:$0xff]
        %v943 = vld [vmem:[#allocation8 + $0x6d8] sm:$0xff]
        %v944 = vld [vmem:[#allocation8 + $0x6e0] sm:$0xff]
        %v945 = vld [vmem:[#allocation8 + $0x6e8] sm:$0xff]
        %v946 = vld [vmem:[#allocation8 + $0x6f0] sm:$0xff]
        %v947 = vld [vmem:[#allocation8 + $0x6f8] sm:$0xff]
        %v948 = vld [vmem:[#allocation8 + $0x700] sm:$0xff]
        %v949 = vld [vmem:[#allocation8 + $0x708] sm:$0xff]
        %v950 = vld [vmem:[#allocation8 + $0x710] sm:$0xff]
        %v951 = vld [vmem:[#allocation8 + $0x718] sm:$0xff]
        %v952 = vld [vmem:[#allocation8 + $0x720] sm:$0xff]
        %v953 = vld [vmem:[#allocation8 + $0x728] sm:$0xff]
        %v954 = vld [vmem:[#allocation8 + $0x730] sm:$0xff]
        %v955 = vld [vmem:[#allocation8 + $0x738] sm:$0xff]
        %v956 = vld [vmem:[#allocation8 + $0x740] sm:$0xff]
        %v957 = vld [vmem:[#allocation8 + $0x748] sm:$0xff]
        %v958 = vld [vmem:[#allocation8 + $0x750] sm:$0xff]
        %v959 = vld [vmem:[#allocation8 + $0x758] sm:$0xff]
        %v960 = vld [vmem:[#allocation8 + $0x760] sm:$0xff]
        %v961 = vld [vmem:[#allocation8 + $0x768] sm:$0xff]
        %v962 = vld [vmem:[#allocation8 + $0x770] sm:$0xff]
        %v963 = vld [vmem:[#allocation8 + $0x778] sm:$0xff]
        %v964 = vld [vmem:[#allocation8 + $0x780] sm:$0xff]
        %v965 = vld [vmem:[#allocation8 + $0x788] sm:$0xff]
        %v966 = vld [vmem:[#allocation8 + $0x790] sm:$0xff]
        %v967 = vld [vmem:[#allocation8 + $0x798] sm:$0xff]
        %v968 = vld [vmem:[#allocation8 + $0x7a0] sm:$0xff]
        %v969 = vld [vmem:[#allocation8 + $0x7a8] sm:$0xff]
        %v970 = vld [vmem:[#allocation8 + $0x7b0] sm:$0xff]
        %v971 = vld [vmem:[#allocation8 + $0x7b8] sm:$0xff]
        %v972 = vld [vmem:[#allocation8 + $0x7c0] sm:$0xff]
        %v973 = vld [vmem:[#allocation8 + $0x7c8] sm:$0xff]
        %v974 = vld [vmem:[#allocation8 + $0x7d0] sm:$0xff]
        %v975 = vld [vmem:[#allocation8 + $0x7d8] sm:$0xff]
        %v976 = vld [vmem:[#allocation8 + $0x7e0] sm:$0xff]
        %v977 = vld [vmem:[#allocation8 + $0x7e8] sm:$0xff]
        %v978 = vld [vmem:[#allocation8 + $0x7f0] sm:$0xff]
        %v979 = vld [vmem:[#allocation8 + $0x7f8] sm:$0xff]
        %v980 = vld [vmem:[#allocation8 + $0x800] sm:$0xff]
        %v981 = vld [vmem:[#allocation8 + $0x808] sm:$0xff]
        %v982 = vld [vmem:[#allocation8 + $0x810] sm:$0xff]
        %v983 = vld [vmem:[#allocation8 + $0x818] sm:$0xff]
        %v984 = vld [vmem:[#allocation8 + $0x820] sm:$0xff]
        %v985 = vld [vmem:[#allocation8 + $0x828] sm:$0xff]
        %v986 = vld [vmem:[#allocation8 + $0x830] sm:$0xff]
        %v987 = vld [vmem:[#allocation8 + $0x838] sm:$0xff]
        %v988 = vld [vmem:[#allocation8 + $0x840] sm:$0xff]
        %v989 = vld [vmem:[#allocation8 + $0x848] sm:$0xff]
        %v990 = vld [vmem:[#allocation8 + $0x850] sm:$0xff]
        %v991 = vld [vmem:[#allocation8 + $0x858] sm:$0xff]
        %v992 = vld [vmem:[#allocation8 + $0x860] sm:$0xff]
        %v993 = vld [vmem:[#allocation8 + $0x868] sm:$0xff]
        %v994 = vld [vmem:[#allocation8 + $0x870] sm:$0xff]
        %v995 = vld [vmem:[#allocation8 + $0x878] sm:$0xff]
        %v996 = vld [vmem:[#allocation8 + $0x880] sm:$0xff]
        %v997 = vld [vmem:[#allocation8 + $0x888] sm:$0xff]
        %v998 = vld [vmem:[#allocation8 + $0x890] sm:$0xff]
        %v999 = vld [vmem:[#allocation8 + $0x898] sm:$0xff]
        %v1000 = vld [vmem:[#allocation8 + $0x8a0] sm:$0xff]
        %v1001 = vld [vmem:[#allocation8 + $0x8a8] sm:$0xff]
        %v1002 = vld [vmem:[#allocation8 + $0x8b0] sm:$0xff]
        %v1003 = vld [vmem:[#allocation8 + $0x8b8] sm:$0xff]
        %v1004 = vld [vmem:[#allocation8 + $0x8c0] sm:$0xff]
        %v1005 = vld [vmem:[#allocation8 + $0x8c8] sm:$0xff]
        %v1006 = vld [vmem:[#allocation8 + $0x8d0] sm:$0xff]
        %v1007 = vld [vmem:[#allocation8 + $0x8d8] sm:$0xff]
        %v1008 = vld [vmem:[#allocation8 + $0x8e0] sm:$0xff]
        %v1009 = vld [vmem:[#allocation8 + $0x8e8] sm:$0xff]
        %v1010 = vld [vmem:[#allocation8 + $0x8f0] sm:$0xff]
        %v1011 = vld [vmem:[#allocation8 + $0x8f8] sm:$0xff]
        %v1012 = vld [vmem:[#allocation8 + $0x900] sm:$0xff]
        %v1013 = vld [vmem:[#allocation8 + $0x908] sm:$0xff]
        %v1014 = vld [vmem:[#allocation8 + $0x910] sm:$0xff]
        %v1015 = vld [vmem:[#allocation8 + $0x918] sm:$0xff]
        %v1016 = vld [vmem:[#allocation8 + $0x920] sm:$0xff]
        %v1017 = vld [vmem:[#allocation8 + $0x928] sm:$0xff]
        %v1018 = vld [vmem:[#allocation8 + $0x930] sm:$0xff]
        %v1019 = vld [vmem:[#allocation8 + $0x938] sm:$0xff]
        %v1020 = vld [vmem:[#allocation8 + $0x940] sm:$0xff]
        %v1021 = vld [vmem:[#allocation8 + $0x948] sm:$0xff]
        %v1022 = vld [vmem:[#allocation8 + $0x950] sm:$0xff]
        %v1023 = vld [vmem:[#allocation8 + $0x958] sm:$0xff]
        %v1024 = vld [vmem:[#allocation8 + $0x960] sm:$0xff]
        %v1025 = vld [vmem:[#allocation8 + $0x968] sm:$0xff]
        %v1026 = vld [vmem:[#allocation8 + $0x970] sm:$0xff]
        %v1027 = vld [vmem:[#allocation8 + $0x978] sm:$0xff]
        %v1028 = vld [vmem:[#allocation8 + $0x980] sm:$0xff]
        %v1029 = vld [vmem:[#allocation8 + $0x988] sm:$0xff]
        %v1030 = vld [vmem:[#allocation8 + $0x990] sm:$0xff]
        %v1031 = vld [vmem:[#allocation8 + $0x998] sm:$0xff]
        %v1032 = vld [vmem:[#allocation8 + $0x9a0] sm:$0xff]
        %v1033 = vld [vmem:[#allocation8 + $0x9a8] sm:$0xff]
        %v1034 = vld [vmem:[#allocation8 + $0x9b0] sm:$0xff]
        %v1035 = vld [vmem:[#allocation8 + $0x9b8] sm:$0xff]
        %v1036 = vld [vmem:[#allocation8 + $0x9c0] sm:$0xff]
        %v1037 = vld [vmem:[#allocation8 + $0x9c8] sm:$0xff]
        %v1038 = vld [vmem:[#allocation8 + $0x9d0] sm:$0xff]
        %v1039 = vld [vmem:[#allocation8 + $0x9d8] sm:$0xff]
        %v1040 = vld [vmem:[#allocation8 + $0x9e0] sm:$0xff]
        %v1041 = vld [vmem:[#allocation8 + $0x9e8] sm:$0xff]
        %v1042 = vld [vmem:[#allocation8 + $0x9f0] sm:$0xff]
        %v1043 = vld [vmem:[#allocation8 + $0x9f8] sm:$0xff]
        %v1044 = vld [vmem:[#allocation8 + $0xa00] sm:$0xff]
        %v1045 = vld [vmem:[#allocation8 + $0xa08] sm:$0xff]
        %v1046 = vld [vmem:[#allocation8 + $0xa10] sm:$0xff]
        %v1047 = vld [vmem:[#allocation8 + $0xa18] sm:$0xff]
        %v1048 = vld [vmem:[#allocation8 + $0xa20] sm:$0xff]
        %v1049 = vld [vmem:[#allocation8 + $0xa28] sm:$0xff]
        %v1050 = vld [vmem:[#allocation8 + $0xa30] sm:$0xff]
        %v1051 = vld [vmem:[#allocation8 + $0xa38] sm:$0xff]
        %v1052 = vld [vmem:[#allocation8 + $0xa40] sm:$0xff]
        %v1053 = vld [vmem:[#allocation8 + $0xa48] sm:$0xff]
        %v1054 = vld [vmem:[#allocation8 + $0xa50] sm:$0xff]
        %v1055 = vld [vmem:[#allocation8 + $0xa58] sm:$0xff]
        %v1056 = vld [vmem:[#allocation8 + $0xa60] sm:$0xff]
        %v1057 = vld [vmem:[#allocation8 + $0xa68] sm:$0xff]
        %v1058 = vld [vmem:[#allocation8 + $0xa70] sm:$0xff]
        %v1059 = vld [vmem:[#allocation8 + $0xa78] sm:$0xff]
        %v1060 = vld [vmem:[#allocation8 + $0xa80] sm:$0xff]
        %v1061 = vld [vmem:[#allocation8 + $0xa88] sm:$0xff]
        %v1062 = vld [vmem:[#allocation8 + $0xa90] sm:$0xff]
        %v1063 = vld [vmem:[#allocation8 + $0xa98] sm:$0xff]
        %v1064 = vld [vmem:[#allocation8 + $0xaa0] sm:$0xff]
        %v1065 = vld [vmem:[#allocation8 + $0xaa8] sm:$0xff]
        %v1066 = vld [vmem:[#allocation8 + $0xab0] sm:$0xff]
        %v1067 = vld [vmem:[#allocation8 + $0xab8] sm:$0xff]
        %v1068 = vld [vmem:[#allocation8 + $0xac0] sm:$0xff]
        %v1069 = vld [vmem:[#allocation8 + $0xac8] sm:$0xff]
        %v1070 = vld [vmem:[#allocation8 + $0xad0] sm:$0xff]
        %v1071 = vld [vmem:[#allocation8 + $0xad8] sm:$0xff]
        %v1072 = vld [vmem:[#allocation8 + $0xae0] sm:$0xff]
        %v1073 = vld [vmem:[#allocation8 + $0xae8] sm:$0xff]
        %v1074 = vld [vmem:[#allocation8 + $0xaf0] sm:$0xff]
        %v1075 = vld [vmem:[#allocation8 + $0xaf8] sm:$0xff]
        %v1076 = vld [vmem:[#allocation8 + $0xb00] sm:$0xff]
        %v1077 = vld [vmem:[#allocation8 + $0xb08] sm:$0xff]
        %v1078 = vld [vmem:[#allocation8 + $0xb10] sm:$0xff]
        %v1079 = vld [vmem:[#allocation8 + $0xb18] sm:$0xff]
        %v1080 = vld [vmem:[#allocation8 + $0xb20] sm:$0xff]
        %v1081 = vld [vmem:[#allocation8 + $0xb28] sm:$0xff]
        %v1082 = vld [vmem:[#allocation8 + $0xb30] sm:$0xff]
        %v1083 = vld [vmem:[#allocation8 + $0xb38] sm:$0xff]
        %v1084 = vld [vmem:[#allocation8 + $0xb40] sm:$0xff]
        %v1085 = vld [vmem:[#allocation8 + $0xb48] sm:$0xff]
        %v1086 = vld [vmem:[#allocation8 + $0xb50] sm:$0xff]
        %v1087 = vld [vmem:[#allocation8 + $0xb58] sm:$0xff]
        %v1088 = vld [vmem:[#allocation8 + $0xb60] sm:$0xff]
        %v1089 = vld [vmem:[#allocation8 + $0xb68] sm:$0xff]
        %v1090 = vld [vmem:[#allocation8 + $0xb70] sm:$0xff]
        %v1091 = vld [vmem:[#allocation8 + $0xb78] sm:$0xff]
        %v1092 = vld [vmem:[#allocation8 + $0xb80] sm:$0xff]
        %v1093 = vld [vmem:[#allocation8 + $0xb88] sm:$0xff]
        %v1094 = vld [vmem:[#allocation8 + $0xb90] sm:$0xff]
        %v1095 = vld [vmem:[#allocation8 + $0xb98] sm:$0xff]
        %v1096 = vld [vmem:[#allocation8 + $0xba0] sm:$0xff]
        %v1097 = vld [vmem:[#allocation8 + $0xba8] sm:$0xff]
        %v1098 = vld [vmem:[#allocation8 + $0xbb0] sm:$0xff]
        %v1099 = vld [vmem:[#allocation8 + $0xbb8] sm:$0xff]
        %v1100 = vld [vmem:[#allocation8 + $0xbc0] sm:$0xff]
        %v1101 = vld [vmem:[#allocation8 + $0xbc8] sm:$0xff]
        %v1102 = vld [vmem:[#allocation8 + $0xbd0] sm:$0xff]
        %v1103 = vld [vmem:[#allocation8 + $0xbd8] sm:$0xff]
        %v1104 = vld [vmem:[#allocation8 + $0xbe0] sm:$0xff]
        %v1105 = vld [vmem:[#allocation8 + $0xbe8] sm:$0xff]
        %v1106 = vld [vmem:[#allocation8 + $0xbf0] sm:$0xff]
        %v1107 = vld [vmem:[#allocation8 + $0xbf8] sm:$0xff]
        %1108 = vmatprep.subr.mxu0 %v725
        %1109 = vmatpush1.msra.mxu0 %v724
        %1110 = vmatprep.subr.mxu0 %v737
        %1111 = vmatpush1.msra.mxu0 %v736
        %1112 = vmatprep.subr.mxu0 %v749
        %1113 = vmatpush1.msra.mxu0 %v748
        %1114 = vmatprep.subr.mxu0 %v761
        %1115 = vmatpush1.msra.mxu0 %v760
        %1116 = vmatprep.subr.mxu0 %v773
        %1117 = vmatpush1.msra.mxu0 %v772
        %1118 = vmatprep.subr.mxu0 %v785
        %1119 = vmatpush1.msra.mxu0 %v784
        %1120 = vmatprep.subr.mxu0 %v797
        %1121 = vmatpush1.msra.mxu0 %v796
        %1122 = vmatprep.subr.mxu0 %v809
        %1123 = vmatpush1.msra.mxu0 %v808
        %1124 = vmatprep.subr.mxu0 %v821
        %1125 = vmatpush1.msra.mxu0 %v820
        %1126 = vmatprep.subr.mxu0 %v833
        %1127 = vmatpush1.msra.mxu0 %v832
        %1128 = vmatprep.subr.mxu0 %v845
        %1129 = vmatpush1.msra.mxu0 %v844
        %1130 = vmatprep.subr.mxu0 %v857
        %1131 = vmatpush1.msra.mxu0 %v856
        %1132 = vmatprep.subr.mxu0 %v869
        %1133 = vmatpush1.msra.mxu0 %v868
        %1134 = vmatprep.subr.mxu0 %v881
        %1135 = vmatpush1.msra.mxu0 %v880
        %1136 = vmatprep.subr.mxu0 %v893
        %1137 = vmatpush1.msra.mxu0 %v892
        %1138 = vmatprep.subr.mxu0 %v905
        %1139 = vmatpush1.msra.mxu0 %v904
        %1140 = vmatprep.subr.mxu0 %v917
        %1141 = vmatpush1.msra.mxu0 %v916
        %1142 = vmatprep.subr.mxu0 %v929
        %1143 = vmatpush1.msra.mxu0 %v928
        %1144 = vmatprep.subr.mxu0 %v941
        %1145 = vmatpush1.msra.mxu0 %v940
        %1146 = vmatprep.subr.mxu0 %v953
        %1147 = vmatpush1.msra.mxu0 %v952
        %1148 = vmatprep.subr.mxu0 %v965
        %1149 = vmatpush1.msra.mxu0 %v964
        %1150 = vmatprep.subr.mxu0 %v977
        %1151 = vmatpush1.msra.mxu0 %v976
        %1152 = vmatprep.subr.mxu0 %v989
        %1153 = vmatpush1.msra.mxu0 %v988
        %1154 = vmatprep.subr.mxu0 %v1001
        %1155 = vmatpush1.msra.mxu0 %v1000
        %1156 = vmatprep.subr.mxu0 %v1013
        %1157 = vmatpush1.msra.mxu0 %v1012
        %1158 = vmatprep.subr.mxu0 %v1025
        %1159 = vmatpush1.msra.mxu0 %v1024
        %1160 = vmatprep.subr.mxu0 %v1037
        %1161 = vmatpush1.msra.mxu0 %v1036
        %1162 = vmatprep.subr.mxu0 %v1049
        %1163 = vmatpush1.msra.mxu0 %v1048
        %1164 = vmatprep.subr.mxu0 %v1061
        %1165 = vmatpush1.msra.mxu0 %v1060
        %1166 = vmatprep.subr.mxu0 %v1073
        %1167 = vmatpush1.msra.mxu0 %v1072
        %1168 = vmatprep.subr.mxu0 %v1085
        %1169 = vmatpush1.msra.mxu0 %v1084
        %1170 = vmatprep.subr.mxu0 %v1097
        %1171 = vmatpush1.msra.mxu0 %v1096
        %1172 = vmatprep.mubr.f32.mxu0 %v723
        %1173 = vmatmul.mubr.f32.gmra.mrb[0].mxu0 %v722
        %v1174 = vpop.f32.mrb[0].mxu0
        %v1175 = vadd.f32 0.0, %v1174
        %v1176 = vpop.f32.mrb[0].mxu0
        %v1177 = vadd.f32 0.0, %v1176
        %1178 = vdwg.mxu0
        %1179 = vmatprep.subr.mxu0 %v727
        %1180 = vmatpush1.msra.mxu0 %v726
        %1181 = vmatprep.subr.mxu0 %v739
        %1182 = vmatpush1.msra.mxu0 %v738
        %1183 = vmatprep.subr.mxu0 %v751
        %1184 = vmatpush1.msra.mxu0 %v750
        %1185 = vmatprep.subr.mxu0 %v763
        %1186 = vmatpush1.msra.mxu0 %v762
        %1187 = vmatprep.subr.mxu0 %v775
        %1188 = vmatpush1.msra.mxu0 %v774
        %1189 = vmatprep.subr.mxu0 %v787
        %1190 = vmatpush1.msra.mxu0 %v786
        %1191 = vmatprep.subr.mxu0 %v799
        %1192 = vmatpush1.msra.mxu0 %v798
        %1193 = vmatprep.subr.mxu0 %v811
        %1194 = vmatpush1.msra.mxu0 %v810
        %1195 = vmatprep.subr.mxu0 %v823
        %1196 = vmatpush1.msra.mxu0 %v822
        %1197 = vmatprep.subr.mxu0 %v835
        %1198 = vmatpush1.msra.mxu0 %v834
        %1199 = vmatprep.subr.mxu0 %v847
        %1200 = vmatpush1.msra.mxu0 %v846
        %1201 = vmatprep.subr.mxu0 %v859
        %1202 = vmatpush1.msra.mxu0 %v858
        %1203 = vmatprep.subr.mxu0 %v871
        %1204 = vmatpush1.msra.mxu0 %v870
        %1205 = vmatprep.subr.mxu0 %v883
        %1206 = vmatpush1.msra.mxu0 %v882
        %1207 = vmatprep.subr.mxu0 %v895
        %1208 = vmatpush1.msra.mxu0 %v894
        %1209 = vmatprep.subr.mxu0 %v907
        %1210 = vmatpush1.msra.mxu0 %v906
        %1211 = vmatprep.subr.mxu0 %v919
        %1212 = vmatpush1.msra.mxu0 %v918
        %1213 = vmatprep.subr.mxu0 %v931
        %1214 = vmatpush1.msra.mxu0 %v930
        %1215 = vmatprep.subr.mxu0 %v943
        %1216 = vmatpush1.msra.mxu0 %v942
        %1217 = vmatprep.subr.mxu0 %v955
        %1218 = vmatpush1.msra.mxu0 %v954
        %1219 = vmatprep.subr.mxu0 %v967
        %1220 = vmatpush1.msra.mxu0 %v966
        %1221 = vmatprep.subr.mxu0 %v979
        %1222 = vmatpush1.msra.mxu0 %v978
        %1223 = vmatprep.subr.mxu0 %v991
        %1224 = vmatpush1.msra.mxu0 %v990
        %1225 = vmatprep.subr.mxu0 %v1003
        %1226 = vmatpush1.msra.mxu0 %v1002
        %1227 = vmatprep.subr.mxu0 %v1015
        %1228 = vmatpush1.msra.mxu0 %v1014
        %1229 = vmatprep.subr.mxu0 %v1027
        %1230 = vmatpush1.msra.mxu0 %v1026
        %1231 = vmatprep.subr.mxu0 %v1039
        %1232 = vmatpush1.msra.mxu0 %v1038
        %1233 = vmatprep.subr.mxu0 %v1051
        %1234 = vmatpush1.msra.mxu0 %v1050
        %1235 = vmatprep.subr.mxu0 %v1063
        %1236 = vmatpush1.msra.mxu0 %v1062
        %1237 = vmatprep.subr.mxu0 %v1075
        %1238 = vmatpush1.msra.mxu0 %v1074
        %1239 = vmatprep.subr.mxu0 %v1087
        %1240 = vmatpush1.msra.mxu0 %v1086
        %1241 = vmatprep.subr.mxu0 %v1099
        %1242 = vmatpush1.msra.mxu0 %v1098
        %1243 = vmatprep.mubr.f32.mxu0 %v723
        %1244 = vmatmul.mubr.f32.gmra.mrb[0].mxu0 %v722
        %v1245 = vpop.f32.mrb[0].mxu0
        %v1246 = vadd.f32 0.0, %v1245
        %v1247 = vpop.f32.mrb[0].mxu0
        %v1248 = vadd.f32 0.0, %v1247
        %1249 = vdwg.mxu0
        %1250 = vmatprep.subr.mxu0 %v729
        %1251 = vmatpush1.msra.mxu0 %v728
        %1252 = vmatprep.subr.mxu0 %v741
        %1253 = vmatpush1.msra.mxu0 %v740
        %1254 = vmatprep.subr.mxu0 %v753
        %1255 = vmatpush1.msra.mxu0 %v752
        %1256 = vmatprep.subr.mxu0 %v765
        %1257 = vmatpush1.msra.mxu0 %v764
        %1258 = vmatprep.subr.mxu0 %v777
        %1259 = vmatpush1.msra.mxu0 %v776
        %1260 = vmatprep.subr.mxu0 %v789
        %1261 = vmatpush1.msra.mxu0 %v788
        %1262 = vmatprep.subr.mxu0 %v801
        %1263 = vmatpush1.msra.mxu0 %v800
        %1264 = vmatprep.subr.mxu0 %v813
        %1265 = vmatpush1.msra.mxu0 %v812
        %1266 = vmatprep.subr.mxu0 %v825
        %1267 = vmatpush1.msra.mxu0 %v824
        %1268 = vmatprep.subr.mxu0 %v837
        %1269 = vmatpush1.msra.mxu0 %v836
        %1270 = vmatprep.subr.mxu0 %v849
        %1271 = vmatpush1.msra.mxu0 %v848
        %1272 = vmatprep.subr.mxu0 %v861
        %1273 = vmatpush1.msra.mxu0 %v860
        %1274 = vmatprep.subr.mxu0 %v873
        %1275 = vmatpush1.msra.mxu0 %v872
        %1276 = vmatprep.subr.mxu0 %v885
        %1277 = vmatpush1.msra.mxu0 %v884
        %1278 = vmatprep.subr.mxu0 %v897
        %1279 = vmatpush1.msra.mxu0 %v896
        %1280 = vmatprep.subr.mxu0 %v909
        %1281 = vmatpush1.msra.mxu0 %v908
        %1282 = vmatprep.subr.mxu0 %v921
        %1283 = vmatpush1.msra.mxu0 %v920
        %1284 = vmatprep.subr.mxu0 %v933
        %1285 = vmatpush1.msra.mxu0 %v932
        %1286 = vmatprep.subr.mxu0 %v945
        %1287 = vmatpush1.msra.mxu0 %v944
        %1288 = vmatprep.subr.mxu0 %v957
        %1289 = vmatpush1.msra.mxu0 %v956
        %1290 = vmatprep.subr.mxu0 %v969
        %1291 = vmatpush1.msra.mxu0 %v968
        %1292 = vmatprep.subr.mxu0 %v981
        %1293 = vmatpush1.msra.mxu0 %v980
        %1294 = vmatprep.subr.mxu0 %v993
        %1295 = vmatpush1.msra.mxu0 %v992
        %1296 = vmatprep.subr.mxu0 %v1005
        %1297 = vmatpush1.msra.mxu0 %v1004
        %1298 = vmatprep.subr.mxu0 %v1017
        %1299 = vmatpush1.msra.mxu0 %v1016
        %1300 = vmatprep.subr.mxu0 %v1029
        %1301 = vmatpush1.msra.mxu0 %v1028
        %1302 = vmatprep.subr.mxu0 %v1041
        %1303 = vmatpush1.msra.mxu0 %v1040
        %1304 = vmatprep.subr.mxu0 %v1053
        %1305 = vmatpush1.msra.mxu0 %v1052
        %1306 = vmatprep.subr.mxu0 %v1065
        %1307 = vmatpush1.msra.mxu0 %v1064
        %1308 = vmatprep.subr.mxu0 %v1077
        %1309 = vmatpush1.msra.mxu0 %v1076
        %1310 = vmatprep.subr.mxu0 %v1089
        %1311 = vmatpush1.msra.mxu0 %v1088
        %1312 = vmatprep.subr.mxu0 %v1101
        %1313 = vmatpush1.msra.mxu0 %v1100
        %1314 = vmatprep.mubr.f32.mxu0 %v723
        %1315 = vmatmul.mubr.f32.gmra.mrb[0].mxu0 %v722
        %v1316 = vpop.f32.mrb[0].mxu0
        %v1317 = vadd.f32 0.0, %v1316
        %v1318 = vpop.f32.mrb[0].mxu0
        %v1319 = vadd.f32 0.0, %v1318
        %1320 = vdwg.mxu0
        %1321 = vmatprep.subr.mxu0 %v731
        %1322 = vmatpush1.msra.mxu0 %v730
        %1323 = vmatprep.subr.mxu0 %v743
        %1324 = vmatpush1.msra.mxu0 %v742
        %1325 = vmatprep.subr.mxu0 %v755
        %1326 = vmatpush1.msra.mxu0 %v754
        %1327 = vmatprep.subr.mxu0 %v767
        %1328 = vmatpush1.msra.mxu0 %v766
        %1329 = vmatprep.subr.mxu0 %v779
        %1330 = vmatpush1.msra.mxu0 %v778
        %1331 = vmatprep.subr.mxu0 %v791
        %1332 = vmatpush1.msra.mxu0 %v790
        %1333 = vmatprep.subr.mxu0 %v803
        %1334 = vmatpush1.msra.mxu0 %v802
        %1335 = vmatprep.subr.mxu0 %v815
        %1336 = vmatpush1.msra.mxu0 %v814
        %1337 = vmatprep.subr.mxu0 %v827
        %1338 = vmatpush1.msra.mxu0 %v826
        %1339 = vmatprep.subr.mxu0 %v839
        %1340 = vmatpush1.msra.mxu0 %v838
        %1341 = vmatprep.subr.mxu0 %v851
        %1342 = vmatpush1.msra.mxu0 %v850
        %1343 = vmatprep.subr.mxu0 %v863
        %1344 = vmatpush1.msra.mxu0 %v862
        %1345 = vmatprep.subr.mxu0 %v875
        %1346 = vmatpush1.msra.mxu0 %v874
        %1347 = vmatprep.subr.mxu0 %v887
        %1348 = vmatpush1.msra.mxu0 %v886
        %1349 = vmatprep.subr.mxu0 %v899
        %1350 = vmatpush1.msra.mxu0 %v898
        %1351 = vmatprep.subr.mxu0 %v911
        %1352 = vmatpush1.msra.mxu0 %v910
        %1353 = vmatprep.subr.mxu0 %v923
        %1354 = vmatpush1.msra.mxu0 %v922
        %1355 = vmatprep.subr.mxu0 %v935
        %1356 = vmatpush1.msra.mxu0 %v934
        %1357 = vmatprep.subr.mxu0 %v947
        %1358 = vmatpush1.msra.mxu0 %v946
        %1359 = vmatprep.subr.mxu0 %v959
        %1360 = vmatpush1.msra.mxu0 %v958
        %1361 = vmatprep.subr.mxu0 %v971
        %1362 = vmatpush1.msra.mxu0 %v970
        %1363 = vmatprep.subr.mxu0 %v983
        %1364 = vmatpush1.msra.mxu0 %v982
        %1365 = vmatprep.subr.mxu0 %v995
        %1366 = vmatpush1.msra.mxu0 %v994
        %1367 = vmatprep.subr.mxu0 %v1007
        %1368 = vmatpush1.msra.mxu0 %v1006
        %1369 = vmatprep.subr.mxu0 %v1019
        %1370 = vmatpush1.msra.mxu0 %v1018
        %1371 = vmatprep.subr.mxu0 %v1031
        %1372 = vmatpush1.msra.mxu0 %v1030
        %1373 = vmatprep.subr.mxu0 %v1043
        %1374 = vmatpush1.msra.mxu0 %v1042
        %1375 = vmatprep.subr.mxu0 %v1055
        %1376 = vmatpush1.msra.mxu0 %v1054
        %1377 = vmatprep.subr.mxu0 %v1067
        %1378 = vmatpush1.msra.mxu0 %v1066
        %1379 = vmatprep.subr.mxu0 %v1079
        %1380 = vmatpush1.msra.mxu0 %v1078
        %1381 = vmatprep.subr.mxu0 %v1091
        %1382 = vmatpush1.msra.mxu0 %v1090
        %1383 = vmatprep.subr.mxu0 %v1103
        %1384 = vmatpush1.msra.mxu0 %v1102
        %1385 = vmatprep.mubr.f32.mxu0 %v723
        %1386 = vmatmul.mubr.f32.gmra.mrb[0].mxu0 %v722
        %v1387 = vpop.f32.mrb[0].mxu0
        %v1388 = vadd.f32 0.0, %v1387
        %v1389 = vpop.f32.mrb[0].mxu0
        %v1390 = vadd.f32 0.0, %v1389
        %1391 = vdwg.mxu0
        %1392 = vmatprep.subr.mxu0 %v733
        %1393 = vmatpush1.msra.mxu0 %v732
        %1394 = vmatprep.subr.mxu0 %v745
        %1395 = vmatpush1.msra.mxu0 %v744
        %1396 = vmatprep.subr.mxu0 %v757
        %1397 = vmatpush1.msra.mxu0 %v756
        %1398 = vmatprep.subr.mxu0 %v769
        %1399 = vmatpush1.msra.mxu0 %v768
        %1400 = vmatprep.subr.mxu0 %v781
        %1401 = vmatpush1.msra.mxu0 %v780
        %1402 = vmatprep.subr.mxu0 %v793
        %1403 = vmatpush1.msra.mxu0 %v792
        %1404 = vmatprep.subr.mxu0 %v805
        %1405 = vmatpush1.msra.mxu0 %v804
        %1406 = vmatprep.subr.mxu0 %v817
        %1407 = vmatpush1.msra.mxu0 %v816
        %1408 = vmatprep.subr.mxu0 %v829
        %1409 = vmatpush1.msra.mxu0 %v828
        %1410 = vmatprep.subr.mxu0 %v841
        %1411 = vmatpush1.msra.mxu0 %v840
        %1412 = vmatprep.subr.mxu0 %v853
        %1413 = vmatpush1.msra.mxu0 %v852
        %1414 = vmatprep.subr.mxu0 %v865
        %1415 = vmatpush1.msra.mxu0 %v864
        %1416 = vmatprep.subr.mxu0 %v877
        %1417 = vmatpush1.msra.mxu0 %v876
        %1418 = vmatprep.subr.mxu0 %v889
        %1419 = vmatpush1.msra.mxu0 %v888
        %1420 = vmatprep.subr.mxu0 %v901
        %1421 = vmatpush1.msra.mxu0 %v900
        %1422 = vmatprep.subr.mxu0 %v913
        %1423 = vmatpush1.msra.mxu0 %v912
        %1424 = vmatprep.subr.mxu0 %v925
        %1425 = vmatpush1.msra.mxu0 %v924
        %1426 = vmatprep.subr.mxu0 %v937
        %1427 = vmatpush1.msra.mxu0 %v936
        %1428 = vmatprep.subr.mxu0 %v949
        %1429 = vmatpush1.msra.mxu0 %v948
        %1430 = vmatprep.subr.mxu0 %v961
        %1431 = vmatpush1.msra.mxu0 %v960
        %1432 = vmatprep.subr.mxu0 %v973
        %1433 = vmatpush1.msra.mxu0 %v972
        %1434 = vmatprep.subr.mxu0 %v985
        %1435 = vmatpush1.msra.mxu0 %v984
        %1436 = vmatprep.subr.mxu0 %v997
        %1437 = vmatpush1.msra.mxu0 %v996
        %1438 = vmatprep.subr.mxu0 %v1009
        %1439 = vmatpush1.msra.mxu0 %v1008
        %1440 = vmatprep.subr.mxu0 %v1021
        %1441 = vmatpush1.msra.mxu0 %v1020
        %1442 = vmatprep.subr.mxu0 %v1033
        %1443 = vmatpush1.msra.mxu0 %v1032
        %1444 = vmatprep.subr.mxu0 %v1045
        %1445 = vmatpush1.msra.mxu0 %v1044
        %1446 = vmatprep.subr.mxu0 %v1057
        %1447 = vmatpush1.msra.mxu0 %v1056
        %1448 = vmatprep.subr.mxu0 %v1069
        %1449 = vmatpush1.msra.mxu0 %v1068
        %1450 = vmatprep.subr.mxu0 %v1081
        %1451 = vmatpush1.msra.mxu0 %v1080
        %1452 = vmatprep.subr.mxu0 %v1093
        %1453 = vmatpush1.msra.mxu0 %v1092
        %1454 = vmatprep.subr.mxu0 %v1105
        %1455 = vmatpush1.msra.mxu0 %v1104
        %1456 = vmatprep.mubr.f32.mxu0 %v723
        %1457 = vmatmul.mubr.f32.gmra.mrb[0].mxu0 %v722
        %v1458 = vpop.f32.mrb[0].mxu0
        %v1459 = vadd.f32 0.0, %v1458
        %v1460 = vpop.f32.mrb[0].mxu0
        %v1461 = vadd.f32 0.0, %v1460
        %1462 = vdwg.mxu0
        %1463 = vmatprep.subr.mxu0 %v735
        %1464 = vmatpush1.msra.mxu0 %v734
        %1465 = vmatprep.subr.mxu0 %v747
        %1466 = vmatpush1.msra.mxu0 %v746
        %1467 = vmatprep.subr.mxu0 %v759
        %1468 = vmatpush1.msra.mxu0 %v758
        %1469 = vmatprep.subr.mxu0 %v771
        %1470 = vmatpush1.msra.mxu0 %v770
        %1471 = vmatprep.subr.mxu0 %v783
        %1472 = vmatpush1.msra.mxu0 %v782
        %1473 = vmatprep.subr.mxu0 %v795
        %1474 = vmatpush1.msra.mxu0 %v794
        %1475 = vmatprep.subr.mxu0 %v807
        %1476 = vmatpush1.msra.mxu0 %v806
        %1477 = vmatprep.subr.mxu0 %v819
        %1478 = vmatpush1.msra.mxu0 %v818
        %1479 = vmatprep.subr.mxu0 %v831
        %1480 = vmatpush1.msra.mxu0 %v830
        %1481 = vmatprep.subr.mxu0 %v843
        %1482 = vmatpush1.msra.mxu0 %v842
        %1483 = vmatprep.subr.mxu0 %v855
        %1484 = vmatpush1.msra.mxu0 %v854
        %1485 = vmatprep.subr.mxu0 %v867
        %1486 = vmatpush1.msra.mxu0 %v866
        %1487 = vmatprep.subr.mxu0 %v879
        %1488 = vmatpush1.msra.mxu0 %v878
        %1489 = vmatprep.subr.mxu0 %v891
        %1490 = vmatpush1.msra.mxu0 %v890
        %1491 = vmatprep.subr.mxu0 %v903
        %1492 = vmatpush1.msra.mxu0 %v902
        %1493 = vmatprep.subr.mxu0 %v915
        %1494 = vmatpush1.msra.mxu0 %v914
        %1495 = vmatprep.subr.mxu0 %v927
        %1496 = vmatpush1.msra.mxu0 %v926
        %1497 = vmatprep.subr.mxu0 %v939
        %1498 = vmatpush1.msra.mxu0 %v938
        %1499 = vmatprep.subr.mxu0 %v951
        %1500 = vmatpush1.msra.mxu0 %v950
        %1501 = vmatprep.subr.mxu0 %v963
        %1502 = vmatpush1.msra.mxu0 %v962
        %1503 = vmatprep.subr.mxu0 %v975
        %1504 = vmatpush1.msra.mxu0 %v974
        %1505 = vmatprep.subr.mxu0 %v987
        %1506 = vmatpush1.msra.mxu0 %v986
        %1507 = vmatprep.subr.mxu0 %v999
        %1508 = vmatpush1.msra.mxu0 %v998
        %1509 = vmatprep.subr.mxu0 %v1011
        %1510 = vmatpush1.msra.mxu0 %v1010
        %1511 = vmatprep.subr.mxu0 %v1023
        %1512 = vmatpush1.msra.mxu0 %v1022
        %1513 = vmatprep.subr.mxu0 %v1035
        %1514 = vmatpush1.msra.mxu0 %v1034
        %1515 = vmatprep.subr.mxu0 %v1047
        %1516 = vmatpush1.msra.mxu0 %v1046
        %1517 = vmatprep.subr.mxu0 %v1059
        %1518 = vmatpush1.msra.mxu0 %v1058
        %1519 = vmatprep.subr.mxu0 %v1071
        %1520 = vmatpush1.msra.mxu0 %v1070
        %1521 = vmatprep.subr.mxu0 %v1083
        %1522 = vmatpush1.msra.mxu0 %v1082
        %1523 = vmatprep.subr.mxu0 %v1095
        %1524 = vmatpush1.msra.mxu0 %v1094
        %1525 = vmatprep.subr.mxu0 %v1107
        %1526 = vmatpush1.msra.mxu0 %v1106
        %1527 = vmatprep.mubr.f32.mxu0 %v723
        %1528 = vmatmul.mubr.f32.gmra.mrb[0].mxu0 %v722
        %v1529 = vpop.f32.mrb[0].mxu0
        %v1530 = vadd.f32 0.0, %v1529
        %v1531 = vpop.f32.mrb[0].mxu0
        %v1532 = vadd.f32 0.0, %v1531
        %1533 = vdwg.mxu0
        %v1534 = vld [vmem:[#allocation10] sm:$0xff]
        %v1535 = vld [vmem:[#allocation10 + $0x8] sm:$0xff]
        %v1536 = vld [vmem:[#allocation10 + $0x10] sm:$0xff]
        %v1537 = vld [vmem:[#allocation10 + $0x18] sm:$0xff]
        %v1538 = vld [vmem:[#allocation10 + $0x20] sm:$0xff]
        %v1539 = vld [vmem:[#allocation10 + $0x28] sm:$0xff]
        %1540 = vmatprep.subr.mxu0 %v1535
        %1541 = vmatpush1.xpose.msra.mxu0 %v1534
        %1542 = vmatprep.subr.mxu0 0.0
        %1543 = vmatpush1.xpose.msra.mxu0 0.0
        %1544 = vmatprep.subr.mxu0 0.0
        %1545 = vmatpush1.xpose.msra.mxu0 0.0
        %1546 = vmatprep.subr.mxu0 0.0
        %1547 = vmatpush1.xpose.msra.mxu0 0.0
        %1548 = vmatprep.subr.mxu0 0.0
        %1549 = vmatpush1.xpose.msra.mxu0 0.0
        %1550 = vmatprep.subr.mxu0 0.0
        %1551 = vmatpush1.xpose.msra.mxu0 0.0
        %1552 = vmatprep.subr.mxu0 0.0
        %1553 = vmatpush1.xpose.msra.mxu0 0.0
        %1554 = vmatprep.subr.mxu0 0.0
        %1555 = vmatpush1.xpose.msra.mxu0 0.0
        %1556 = vmatprep.subr.mxu0 0.0
        %1557 = vmatpush1.xpose.msra.mxu0 0.0
        %1558 = vmatprep.subr.mxu0 0.0
        %1559 = vmatpush1.xpose.msra.mxu0 0.0
        %1560 = vmatprep.subr.mxu0 0.0
        %1561 = vmatpush1.xpose.msra.mxu0 0.0
        %1562 = vmatprep.subr.mxu0 0.0
        %1563 = vmatpush1.xpose.msra.mxu0 0.0
        %1564 = vmatprep.subr.mxu0 0.0
        %1565 = vmatpush1.xpose.msra.mxu0 0.0
        %1566 = vmatprep.subr.mxu0 0.0
        %1567 = vmatpush1.xpose.msra.mxu0 0.0
        %1568 = vmatprep.subr.mxu0 0.0
        %1569 = vmatpush1.xpose.msra.mxu0 0.0
        %1570 = vmatprep.subr.mxu0 0.0
        %1571 = vmatpush1.xpose.msra.mxu0 0.0
        %1572 = vmatprep.subr.mxu0 0.0
        %1573 = vmatpush1.xpose.msra.mxu0 0.0
        %1574 = vmatprep.subr.mxu0 0.0
        %1575 = vmatpush1.xpose.msra.mxu0 0.0
        %1576 = vmatprep.subr.mxu0 0.0
        %1577 = vmatpush1.xpose.msra.mxu0 0.0
        %1578 = vmatprep.subr.mxu0 0.0
        %1579 = vmatpush1.xpose.msra.mxu0 0.0
        %1580 = vmatprep.subr.mxu0 0.0
        %1581 = vmatpush1.xpose.msra.mxu0 0.0
        %1582 = vmatprep.subr.mxu0 0.0
        %1583 = vmatpush1.xpose.msra.mxu0 0.0
        %1584 = vmatprep.subr.mxu0 0.0
        %1585 = vmatpush1.xpose.msra.mxu0 0.0
        %1586 = vmatprep.subr.mxu0 0.0
        %1587 = vmatpush1.xpose.msra.mxu0 0.0
        %1588 = vmatprep.subr.mxu0 0.0
        %1589 = vmatpush1.xpose.msra.mxu0 0.0
        %1590 = vmatprep.subr.mxu0 0.0
        %1591 = vmatpush1.xpose.msra.mxu0 0.0
        %1592 = vmatprep.subr.mxu0 0.0
        %1593 = vmatpush1.xpose.msra.mxu0 0.0
        %1594 = vmatprep.subr.mxu0 0.0
        %1595 = vmatpush1.xpose.msra.mxu0 0.0
        %1596 = vmatprep.subr.mxu0 0.0
        %1597 = vmatpush1.xpose.msra.mxu0 0.0
        %1598 = vmatprep.subr.mxu0 0.0
        %1599 = vmatpush1.xpose.msra.mxu0 0.0
        %1600 = vmatprep.subr.mxu0 0.0
        %1601 = vmatpush1.xpose.msra.mxu0 0.0
        %1602 = vmatprep.subr.mxu0 0.0
        %1603 = vmatpush1.xpose.msra.mxu0 0.0
        %1604 = vmatprep.mubr.f32.mxu0 %v1177
        %1605 = vmatmul.mubr.f32.gmra.mrb[0].mxu0 %v1175
        %v1606 = vpop.f32.mrb[0].mxu0
        %v1607 = vadd.f32 0.0, %v1606
        %v1608 = vpop.f32.mrb[0].mxu0
        %1609 = vdwg.mxu0
        %1610 = vmatprep.subr.mxu0 %v1537
        %1611 = vmatpush1.xpose.msra.mxu0 %v1536
        %1612 = vmatprep.subr.mxu0 0.0
        %1613 = vmatpush1.xpose.msra.mxu0 0.0
        %1614 = vmatprep.subr.mxu0 0.0
        %1615 = vmatpush1.xpose.msra.mxu0 0.0
        %1616 = vmatprep.subr.mxu0 0.0
        %1617 = vmatpush1.xpose.msra.mxu0 0.0
        %1618 = vmatprep.subr.mxu0 0.0
        %1619 = vmatpush1.xpose.msra.mxu0 0.0
        %1620 = vmatprep.subr.mxu0 0.0
        %1621 = vmatpush1.xpose.msra.mxu0 0.0
        %1622 = vmatprep.subr.mxu0 0.0
        %1623 = vmatpush1.xpose.msra.mxu0 0.0
        %1624 = vmatprep.subr.mxu0 0.0
        %1625 = vmatpush1.xpose.msra.mxu0 0.0
        %1626 = vmatprep.subr.mxu0 0.0
        %1627 = vmatpush1.xpose.msra.mxu0 0.0
        %1628 = vmatprep.subr.mxu0 0.0
        %1629 = vmatpush1.xpose.msra.mxu0 0.0
        %1630 = vmatprep.subr.mxu0 0.0
        %1631 = vmatpush1.xpose.msra.mxu0 0.0
        %1632 = vmatprep.subr.mxu0 0.0
        %1633 = vmatpush1.xpose.msra.mxu0 0.0
        %1634 = vmatprep.subr.mxu0 0.0
        %1635 = vmatpush1.xpose.msra.mxu0 0.0
        %1636 = vmatprep.subr.mxu0 0.0
        %1637 = vmatpush1.xpose.msra.mxu0 0.0
        %1638 = vmatprep.subr.mxu0 0.0
        %1639 = vmatpush1.xpose.msra.mxu0 0.0
        %1640 = vmatprep.subr.mxu0 0.0
        %1641 = vmatpush1.xpose.msra.mxu0 0.0
        %1642 = vmatprep.subr.mxu0 0.0
        %1643 = vmatpush1.xpose.msra.mxu0 0.0
        %1644 = vmatprep.subr.mxu0 0.0
        %1645 = vmatpush1.xpose.msra.mxu0 0.0
        %1646 = vmatprep.subr.mxu0 0.0
        %1647 = vmatpush1.xpose.msra.mxu0 0.0
        %1648 = vmatprep.subr.mxu0 0.0
        %1649 = vmatpush1.xpose.msra.mxu0 0.0
        %1650 = vmatprep.subr.mxu0 0.0
        %1651 = vmatpush1.xpose.msra.mxu0 0.0
        %1652 = vmatprep.subr.mxu0 0.0
        %1653 = vmatpush1.xpose.msra.mxu0 0.0
        %1654 = vmatprep.subr.mxu0 0.0
        %1655 = vmatpush1.xpose.msra.mxu0 0.0
        %1656 = vmatprep.subr.mxu0 0.0
        %1657 = vmatpush1.xpose.msra.mxu0 0.0
        %1658 = vmatprep.subr.mxu0 0.0
        %1659 = vmatpush1.xpose.msra.mxu0 0.0
        %1660 = vmatprep.subr.mxu0 0.0
        %1661 = vmatpush1.xpose.msra.mxu0 0.0
        %1662 = vmatprep.subr.mxu0 0.0
        %1663 = vmatpush1.xpose.msra.mxu0 0.0
        %1664 = vmatprep.subr.mxu0 0.0
        %1665 = vmatpush1.xpose.msra.mxu0 0.0
        %1666 = vmatprep.subr.mxu0 0.0
        %1667 = vmatpush1.xpose.msra.mxu0 0.0
        %1668 = vmatprep.subr.mxu0 0.0
        %1669 = vmatpush1.xpose.msra.mxu0 0.0
        %1670 = vmatprep.subr.mxu0 0.0
        %1671 = vmatpush1.xpose.msra.mxu0 0.0
        %1672 = vmatprep.subr.mxu0 0.0
        %1673 = vmatpush1.xpose.msra.mxu0 0.0
        %1674 = vmatprep.mubr.f32.mxu0 %v1248
        %1675 = vmatmul.mubr.f32.gmra.mrb[0].mxu0 %v1246
        %v1676 = vpop.f32.mrb[0].mxu0
        %v1677 = vadd.f32 %v1607, %v1676
        %v1678 = vpop.f32.mrb[0].mxu0
        %1679 = vdwg.mxu0
        %1680 = vmatprep.subr.mxu0 %v1539
        %1681 = vmatpush1.xpose.msra.mxu0 %v1538
        %1682 = vmatprep.subr.mxu0 0.0
        %1683 = vmatpush1.xpose.msra.mxu0 0.0
        %1684 = vmatprep.subr.mxu0 0.0
        %1685 = vmatpush1.xpose.msra.mxu0 0.0
        %1686 = vmatprep.subr.mxu0 0.0
        %1687 = vmatpush1.xpose.msra.mxu0 0.0
        %1688 = vmatprep.subr.mxu0 0.0
        %1689 = vmatpush1.xpose.msra.mxu0 0.0
        %1690 = vmatprep.subr.mxu0 0.0
        %1691 = vmatpush1.xpose.msra.mxu0 0.0
        %1692 = vmatprep.subr.mxu0 0.0
        %1693 = vmatpush1.xpose.msra.mxu0 0.0
        %1694 = vmatprep.subr.mxu0 0.0
        %1695 = vmatpush1.xpose.msra.mxu0 0.0
        %1696 = vmatprep.subr.mxu0 0.0
        %1697 = vmatpush1.xpose.msra.mxu0 0.0
        %1698 = vmatprep.subr.mxu0 0.0
        %1699 = vmatpush1.xpose.msra.mxu0 0.0
        %1700 = vmatprep.subr.mxu0 0.0
        %1701 = vmatpush1.xpose.msra.mxu0 0.0
        %1702 = vmatprep.subr.mxu0 0.0
        %1703 = vmatpush1.xpose.msra.mxu0 0.0
        %1704 = vmatprep.subr.mxu0 0.0
        %1705 = vmatpush1.xpose.msra.mxu0 0.0
        %1706 = vmatprep.subr.mxu0 0.0
        %1707 = vmatpush1.xpose.msra.mxu0 0.0
        %1708 = vmatprep.subr.mxu0 0.0
        %1709 = vmatpush1.xpose.msra.mxu0 0.0
        %1710 = vmatprep.subr.mxu0 0.0
        %1711 = vmatpush1.xpose.msra.mxu0 0.0
        %1712 = vmatprep.subr.mxu0 0.0
        %1713 = vmatpush1.xpose.msra.mxu0 0.0
        %1714 = vmatprep.subr.mxu0 0.0
        %1715 = vmatpush1.xpose.msra.mxu0 0.0
        %1716 = vmatprep.subr.mxu0 0.0
        %1717 = vmatpush1.xpose.msra.mxu0 0.0
        %1718 = vmatprep.subr.mxu0 0.0
        %1719 = vmatpush1.xpose.msra.mxu0 0.0
        %1720 = vmatprep.subr.mxu0 0.0
        %1721 = vmatpush1.xpose.msra.mxu0 0.0
        %1722 = vmatprep.subr.mxu0 0.0
        %1723 = vmatpush1.xpose.msra.mxu0 0.0
        %1724 = vmatprep.subr.mxu0 0.0
        %1725 = vmatpush1.xpose.msra.mxu0 0.0
        %1726 = vmatprep.subr.mxu0 0.0
        %1727 = vmatpush1.xpose.msra.mxu0 0.0
        %1728 = vmatprep.subr.mxu0 0.0
        %1729 = vmatpush1.xpose.msra.mxu0 0.0
        %1730 = vmatprep.subr.mxu0 0.0
        %1731 = vmatpush1.xpose.msra.mxu0 0.0
        %1732 = vmatprep.subr.mxu0 0.0
        %1733 = vmatpush1.xpose.msra.mxu0 0.0
        %1734 = vmatprep.subr.mxu0 0.0
        %1735 = vmatpush1.xpose.msra.mxu0 0.0
        %1736 = vmatprep.subr.mxu0 0.0
        %1737 = vmatpush1.xpose.msra.mxu0 0.0
        %1738 = vmatprep.subr.mxu0 0.0
        %1739 = vmatpush1.xpose.msra.mxu0 0.0
        %1740 = vmatprep.subr.mxu0 0.0
        %1741 = vmatpush1.xpose.msra.mxu0 0.0
        %1742 = vmatprep.subr.mxu0 0.0
        %1743 = vmatpush1.xpose.msra.mxu0 0.0
        %1744 = vmatprep.mubr.f32.mxu0 %v1319
        %1745 = vmatmul.mubr.f32.gmra.mrb[0].mxu0 %v1317
        %v1746 = vpop.f32.mrb[0].mxu0
        %v1747 = vadd.f32 %v1677, %v1746
        %v1748 = vpop.f32.mrb[0].mxu0
        %1749 = vdwg.mxu0
        %v1750 = vmul.f32 %v1747, 0.03608439
        %vm1751 = vcmask 57344
        %v1752 = vsel %vm1751, %v1750, -inf
        %1753 = vmax.xlane.f32.xlu0 %v1752
        %v1754 = vpop.xlane.xlu0 %1753
        %v1755 = vsub.f32 %v1750, %v1754
        %v1756 = vmul.f32 %v1755, 1.442695
        %v1757 = vpow.pop %v1756
        %v1758 = vsel %vm1751, %v1757, 0.0
        %1759 = vadd.xlane.f32.xlu0 %v1758
        %v1760 = vpop.xlane.xlu0 %1759
        %v1761 = vrcp.pop %v1760
        %v1762 = vmul.f32 %v1757, %v1761
        %vm1763 = vcmask 64512
        %v1765 = vsel %vm1763, %v1762, 0
        %1767 = vmatprep.subr.mxu0 %v1535
        %1768 = vmatpush1.msra.mxu0 %v1534
        %1769 = vmatprep.subr.mxu0 0.0
        %1770 = vmatpush1.msra.mxu0 0.0
        %1771 = vmatprep.subr.mxu0 0.0
        %1772 = vmatpush1.msra.mxu0 0.0
        %1773 = vmatprep.subr.mxu0 0.0
        %1774 = vmatpush1.msra.mxu0 0.0
        %1775 = vmatprep.subr.mxu0 0.0
        %1776 = vmatpush1.msra.mxu0 0.0
        %1777 = vmatprep.subr.mxu0 0.0
        %1778 = vmatpush1.msra.mxu0 0.0
        %1779 = vmatprep.subr.mxu0 0.0
        %1780 = vmatpush1.msra.mxu0 0.0
        %1781 = vmatprep.subr.mxu0 0.0
        %1782 = vmatpush1.msra.mxu0 0.0
        %1783 = vmatprep.subr.mxu0 0.0
        %1784 = vmatpush1.msra.mxu0 0.0
        %1785 = vmatprep.subr.mxu0 0.0
        %1786 = vmatpush1.msra.mxu0 0.0
        %1787 = vmatprep.subr.mxu0 0.0
        %1788 = vmatpush1.msra.mxu0 0.0
        %1789 = vmatprep.subr.mxu0 0.0
        %1790 = vmatpush1.msra.mxu0 0.0
        %1791 = vmatprep.subr.mxu0 0.0
        %1792 = vmatpush1.msra.mxu0 0.0
        %1793 = vmatprep.subr.mxu0 0.0
        %1794 = vmatpush1.msra.mxu0 0.0
        %1795 = vmatprep.subr.mxu0 0.0
        %1796 = vmatpush1.msra.mxu0 0.0
        %1797 = vmatprep.subr.mxu0 0.0
        %1798 = vmatpush1.msra.mxu0 0.0
        %1799 = vmatprep.subr.mxu0 0.0
        %1800 = vmatpush1.msra.mxu0 0.0
        %1801 = vmatprep.subr.mxu0 0.0
        %1802 = vmatpush1.msra.mxu0 0.0
        %1803 = vmatprep.subr.mxu0 0.0
        %1804 = vmatpush1.msra.mxu0 0.0
        %1805 = vmatprep.subr.mxu0 0.0
        %1806 = vmatpush1.msra.mxu0 0.0
        %1807 = vmatprep.subr.mxu0 0.0
        %1808 = vmatpush1.msra.mxu0 0.0
        %1809 = vmatprep.subr.mxu0 0.0
        %1810 = vmatpush1.msra.mxu0 0.0
        %1811 = vmatprep.subr.mxu0 0.0
        %1812 = vmatpush1.msra.mxu0 0.0
        %1813 = vmatprep.subr.mxu0 0.0
        %1814 = vmatpush1.msra.mxu0 0.0
        %1815 = vmatprep.subr.mxu0 0.0
        %1816 = vmatpush1.msra.mxu0 0.0
        %1817 = vmatprep.subr.mxu0 0.0
        %1818 = vmatpush1.msra.mxu0 0.0
        %1819 = vmatprep.subr.mxu0 0.0
        %1820 = vmatpush1.msra.mxu0 0.0
        %1821 = vmatprep.subr.mxu0 0.0
        %1822 = vmatpush1.msra.mxu0 0.0
        %1823 = vmatprep.subr.mxu0 0.0
        %1824 = vmatpush1.msra.mxu0 0.0
        %1825 = vmatprep.subr.mxu0 0.0
        %1826 = vmatpush1.msra.mxu0 0.0
        %1827 = vmatprep.subr.mxu0 0.0
        %1828 = vmatpush1.msra.mxu0 0.0
        %1829 = vmatprep.subr.mxu0 0.0
        %1830 = vmatpush1.msra.mxu0 0.0
        %1831 = vmatprep.mubr.f32.mxu0 0.0
        %1832 = vmatmul.mubr.f32.gmra.mrb[0].mxu0 %v1765
        %v1833 = vpop.f32.mrb[0].mxu0
        %v1834 = vadd.f32 0.0, %v1833
        %v1835 = vpop.f32.mrb[0].mxu0
        %v1836 = vadd.f32 0.0, %v1835
        %1837 = vdwg.mxu0
        %1838 = vmatprep.subr.mxu0 %v1537
        %1839 = vmatpush1.msra.mxu0 %v1536
        %1840 = vmatprep.subr.mxu0 0.0
        %1841 = vmatpush1.msra.mxu0 0.0
        %1842 = vmatprep.subr.mxu0 0.0
        %1843 = vmatpush1.msra.mxu0 0.0
        %1844 = vmatprep.subr.mxu0 0.0
        %1845 = vmatpush1.msra.mxu0 0.0
        %1846 = vmatprep.subr.mxu0 0.0
        %1847 = vmatpush1.msra.mxu0 0.0
        %1848 = vmatprep.subr.mxu0 0.0
        %1849 = vmatpush1.msra.mxu0 0.0
        %1850 = vmatprep.subr.mxu0 0.0
        %1851 = vmatpush1.msra.mxu0 0.0
        %1852 = vmatprep.subr.mxu0 0.0
        %1853 = vmatpush1.msra.mxu0 0.0
        %1854 = vmatprep.subr.mxu0 0.0
        %1855 = vmatpush1.msra.mxu0 0.0
        %1856 = vmatprep.subr.mxu0 0.0
        %1857 = vmatpush1.msra.mxu0 0.0
        %1858 = vmatprep.subr.mxu0 0.0
        %1859 = vmatpush1.msra.mxu0 0.0
        %1860 = vmatprep.subr.mxu0 0.0
        %1861 = vmatpush1.msra.mxu0 0.0
        %1862 = vmatprep.subr.mxu0 0.0
        %1863 = vmatpush1.msra.mxu0 0.0
        %1864 = vmatprep.subr.mxu0 0.0
        %1865 = vmatpush1.msra.mxu0 0.0
        %1866 = vmatprep.subr.mxu0 0.0
        %1867 = vmatpush1.msra.mxu0 0.0
        %1868 = vmatprep.subr.mxu0 0.0
        %1869 = vmatpush1.msra.mxu0 0.0
        %1870 = vmatprep.subr.mxu0 0.0
        %1871 = vmatpush1.msra.mxu0 0.0
        %1872 = vmatprep.subr.mxu0 0.0
        %1873 = vmatpush1.msra.mxu0 0.0
        %1874 = vmatprep.subr.mxu0 0.0
        %1875 = vmatpush1.msra.mxu0 0.0
        %1876 = vmatprep.subr.mxu0 0.0
        %1877 = vmatpush1.msra.mxu0 0.0
        %1878 = vmatprep.subr.mxu0 0.0
        %1879 = vmatpush1.msra.mxu0 0.0
        %1880 = vmatprep.subr.mxu0 0.0
        %1881 = vmatpush1.msra.mxu0 0.0
        %1882 = vmatprep.subr.mxu0 0.0
        %1883 = vmatpush1.msra.mxu0 0.0
        %1884 = vmatprep.subr.mxu0 0.0
        %1885 = vmatpush1.msra.mxu0 0.0
        %1886 = vmatprep.subr.mxu0 0.0
        %1887 = vmatpush1.msra.mxu0 0.0
        %1888 = vmatprep.subr.mxu0 0.0
        %1889 = vmatpush1.msra.mxu0 0.0
        %1890 = vmatprep.subr.mxu0 0.0
        %1891 = vmatpush1.msra.mxu0 0.0
        %1892 = vmatprep.subr.mxu0 0.0
        %1893 = vmatpush1.msra.mxu0 0.0
        %1894 = vmatprep.subr.mxu0 0.0
        %1895 = vmatpush1.msra.mxu0 0.0
        %1896 = vmatprep.subr.mxu0 0.0
        %1897 = vmatpush1.msra.mxu0 0.0
        %1898 = vmatprep.subr.mxu0 0.0
        %1899 = vmatpush1.msra.mxu0 0.0
        %1900 = vmatprep.subr.mxu0 0.0
        %1901 = vmatpush1.msra.mxu0 0.0
        %1902 = vmatprep.mubr.f32.mxu0 0.0
        %1903 = vmatmul.mubr.f32.gmra.mrb[0].mxu0 %v1765
        %v1904 = vpop.f32.mrb[0].mxu0
        %v1905 = vadd.f32 0.0, %v1904
        %v1906 = vpop.f32.mrb[0].mxu0
        %v1907 = vadd.f32 0.0, %v1906
        %1908 = vdwg.mxu0
        %1909 = vmatprep.subr.mxu0 %v1539
        %1910 = vmatpush1.msra.mxu0 %v1538
        %1911 = vmatprep.subr.mxu0 0.0
        %1912 = vmatpush1.msra.mxu0 0.0
        %1913 = vmatprep.subr.mxu0 0.0
        %1914 = vmatpush1.msra.mxu0 0.0
        %1915 = vmatprep.subr.mxu0 0.0
        %1916 = vmatpush1.msra.mxu0 0.0
        %1917 = vmatprep.subr.mxu0 0.0
        %1918 = vmatpush1.msra.mxu0 0.0
        %1919 = vmatprep.subr.mxu0 0.0
        %1920 = vmatpush1.msra.mxu0 0.0
        %1921 = vmatprep.subr.mxu0 0.0
        %1922 = vmatpush1.msra.mxu0 0.0
        %1923 = vmatprep.subr.mxu0 0.0
        %1924 = vmatpush1.msra.mxu0 0.0
        %1925 = vmatprep.subr.mxu0 0.0
        %1926 = vmatpush1.msra.mxu0 0.0
        %1927 = vmatprep.subr.mxu0 0.0
        %1928 = vmatpush1.msra.mxu0 0.0
        %1929 = vmatprep.subr.mxu0 0.0
        %1930 = vmatpush1.msra.mxu0 0.0
        %1931 = vmatprep.subr.mxu0 0.0
        %1932 = vmatpush1.msra.mxu0 0.0
        %1933 = vmatprep.subr.mxu0 0.0
        %1934 = vmatpush1.msra.mxu0 0.0
        %1935 = vmatprep.subr.mxu0 0.0
        %1936 = vmatpush1.msra.mxu0 0.0
        %1937 = vmatprep.subr.mxu0 0.0
        %1938 = vmatpush1.msra.mxu0 0.0
        %1939 = vmatprep.subr.mxu0 0.0
        %1940 = vmatpush1.msra.mxu0 0.0
        %1941 = vmatprep.subr.mxu0 0.0
        %1942 = vmatpush1.msra.mxu0 0.0
        %1943 = vmatprep.subr.mxu0 0.0
        %1944 = vmatpush1.msra.mxu0 0.0
        %1945 = vmatprep.subr.mxu0 0.0
        %1946 = vmatpush1.msra.mxu0 0.0
        %1947 = vmatprep.subr.mxu0 0.0
        %1948 = vmatpush1.msra.mxu0 0.0
        %1949 = vmatprep.subr.mxu0 0.0
        %1950 = vmatpush1.msra.mxu0 0.0
        %1951 = vmatprep.subr.mxu0 0.0
        %1952 = vmatpush1.msra.mxu0 0.0
        %1953 = vmatprep.subr.mxu0 0.0
        %1954 = vmatpush1.msra.mxu0 0.0
        %1955 = vmatprep.subr.mxu0 0.0
        %1956 = vmatpush1.msra.mxu0 0.0
        %1957 = vmatprep.subr.mxu0 0.0
        %1958 = vmatpush1.msra.mxu0 0.0
        %1959 = vmatprep.subr.mxu0 0.0
        %1960 = vmatpush1.msra.mxu0 0.0
        %1961 = vmatprep.subr.mxu0 0.0
        %1962 = vmatpush1.msra.mxu0 0.0
        %1963 = vmatprep.subr.mxu0 0.0
        %1964 = vmatpush1.msra.mxu0 0.0
        %1965 = vmatprep.subr.mxu0 0.0
        %1966 = vmatpush1.msra.mxu0 0.0
        %1967 = vmatprep.subr.mxu0 0.0
        %1968 = vmatpush1.msra.mxu0 0.0
        %1969 = vmatprep.subr.mxu0 0.0
        %1970 = vmatpush1.msra.mxu0 0.0
        %1971 = vmatprep.subr.mxu0 0.0
        %1972 = vmatpush1.msra.mxu0 0.0
        %1973 = vmatprep.mubr.f32.mxu0 0.0
        %1974 = vmatmul.mubr.f32.gmra.mrb[0].mxu0 %v1765
        %v1975 = vpop.f32.mrb[0].mxu0
        %v1976 = vadd.f32 0.0, %v1975
        %v1977 = vpop.f32.mrb[0].mxu0
        %v1978 = vadd.f32 0.0, %v1977
        %1979 = vdwg.mxu0
        %1980 = vmatprep.subr.mxu0 %v1535
        %1981 = vmatpush1.xpose.msra.mxu0 %v1534
        %1982 = vmatprep.subr.mxu0 0.0
        %1983 = vmatpush1.xpose.msra.mxu0 0.0
        %1984 = vmatprep.subr.mxu0 0.0
        %1985 = vmatpush1.xpose.msra.mxu0 0.0
        %1986 = vmatprep.subr.mxu0 0.0
        %1987 = vmatpush1.xpose.msra.mxu0 0.0
        %1988 = vmatprep.subr.mxu0 0.0
        %1989 = vmatpush1.xpose.msra.mxu0 0.0
        %1990 = vmatprep.subr.mxu0 0.0
        %1991 = vmatpush1.xpose.msra.mxu0 0.0
        %1992 = vmatprep.subr.mxu0 0.0
        %1993 = vmatpush1.xpose.msra.mxu0 0.0
        %1994 = vmatprep.subr.mxu0 0.0
        %1995 = vmatpush1.xpose.msra.mxu0 0.0
        %1996 = vmatprep.subr.mxu0 0.0
        %1997 = vmatpush1.xpose.msra.mxu0 0.0
        %1998 = vmatprep.subr.mxu0 0.0
        %1999 = vmatpush1.xpose.msra.mxu0 0.0
        %2000 = vmatprep.subr.mxu0 0.0
        %2001 = vmatpush1.xpose.msra.mxu0 0.0
        %2002 = vmatprep.subr.mxu0 0.0
        %2003 = vmatpush1.xpose.msra.mxu0 0.0
        %2004 = vmatprep.subr.mxu0 0.0
        %2005 = vmatpush1.xpose.msra.mxu0 0.0
        %2006 = vmatprep.subr.mxu0 0.0
        %2007 = vmatpush1.xpose.msra.mxu0 0.0
        %2008 = vmatprep.subr.mxu0 0.0
        %2009 = vmatpush1.xpose.msra.mxu0 0.0
        %2010 = vmatprep.subr.mxu0 0.0
        %2011 = vmatpush1.xpose.msra.mxu0 0.0
        %2012 = vmatprep.subr.mxu0 0.0
        %2013 = vmatpush1.xpose.msra.mxu0 0.0
        %2014 = vmatprep.subr.mxu0 0.0
        %2015 = vmatpush1.xpose.msra.mxu0 0.0
        %2016 = vmatprep.subr.mxu0 0.0
        %2017 = vmatpush1.xpose.msra.mxu0 0.0
        %2018 = vmatprep.subr.mxu0 0.0
        %2019 = vmatpush1.xpose.msra.mxu0 0.0
        %2020 = vmatprep.subr.mxu0 0.0
        %2021 = vmatpush1.xpose.msra.mxu0 0.0
        %2022 = vmatprep.subr.mxu0 0.0
        %2023 = vmatpush1.xpose.msra.mxu0 0.0
        %2024 = vmatprep.subr.mxu0 0.0
        %2025 = vmatpush1.xpose.msra.mxu0 0.0
        %2026 = vmatprep.subr.mxu0 0.0
        %2027 = vmatpush1.xpose.msra.mxu0 0.0
        %2028 = vmatprep.subr.mxu0 0.0
        %2029 = vmatpush1.xpose.msra.mxu0 0.0
        %2030 = vmatprep.subr.mxu0 0.0
        %2031 = vmatpush1.xpose.msra.mxu0 0.0
        %2032 = vmatprep.subr.mxu0 0.0
        %2033 = vmatpush1.xpose.msra.mxu0 0.0
        %2034 = vmatprep.subr.mxu0 0.0
        %2035 = vmatpush1.xpose.msra.mxu0 0.0
        %2036 = vmatprep.subr.mxu0 0.0
        %2037 = vmatpush1.xpose.msra.mxu0 0.0
        %2038 = vmatprep.subr.mxu0 0.0
        %2039 = vmatpush1.xpose.msra.mxu0 0.0
        %2040 = vmatprep.subr.mxu0 0.0
        %2041 = vmatpush1.xpose.msra.mxu0 0.0
        %2042 = vmatprep.subr.mxu0 0.0
        %2043 = vmatpush1.xpose.msra.mxu0 0.0
        %2044 = vmatprep.mubr.f32.mxu0 %v1390
        %2045 = vmatmul.mubr.f32.gmra.mrb[0].mxu0 %v1388
        %v2046 = vpop.f32.mrb[0].mxu0
        %v2047 = vadd.f32 0.0, %v2046
        %v2048 = vpop.f32.mrb[0].mxu0
        %2049 = vdwg.mxu0
        %2050 = vmatprep.subr.mxu0 %v1537
        %2051 = vmatpush1.xpose.msra.mxu0 %v1536
        %2052 = vmatprep.subr.mxu0 0.0
        %2053 = vmatpush1.xpose.msra.mxu0 0.0
        %2054 = vmatprep.subr.mxu0 0.0
        %2055 = vmatpush1.xpose.msra.mxu0 0.0
        %2056 = vmatprep.subr.mxu0 0.0
        %2057 = vmatpush1.xpose.msra.mxu0 0.0
        %2058 = vmatprep.subr.mxu0 0.0
        %2059 = vmatpush1.xpose.msra.mxu0 0.0
        %2060 = vmatprep.subr.mxu0 0.0
        %2061 = vmatpush1.xpose.msra.mxu0 0.0
        %2062 = vmatprep.subr.mxu0 0.0
        %2063 = vmatpush1.xpose.msra.mxu0 0.0
        %2064 = vmatprep.subr.mxu0 0.0
        %2065 = vmatpush1.xpose.msra.mxu0 0.0
        %2066 = vmatprep.subr.mxu0 0.0
        %2067 = vmatpush1.xpose.msra.mxu0 0.0
        %2068 = vmatprep.subr.mxu0 0.0
        %2069 = vmatpush1.xpose.msra.mxu0 0.0
        %2070 = vmatprep.subr.mxu0 0.0
        %2071 = vmatpush1.xpose.msra.mxu0 0.0
        %2072 = vmatprep.subr.mxu0 0.0
        %2073 = vmatpush1.xpose.msra.mxu0 0.0
        %2074 = vmatprep.subr.mxu0 0.0
        %2075 = vmatpush1.xpose.msra.mxu0 0.0
        %2076 = vmatprep.subr.mxu0 0.0
        %2077 = vmatpush1.xpose.msra.mxu0 0.0
        %2078 = vmatprep.subr.mxu0 0.0
        %2079 = vmatpush1.xpose.msra.mxu0 0.0
        %2080 = vmatprep.subr.mxu0 0.0
        %2081 = vmatpush1.xpose.msra.mxu0 0.0
        %2082 = vmatprep.subr.mxu0 0.0
        %2083 = vmatpush1.xpose.msra.mxu0 0.0
        %2084 = vmatprep.subr.mxu0 0.0
        %2085 = vmatpush1.xpose.msra.mxu0 0.0
        %2086 = vmatprep.subr.mxu0 0.0
        %2087 = vmatpush1.xpose.msra.mxu0 0.0
        %2088 = vmatprep.subr.mxu0 0.0
        %2089 = vmatpush1.xpose.msra.mxu0 0.0
        %2090 = vmatprep.subr.mxu0 0.0
        %2091 = vmatpush1.xpose.msra.mxu0 0.0
        %2092 = vmatprep.subr.mxu0 0.0
        %2093 = vmatpush1.xpose.msra.mxu0 0.0
        %2094 = vmatprep.subr.mxu0 0.0
        %2095 = vmatpush1.xpose.msra.mxu0 0.0
        %2096 = vmatprep.subr.mxu0 0.0
        %2097 = vmatpush1.xpose.msra.mxu0 0.0
        %2098 = vmatprep.subr.mxu0 0.0
        %2099 = vmatpush1.xpose.msra.mxu0 0.0
        %2100 = vmatprep.subr.mxu0 0.0
        %2101 = vmatpush1.xpose.msra.mxu0 0.0
        %2102 = vmatprep.subr.mxu0 0.0
        %2103 = vmatpush1.xpose.msra.mxu0 0.0
        %2104 = vmatprep.subr.mxu0 0.0
        %2105 = vmatpush1.xpose.msra.mxu0 0.0
        %2106 = vmatprep.subr.mxu0 0.0
        %2107 = vmatpush1.xpose.msra.mxu0 0.0
        %2108 = vmatprep.subr.mxu0 0.0
        %2109 = vmatpush1.xpose.msra.mxu0 0.0
        %2110 = vmatprep.subr.mxu0 0.0
        %2111 = vmatpush1.xpose.msra.mxu0 0.0
        %2112 = vmatprep.subr.mxu0 0.0
        %2113 = vmatpush1.xpose.msra.mxu0 0.0
        %2114 = vmatprep.mubr.f32.mxu0 %v1461
        %2115 = vmatmul.mubr.f32.gmra.mrb[0].mxu0 %v1459
        %v2116 = vpop.f32.mrb[0].mxu0
        %v2117 = vadd.f32 %v2047, %v2116
        %v2118 = vpop.f32.mrb[0].mxu0
        %2119 = vdwg.mxu0
        %2120 = vmatprep.subr.mxu0 %v1539
        %2121 = vmatpush1.xpose.msra.mxu0 %v1538
        %2122 = vmatprep.subr.mxu0 0.0
        %2123 = vmatpush1.xpose.msra.mxu0 0.0
        %2124 = vmatprep.subr.mxu0 0.0
        %2125 = vmatpush1.xpose.msra.mxu0 0.0
        %2126 = vmatprep.subr.mxu0 0.0
        %2127 = vmatpush1.xpose.msra.mxu0 0.0
        %2128 = vmatprep.subr.mxu0 0.0
        %2129 = vmatpush1.xpose.msra.mxu0 0.0
        %2130 = vmatprep.subr.mxu0 0.0
        %2131 = vmatpush1.xpose.msra.mxu0 0.0
        %2132 = vmatprep.subr.mxu0 0.0
        %2133 = vmatpush1.xpose.msra.mxu0 0.0
        %2134 = vmatprep.subr.mxu0 0.0
        %2135 = vmatpush1.xpose.msra.mxu0 0.0
        %2136 = vmatprep.subr.mxu0 0.0
        %2137 = vmatpush1.xpose.msra.mxu0 0.0
        %2138 = vmatprep.subr.mxu0 0.0
        %2139 = vmatpush1.xpose.msra.mxu0 0.0
        %2140 = vmatprep.subr.mxu0 0.0
        %2141 = vmatpush1.xpose.msra.mxu0 0.0
        %2142 = vmatprep.subr.mxu0 0.0
        %2143 = vmatpush1.xpose.msra.mxu0 0.0
        %2144 = vmatprep.subr.mxu0 0.0
        %2145 = vmatpush1.xpose.msra.mxu0 0.0
        %2146 = vmatprep.subr.mxu0 0.0
        %2147 = vmatpush1.xpose.msra.mxu0 0.0
        %2148 = vmatprep.subr.mxu0 0.0
        %2149 = vmatpush1.xpose.msra.mxu0 0.0
        %2150 = vmatprep.subr.mxu0 0.0
        %2151 = vmatpush1.xpose.msra.mxu0 0.0
        %2152 = vmatprep.subr.mxu0 0.0
        %2153 = vmatpush1.xpose.msra.mxu0 0.0
        %2154 = vmatprep.subr.mxu0 0.0
        %2155 = vmatpush1.xpose.msra.mxu0 0.0
        %2156 = vmatprep.subr.mxu0 0.0
        %2157 = vmatpush1.xpose.msra.mxu0 0.0
        %2158 = vmatprep.subr.mxu0 0.0
        %2159 = vmatpush1.xpose.msra.mxu0 0.0
        %2160 = vmatprep.subr.mxu0 0.0
        %2161 = vmatpush1.xpose.msra.mxu0 0.0
        %2162 = vmatprep.subr.mxu0 0.0
        %2163 = vmatpush1.xpose.msra.mxu0 0.0
        %2164 = vmatprep.subr.mxu0 0.0
        %2165 = vmatpush1.xpose.msra.mxu0 0.0
        %2166 = vmatprep.subr.mxu0 0.0
        %2167 = vmatpush1.xpose.msra.mxu0 0.0
        %2168 = vmatprep.subr.mxu0 0.0
        %2169 = vmatpush1.xpose.msra.mxu0 0.0
        %2170 = vmatprep.subr.mxu0 0.0
        %2171 = vmatpush1.xpose.msra.mxu0 0.0
        %2172 = vmatprep.subr.mxu0 0.0
        %2173 = vmatpush1.xpose.msra.mxu0 0.0
        %2174 = vmatprep.subr.mxu0 0.0
        %2175 = vmatpush1.xpose.msra.mxu0 0.0
        %2176 = vmatprep.subr.mxu0 0.0
        %2177 = vmatpush1.xpose.msra.mxu0 0.0
        %2178 = vmatprep.subr.mxu0 0.0
        %2179 = vmatpush1.xpose.msra.mxu0 0.0
        %2180 = vmatprep.subr.mxu0 0.0
        %2181 = vmatpush1.xpose.msra.mxu0 0.0
        %2182 = vmatprep.subr.mxu0 0.0
        %2183 = vmatpush1.xpose.msra.mxu0 0.0
        %2184 = vmatprep.mubr.f32.mxu0 %v1532
        %2185 = vmatmul.mubr.f32.gmra.mrb[0].mxu0 %v1530
        %v2186 = vpop.f32.mrb[0].mxu0
        %v2187 = vadd.f32 %v2117, %v2186
        %v2188 = vpop.f32.mrb[0].mxu0
        %2189 = vdwg.mxu0
        %v2190 = vmul.f32 %v2187, 0.03608439
        %v2191 = vsel %vm1751, %v2190, -inf
        %2192 = vmax.xlane.f32.xlu0 %v2191
        %v2193 = vpop.xlane.xlu0 %2192
        %v2194 = vsub.f32 %v2190, %v2193
        %v2195 = vmul.f32 %v2194, 1.442695
        %v2196 = vpow.pop %v2195
        %v2197 = vsel %vm1751, %v2196, 0.0
        %2198 = vadd.xlane.f32.xlu0 %v2197
        %v2199 = vpop.xlane.xlu0 %2198
        %v2200 = vrcp.pop %v2199
        %v2201 = vmul.f32 %v2196, %v2200
        %v2203 = vsel %vm1763, %v2201, 0
        %2205 = vmatprep.subr.mxu0 %v1535
        %2206 = vmatpush1.msra.mxu0 %v1534
        %2207 = vmatprep.subr.mxu0 0.0
        %2208 = vmatpush1.msra.mxu0 0.0
        %2209 = vmatprep.subr.mxu0 0.0
        %2210 = vmatpush1.msra.mxu0 0.0
        %2211 = vmatprep.subr.mxu0 0.0
        %2212 = vmatpush1.msra.mxu0 0.0
        %2213 = vmatprep.subr.mxu0 0.0
        %2214 = vmatpush1.msra.mxu0 0.0
        %2215 = vmatprep.subr.mxu0 0.0
        %2216 = vmatpush1.msra.mxu0 0.0
        %2217 = vmatprep.subr.mxu0 0.0
        %2218 = vmatpush1.msra.mxu0 0.0
        %2219 = vmatprep.subr.mxu0 0.0
        %2220 = vmatpush1.msra.mxu0 0.0
        %2221 = vmatprep.subr.mxu0 0.0
        %2222 = vmatpush1.msra.mxu0 0.0
        %2223 = vmatprep.subr.mxu0 0.0
        %2224 = vmatpush1.msra.mxu0 0.0
        %2225 = vmatprep.subr.mxu0 0.0
        %2226 = vmatpush1.msra.mxu0 0.0
        %2227 = vmatprep.subr.mxu0 0.0
        %2228 = vmatpush1.msra.mxu0 0.0
        %2229 = vmatprep.subr.mxu0 0.0
        %2230 = vmatpush1.msra.mxu0 0.0
        %2231 = vmatprep.subr.mxu0 0.0
        %2232 = vmatpush1.msra.mxu0 0.0
        %2233 = vmatprep.subr.mxu0 0.0
        %2234 = vmatpush1.msra.mxu0 0.0
        %2235 = vmatprep.subr.mxu0 0.0
        %2236 = vmatpush1.msra.mxu0 0.0
        %2237 = vmatprep.subr.mxu0 0.0
        %2238 = vmatpush1.msra.mxu0 0.0
        %2239 = vmatprep.subr.mxu0 0.0
        %2240 = vmatpush1.msra.mxu0 0.0
        %2241 = vmatprep.subr.mxu0 0.0
        %2242 = vmatpush1.msra.mxu0 0.0
        %2243 = vmatprep.subr.mxu0 0.0
        %2244 = vmatpush1.msra.mxu0 0.0
        %2245 = vmatprep.subr.mxu0 0.0
        %2246 = vmatpush1.msra.mxu0 0.0
        %2247 = vmatprep.subr.mxu0 0.0
        %2248 = vmatpush1.msra.mxu0 0.0
        %2249 = vmatprep.subr.mxu0 0.0
        %2250 = vmatpush1.msra.mxu0 0.0
        %2251 = vmatprep.subr.mxu0 0.0
        %2252 = vmatpush1.msra.mxu0 0.0
        %2253 = vmatprep.subr.mxu0 0.0
        %2254 = vmatpush1.msra.mxu0 0.0
        %2255 = vmatprep.subr.mxu0 0.0
        %2256 = vmatpush1.msra.mxu0 0.0
        %2257 = vmatprep.subr.mxu0 0.0
        %2258 = vmatpush1.msra.mxu0 0.0
        %2259 = vmatprep.subr.mxu0 0.0
        %2260 = vmatpush1.msra.mxu0 0.0
        %2261 = vmatprep.subr.mxu0 0.0
        %2262 = vmatpush1.msra.mxu0 0.0
        %2263 = vmatprep.subr.mxu0 0.0
        %2264 = vmatpush1.msra.mxu0 0.0
        %2265 = vmatprep.subr.mxu0 0.0
        %2266 = vmatpush1.msra.mxu0 0.0
        %2267 = vmatprep.subr.mxu0 0.0
        %2268 = vmatpush1.msra.mxu0 0.0
        %2269 = vmatprep.mubr.f32.mxu0 0.0
        %2270 = vmatmul.mubr.f32.gmra.mrb[0].mxu0 %v2203
        %v2271 = vpop.f32.mrb[0].mxu0
        %v2272 = vadd.f32 0.0, %v2271
        %v2273 = vpop.f32.mrb[0].mxu0
        %v2274 = vadd.f32 0.0, %v2273
        %2275 = vdwg.mxu0
        %2276 = vmatprep.subr.mxu0 %v1537
        %2277 = vmatpush1.msra.mxu0 %v1536
        %2278 = vmatprep.subr.mxu0 0.0
        %2279 = vmatpush1.msra.mxu0 0.0
        %2280 = vmatprep.subr.mxu0 0.0
        %2281 = vmatpush1.msra.mxu0 0.0
        %2282 = vmatprep.subr.mxu0 0.0
        %2283 = vmatpush1.msra.mxu0 0.0
        %2284 = vmatprep.subr.mxu0 0.0
        %2285 = vmatpush1.msra.mxu0 0.0
        %2286 = vmatprep.subr.mxu0 0.0
        %2287 = vmatpush1.msra.mxu0 0.0
        %2288 = vmatprep.subr.mxu0 0.0
        %2289 = vmatpush1.msra.mxu0 0.0
        %2290 = vmatprep.subr.mxu0 0.0
        %2291 = vmatpush1.msra.mxu0 0.0
        %2292 = vmatprep.subr.mxu0 0.0
        %2293 = vmatpush1.msra.mxu0 0.0
        %2294 = vmatprep.subr.mxu0 0.0
        %2295 = vmatpush1.msra.mxu0 0.0
        %2296 = vmatprep.subr.mxu0 0.0
        %2297 = vmatpush1.msra.mxu0 0.0
        %2298 = vmatprep.subr.mxu0 0.0
        %2299 = vmatpush1.msra.mxu0 0.0
        %2300 = vmatprep.subr.mxu0 0.0
        %2301 = vmatpush1.msra.mxu0 0.0
        %2302 = vmatprep.subr.mxu0 0.0
        %2303 = vmatpush1.msra.mxu0 0.0
        %2304 = vmatprep.subr.mxu0 0.0
        %2305 = vmatpush1.msra.mxu0 0.0
        %2306 = vmatprep.subr.mxu0 0.0
        %2307 = vmatpush1.msra.mxu0 0.0
        %2308 = vmatprep.subr.mxu0 0.0
        %2309 = vmatpush1.msra.mxu0 0.0
        %2310 = vmatprep.subr.mxu0 0.0
        %2311 = vmatpush1.msra.mxu0 0.0
        %2312 = vmatprep.subr.mxu0 0.0
        %2313 = vmatpush1.msra.mxu0 0.0
        %2314 = vmatprep.subr.mxu0 0.0
        %2315 = vmatpush1.msra.mxu0 0.0
        %2316 = vmatprep.subr.mxu0 0.0
        %2317 = vmatpush1.msra.mxu0 0.0
        %2318 = vmatprep.subr.mxu0 0.0
        %2319 = vmatpush1.msra.mxu0 0.0
        %2320 = vmatprep.subr.mxu0 0.0
        %2321 = vmatpush1.msra.mxu0 0.0
        %2322 = vmatprep.subr.mxu0 0.0
        %2323 = vmatpush1.msra.mxu0 0.0
        %2324 = vmatprep.subr.mxu0 0.0
        %2325 = vmatpush1.msra.mxu0 0.0
        %2326 = vmatprep.subr.mxu0 0.0
        %2327 = vmatpush1.msra.mxu0 0.0
        %2328 = vmatprep.subr.mxu0 0.0
        %2329 = vmatpush1.msra.mxu0 0.0
        %2330 = vmatprep.subr.mxu0 0.0
        %2331 = vmatpush1.msra.mxu0 0.0
        %2332 = vmatprep.subr.mxu0 0.0
        %2333 = vmatpush1.msra.mxu0 0.0
        %2334 = vmatprep.subr.mxu0 0.0
        %2335 = vmatpush1.msra.mxu0 0.0
        %2336 = vmatprep.subr.mxu0 0.0
        %2337 = vmatpush1.msra.mxu0 0.0
        %2338 = vmatprep.subr.mxu0 0.0
        %2339 = vmatpush1.msra.mxu0 0.0
        %2340 = vmatprep.mubr.f32.mxu0 0.0
        %2341 = vmatmul.mubr.f32.gmra.mrb[0].mxu0 %v2203
        %v2342 = vpop.f32.mrb[0].mxu0
        %v2343 = vadd.f32 0.0, %v2342
        %v2344 = vpop.f32.mrb[0].mxu0
        %v2345 = vadd.f32 0.0, %v2344
        %2346 = vdwg.mxu0
        %2347 = vmatprep.subr.mxu0 %v1539
        %2348 = vmatpush1.msra.mxu0 %v1538
        %2349 = vmatprep.subr.mxu0 0.0
        %2350 = vmatpush1.msra.mxu0 0.0
        %2351 = vmatprep.subr.mxu0 0.0
        %2352 = vmatpush1.msra.mxu0 0.0
        %2353 = vmatprep.subr.mxu0 0.0
        %2354 = vmatpush1.msra.mxu0 0.0
        %2355 = vmatprep.subr.mxu0 0.0
        %2356 = vmatpush1.msra.mxu0 0.0
        %2357 = vmatprep.subr.mxu0 0.0
        %2358 = vmatpush1.msra.mxu0 0.0
        %2359 = vmatprep.subr.mxu0 0.0
        %2360 = vmatpush1.msra.mxu0 0.0
        %2361 = vmatprep.subr.mxu0 0.0
        %2362 = vmatpush1.msra.mxu0 0.0
        %2363 = vmatprep.subr.mxu0 0.0
        %2364 = vmatpush1.msra.mxu0 0.0
        %2365 = vmatprep.subr.mxu0 0.0
        %2366 = vmatpush1.msra.mxu0 0.0
        %2367 = vmatprep.subr.mxu0 0.0
        %2368 = vmatpush1.msra.mxu0 0.0
        %2369 = vmatprep.subr.mxu0 0.0
        %2370 = vmatpush1.msra.mxu0 0.0
        %2371 = vmatprep.subr.mxu0 0.0
        %2372 = vmatpush1.msra.mxu0 0.0
        %2373 = vmatprep.subr.mxu0 0.0
        %2374 = vmatpush1.msra.mxu0 0.0
        %2375 = vmatprep.subr.mxu0 0.0
        %2376 = vmatpush1.msra.mxu0 0.0
        %2377 = vmatprep.subr.mxu0 0.0
        %2378 = vmatpush1.msra.mxu0 0.0
        %2379 = vmatprep.subr.mxu0 0.0
        %2380 = vmatpush1.msra.mxu0 0.0
        %2381 = vmatprep.subr.mxu0 0.0
        %2382 = vmatpush1.msra.mxu0 0.0
        %2383 = vmatprep.subr.mxu0 0.0
        %2384 = vmatpush1.msra.mxu0 0.0
        %2385 = vmatprep.subr.mxu0 0.0
        %2386 = vmatpush1.msra.mxu0 0.0
        %2387 = vmatprep.subr.mxu0 0.0
        %2388 = vmatpush1.msra.mxu0 0.0
        %2389 = vmatprep.subr.mxu0 0.0
        %2390 = vmatpush1.msra.mxu0 0.0
        %2391 = vmatprep.subr.mxu0 0.0
        %2392 = vmatpush1.msra.mxu0 0.0
        %2393 = vmatprep.subr.mxu0 0.0
        %2394 = vmatpush1.msra.mxu0 0.0
        %2395 = vmatprep.subr.mxu0 0.0
        %2396 = vmatpush1.msra.mxu0 0.0
        %2397 = vmatprep.subr.mxu0 0.0
        %2398 = vmatpush1.msra.mxu0 0.0
        %2399 = vmatprep.subr.mxu0 0.0
        %2400 = vmatpush1.msra.mxu0 0.0
        %2401 = vmatprep.subr.mxu0 0.0
        %2402 = vmatpush1.msra.mxu0 0.0
        %2403 = vmatprep.subr.mxu0 0.0
        %2404 = vmatpush1.msra.mxu0 0.0
        %2405 = vmatprep.subr.mxu0 0.0
        %2406 = vmatpush1.msra.mxu0 0.0
        %2407 = vmatprep.subr.mxu0 0.0
        %2408 = vmatpush1.msra.mxu0 0.0
        %2409 = vmatprep.subr.mxu0 0.0
        %2410 = vmatpush1.msra.mxu0 0.0
        %2411 = vmatprep.mubr.f32.mxu0 0.0
        %2412 = vmatmul.mubr.f32.gmra.mrb[0].mxu0 %v2203
        %v2413 = vpop.f32.mrb[0].mxu0
        %v2414 = vadd.f32 0.0, %v2413
        %v2415 = vpop.f32.mrb[0].mxu0
        %v2416 = vadd.f32 0.0, %v2415
        %2417 = vdwg.mxu0
        %v2418 = vlaneseq
        %v2419 = vshrl.u32 %v2418, 7
        %v2420 = vadd.s32 %v2419, 8
        %v2421 = vadd.s32 %v2419, 16
        %vm2422 = vcmp.ge.s32.totalorder %v2419, 1
        %vm2423 = vcmp.ge.s32.totalorder %v2420, 1
        %vm2424 = vcmp.ge.s32.totalorder %v2421, 1
        %vm2425 = vcmp.lt.s32.totalorder %v2419, 9
        %vm2426 = vcmp.lt.s32.totalorder %v2420, 9
        %vm2427 = vcmp.lt.s32.totalorder %v2421, 9
        %vm2428 = vmand %vm2422, %vm2425
        %vm2429 = vmand %vm2423, %vm2426
        %vm2430 = vmand %vm2424, %vm2427
        %v2431 = vsel %vm2428, 1, 0
        %v2432 = vsel %vm2429, 1, 0
        %v2433 = vsel %vm2430, 1, 0
        %v2434 = vcvt.s32.f32 %v2431
        %v2435 = vcvt.s32.f32 %v2432
        %v2436 = vcvt.s32.f32 %v2433
        %v2437 = vlaneseq
        %v2438 = vshrl.u32 %v2437, 7
        %v2439 = vsub.s32 0, %v2438
        %v2440 = vrot.slane %v1834, %v2439
        %v2441 = vlaneseq
        %v2442 = vshrl.u32 %v2441, 7
        %v2443 = vsub.s32 0, %v2442
        %v2444 = vrot.slane %v1836, %v2443
        %v2445 = vlaneseq
        %v2446 = vshrl.u32 %v2445, 7
        %v2447 = vsub.s32 0, %v2446
        %v2448 = vrot.slane %v1905, %v2447
        %v2449 = vlaneseq
        %v2450 = vshrl.u32 %v2449, 7
        %v2451 = vsub.s32 0, %v2450
        %v2452 = vrot.slane %v1907, %v2451
        %v2453 = vlaneseq
        %v2454 = vshrl.u32 %v2453, 7
        %v2455 = vsub.s32 0, %v2454
        %v2456 = vrot.slane %v1976, %v2455
        %v2457 = vlaneseq
        %v2458 = vshrl.u32 %v2457, 7
        %v2459 = vsub.s32 0, %v2458
        %v2460 = vrot.slane %v1978, %v2459
        %v2461 = vmul.f32 %v2434, %v2440
        %v2462 = vmul.f32 %v2434, %v2444
        %v2463 = vmul.f32 %v2434, %v2448
        %v2464 = vmul.f32 %v2434, %v2452
        %v2465 = vmul.f32 %v2434, %v2456
        %v2466 = vmul.f32 %v2434, %v2460
        %v2467 = vmul.f32 %v2435, %v2440
        %v2468 = vmul.f32 %v2435, %v2444
        %v2469 = vmul.f32 %v2435, %v2448
        %v2470 = vmul.f32 %v2435, %v2452
        %v2471 = vmul.f32 %v2435, %v2456
        %v2472 = vmul.f32 %v2435, %v2460
        %v2473 = vmul.f32 %v2436, %v2440
        %v2474 = vmul.f32 %v2436, %v2444
        %v2475 = vmul.f32 %v2436, %v2448
        %v2476 = vmul.f32 %v2436, %v2452
        %v2477 = vmul.f32 %v2436, %v2456
        %v2478 = vmul.f32 %v2436, %v2460
        %v2479 = vlaneseq
        %v2480 = vshrl.u32 %v2479, 7
        %v2481 = vsub.s32 0, %v2480
        %v2482 = vrot.slane %v2272, %v2481
        %v2483 = vlaneseq
        %v2484 = vshrl.u32 %v2483, 7
        %v2485 = vsub.s32 0, %v2484
        %v2486 = vrot.slane %v2274, %v2485
        %v2487 = vlaneseq
        %v2488 = vshrl.u32 %v2487, 7
        %v2489 = vsub.s32 0, %v2488
        %v2490 = vrot.slane %v2343, %v2489
        %v2491 = vlaneseq
        %v2492 = vshrl.u32 %v2491, 7
        %v2493 = vsub.s32 0, %v2492
        %v2494 = vrot.slane %v2345, %v2493
        %v2495 = vlaneseq
        %v2496 = vshrl.u32 %v2495, 7
        %v2497 = vsub.s32 0, %v2496
        %v2498 = vrot.slane %v2414, %v2497
        %v2499 = vlaneseq
        %v2500 = vshrl.u32 %v2499, 7
        %v2501 = vsub.s32 0, %v2500
        %v2502 = vrot.slane %v2416, %v2501
        %v2503 = vmul.f32 %v2434, %v2482
        %v2504 = vmul.f32 %v2434, %v2486
        %v2505 = vmul.f32 %v2434, %v2490
        %v2506 = vmul.f32 %v2434, %v2494
        %v2507 = vmul.f32 %v2434, %v2498
        %v2508 = vmul.f32 %v2434, %v2502
        %v2509 = vmul.f32 %v2435, %v2482
        %v2510 = vmul.f32 %v2435, %v2486
        %v2511 = vmul.f32 %v2435, %v2490
        %v2512 = vmul.f32 %v2435, %v2494
        %v2513 = vmul.f32 %v2435, %v2498
        %v2514 = vmul.f32 %v2435, %v2502
        %v2515 = vmul.f32 %v2436, %v2482
        %v2516 = vmul.f32 %v2436, %v2486
        %v2517 = vmul.f32 %v2436, %v2490
        %v2518 = vmul.f32 %v2436, %v2494
        %v2519 = vmul.f32 %v2436, %v2498
        %v2520 = vmul.f32 %v2436, %v2502
        %v2521 = vld [vmem:[#allocation11] sm:$0xff]
        %v2522 = vld [vmem:[#allocation11 + $0x8] sm:$0xff]
        %v2523 = vld [vmem:[#allocation11 + $0x10] sm:$0xff]
        %v2524 = vld [vmem:[#allocation11 + $0x18] sm:$0xff]
        %v2525 = vld [vmem:[#allocation11 + $0x20] sm:$0xff]
        %v2526 = vld [vmem:[#allocation11 + $0x28] sm:$0xff]
        %v2527 = vld [vmem:[#allocation11 + $0x30] sm:$0xff]
        %v2528 = vld [vmem:[#allocation11 + $0x38] sm:$0xff]
        %v2529 = vld [vmem:[#allocation11 + $0x40] sm:$0xff]
        %v2530 = vld [vmem:[#allocation11 + $0x48] sm:$0xff]
        %v2531 = vld [vmem:[#allocation11 + $0x50] sm:$0xff]
        %v2532 = vld [vmem:[#allocation11 + $0x58] sm:$0xff]
        %v2533 = vld [vmem:[#allocation11 + $0x60] sm:$0xff]
        %v2534 = vld [vmem:[#allocation11 + $0x68] sm:$0xff]
        %v2535 = vld [vmem:[#allocation11 + $0x70] sm:$0xff]
        %v2536 = vld [vmem:[#allocation11 + $0x78] sm:$0xff]
        %v2537 = vld [vmem:[#allocation11 + $0x80] sm:$0xff]
        %v2538 = vld [vmem:[#allocation11 + $0x88] sm:$0xff]
        %v2539 = vld [vmem:[#allocation11 + $0x90] sm:$0xff]
        %v2540 = vld [vmem:[#allocation11 + $0x98] sm:$0xff]
        %v2541 = vld [vmem:[#allocation11 + $0xa0] sm:$0xff]
        %v2542 = vld [vmem:[#allocation11 + $0xa8] sm:$0xff]
        %v2543 = vld [vmem:[#allocation11 + $0xb0] sm:$0xff]
        %v2544 = vld [vmem:[#allocation11 + $0xb8] sm:$0xff]
        %v2545 = vld [vmem:[#allocation11 + $0xc0] sm:$0xff]
        %v2546 = vld [vmem:[#allocation11 + $0xc8] sm:$0xff]
        %v2547 = vld [vmem:[#allocation11 + $0xd0] sm:$0xff]
        %v2548 = vld [vmem:[#allocation11 + $0xd8] sm:$0xff]
        %v2549 = vld [vmem:[#allocation11 + $0xe0] sm:$0xff]
        %v2550 = vld [vmem:[#allocation11 + $0xe8] sm:$0xff]
        %v2551 = vld [vmem:[#allocation11 + $0xf0] sm:$0xff]
        %v2552 = vld [vmem:[#allocation11 + $0xf8] sm:$0xff]
        %v2553 = vld [vmem:[#allocation11 + $0x100] sm:$0xff]
        %v2554 = vld [vmem:[#allocation11 + $0x108] sm:$0xff]
        %v2555 = vld [vmem:[#allocation11 + $0x110] sm:$0xff]
        %v2556 = vld [vmem:[#allocation11 + $0x118] sm:$0xff]
        %v2557 = vld [vmem:[#allocation11 + $0x120] sm:$0xff]
        %v2558 = vld [vmem:[#allocation11 + $0x128] sm:$0xff]
        %v2559 = vld [vmem:[#allocation11 + $0x130] sm:$0xff]
        %v2560 = vld [vmem:[#allocation11 + $0x138] sm:$0xff]
        %v2561 = vld [vmem:[#allocation11 + $0x140] sm:$0xff]
        %v2562 = vld [vmem:[#allocation11 + $0x148] sm:$0xff]
        %v2563 = vld [vmem:[#allocation11 + $0x150] sm:$0xff]
        %v2564 = vld [vmem:[#allocation11 + $0x158] sm:$0xff]
        %v2565 = vld [vmem:[#allocation11 + $0x160] sm:$0xff]
        %v2566 = vld [vmem:[#allocation11 + $0x168] sm:$0xff]
        %v2567 = vld [vmem:[#allocation11 + $0x170] sm:$0xff]
        %v2568 = vld [vmem:[#allocation11 + $0x178] sm:$0xff]
        %v2569 = vld [vmem:[#allocation11 + $0x180] sm:$0xff]
        %v2570 = vld [vmem:[#allocation11 + $0x188] sm:$0xff]
        %v2571 = vld [vmem:[#allocation11 + $0x190] sm:$0xff]
        %v2572 = vld [vmem:[#allocation11 + $0x198] sm:$0xff]
        %v2573 = vld [vmem:[#allocation11 + $0x1a0] sm:$0xff]
        %v2574 = vld [vmem:[#allocation11 + $0x1a8] sm:$0xff]
        %v2575 = vld [vmem:[#allocation11 + $0x1b0] sm:$0xff]
        %v2576 = vld [vmem:[#allocation11 + $0x1b8] sm:$0xff]
        %v2577 = vld [vmem:[#allocation11 + $0x1c0] sm:$0xff]
        %v2578 = vld [vmem:[#allocation11 + $0x1c8] sm:$0xff]
        %v2579 = vld [vmem:[#allocation11 + $0x1d0] sm:$0xff]
        %v2580 = vld [vmem:[#allocation11 + $0x1d8] sm:$0xff]
        %v2581 = vld [vmem:[#allocation11 + $0x1e0] sm:$0xff]
        %v2582 = vld [vmem:[#allocation11 + $0x1e8] sm:$0xff]
        %v2583 = vld [vmem:[#allocation11 + $0x1f0] sm:$0xff]
        %v2584 = vld [vmem:[#allocation11 + $0x1f8] sm:$0xff]
        %v2585 = vld [vmem:[#allocation11 + $0x200] sm:$0xff]
        %v2586 = vld [vmem:[#allocation11 + $0x208] sm:$0xff]
        %v2587 = vld [vmem:[#allocation11 + $0x210] sm:$0xff]
        %v2588 = vld [vmem:[#allocation11 + $0x218] sm:$0xff]
        %v2589 = vld [vmem:[#allocation11 + $0x220] sm:$0xff]
        %v2590 = vld [vmem:[#allocation11 + $0x228] sm:$0xff]
        %v2591 = vld [vmem:[#allocation11 + $0x230] sm:$0xff]
        %v2592 = vld [vmem:[#allocation11 + $0x238] sm:$0xff]
        %v2593 = vld [vmem:[#allocation11 + $0x240] sm:$0xff]
        %v2594 = vld [vmem:[#allocation11 + $0x248] sm:$0xff]
        %v2595 = vld [vmem:[#allocation11 + $0x250] sm:$0xff]
        %v2596 = vld [vmem:[#allocation11 + $0x258] sm:$0xff]
        %v2597 = vld [vmem:[#allocation11 + $0x260] sm:$0xff]
        %v2598 = vld [vmem:[#allocation11 + $0x268] sm:$0xff]
        %v2599 = vld [vmem:[#allocation11 + $0x270] sm:$0xff]
        %v2600 = vld [vmem:[#allocation11 + $0x278] sm:$0xff]
        %v2601 = vld [vmem:[#allocation11 + $0x280] sm:$0xff]
        %v2602 = vld [vmem:[#allocation11 + $0x288] sm:$0xff]
        %v2603 = vld [vmem:[#allocation11 + $0x290] sm:$0xff]
        %v2604 = vld [vmem:[#allocation11 + $0x298] sm:$0xff]
        %v2605 = vld [vmem:[#allocation11 + $0x2a0] sm:$0xff]
        %v2606 = vld [vmem:[#allocation11 + $0x2a8] sm:$0xff]
        %v2607 = vld [vmem:[#allocation11 + $0x2b0] sm:$0xff]
        %v2608 = vld [vmem:[#allocation11 + $0x2b8] sm:$0xff]
        %v2609 = vld [vmem:[#allocation11 + $0x2c0] sm:$0xff]
        %v2610 = vld [vmem:[#allocation11 + $0x2c8] sm:$0xff]
        %v2611 = vld [vmem:[#allocation11 + $0x2d0] sm:$0xff]
        %v2612 = vld [vmem:[#allocation11 + $0x2d8] sm:$0xff]
        %v2613 = vld [vmem:[#allocation11 + $0x2e0] sm:$0xff]
        %v2614 = vld [vmem:[#allocation11 + $0x2e8] sm:$0xff]
        %v2615 = vld [vmem:[#allocation11 + $0x2f0] sm:$0xff]
        %v2616 = vld [vmem:[#allocation11 + $0x2f8] sm:$0xff]
        %v2617 = vld [vmem:[#allocation11 + $0x300] sm:$0xff]
        %v2618 = vld [vmem:[#allocation11 + $0x308] sm:$0xff]
        %v2619 = vld [vmem:[#allocation11 + $0x310] sm:$0xff]
        %v2620 = vld [vmem:[#allocation11 + $0x318] sm:$0xff]
        %v2621 = vld [vmem:[#allocation11 + $0x320] sm:$0xff]
        %v2622 = vld [vmem:[#allocation11 + $0x328] sm:$0xff]
        %v2623 = vld [vmem:[#allocation11 + $0x330] sm:$0xff]
        %v2624 = vld [vmem:[#allocation11 + $0x338] sm:$0xff]
        %v2625 = vld [vmem:[#allocation11 + $0x340] sm:$0xff]
        %v2626 = vld [vmem:[#allocation11 + $0x348] sm:$0xff]
        %v2627 = vld [vmem:[#allocation11 + $0x350] sm:$0xff]
        %v2628 = vld [vmem:[#allocation11 + $0x358] sm:$0xff]
        %v2629 = vadd.f32 %v2521, %v2461
        %v2630 = vadd.f32 %v2522, %v2462
        %v2631 = vadd.f32 %v2523, %v2463
        %v2632 = vadd.f32 %v2524, %v2464
        %v2633 = vadd.f32 %v2525, %v2465
        %v2634 = vadd.f32 %v2526, %v2466
        %v2635 = vadd.f32 %v2527, %v2467
        %v2636 = vadd.f32 %v2528, %v2468
        %v2637 = vadd.f32 %v2529, %v2469
        %v2638 = vadd.f32 %v2530, %v2470
        %v2639 = vadd.f32 %v2531, %v2471
        %v2640 = vadd.f32 %v2532, %v2472
        %v2641 = vadd.f32 %v2533, %v2473
        %v2642 = vadd.f32 %v2534, %v2474
        %v2643 = vadd.f32 %v2535, %v2475
        %v2644 = vadd.f32 %v2536, %v2476
        %v2645 = vadd.f32 %v2537, %v2477
        %v2646 = vadd.f32 %v2538, %v2478
        %v2647 = vadd.f32 %v2539, %v2461
        %v2648 = vadd.f32 %v2540, %v2462
        %v2649 = vadd.f32 %v2541, %v2463
        %v2650 = vadd.f32 %v2542, %v2464
        %v2651 = vadd.f32 %v2543, %v2465
        %v2652 = vadd.f32 %v2544, %v2466
        %v2653 = vadd.f32 %v2545, %v2467
        %v2654 = vadd.f32 %v2546, %v2468
        %v2655 = vadd.f32 %v2547, %v2469
        %v2656 = vadd.f32 %v2548, %v2470
        %v2657 = vadd.f32 %v2549, %v2471
        %v2658 = vadd.f32 %v2550, %v2472
        %v2659 = vadd.f32 %v2551, %v2473
        %v2660 = vadd.f32 %v2552, %v2474
        %v2661 = vadd.f32 %v2553, %v2475
        %v2662 = vadd.f32 %v2554, %v2476
        %v2663 = vadd.f32 %v2555, %v2477
        %v2664 = vadd.f32 %v2556, %v2478
        %v2665 = vadd.f32 %v2557, %v2461
        %v2666 = vadd.f32 %v2558, %v2462
        %v2667 = vadd.f32 %v2559, %v2463
        %v2668 = vadd.f32 %v2560, %v2464
        %v2669 = vadd.f32 %v2561, %v2465
        %v2670 = vadd.f32 %v2562, %v2466
        %v2671 = vadd.f32 %v2563, %v2467
        %v2672 = vadd.f32 %v2564, %v2468
        %v2673 = vadd.f32 %v2565, %v2469
        %v2674 = vadd.f32 %v2566, %v2470
        %v2675 = vadd.f32 %v2567, %v2471
        %v2676 = vadd.f32 %v2568, %v2472
        %v2677 = vadd.f32 %v2569, %v2473
        %v2678 = vadd.f32 %v2570, %v2474
        %v2679 = vadd.f32 %v2571, %v2475
        %v2680 = vadd.f32 %v2572, %v2476
        %v2681 = vadd.f32 %v2573, %v2477
        %v2682 = vadd.f32 %v2574, %v2478
        %v2683 = vadd.f32 %v2575, %v2461
        %v2684 = vadd.f32 %v2576, %v2462
        %v2685 = vadd.f32 %v2577, %v2463
        %v2686 = vadd.f32 %v2578, %v2464
        %v2687 = vadd.f32 %v2579, %v2465
        %v2688 = vadd.f32 %v2580, %v2466
        %v2689 = vadd.f32 %v2581, %v2467
        %v2690 = vadd.f32 %v2582, %v2468
        %v2691 = vadd.f32 %v2583, %v2469
        %v2692 = vadd.f32 %v2584, %v2470
        %v2693 = vadd.f32 %v2585, %v2471
        %v2694 = vadd.f32 %v2586, %v2472
        %v2695 = vadd.f32 %v2587, %v2473
        %v2696 = vadd.f32 %v2588, %v2474
        %v2697 = vadd.f32 %v2589, %v2475
        %v2698 = vadd.f32 %v2590, %v2476
        %v2699 = vadd.f32 %v2591, %v2477
        %v2700 = vadd.f32 %v2592, %v2478
        %v2701 = vadd.f32 %v2593, %v2461
        %v2702 = vadd.f32 %v2594, %v2462
        %v2703 = vadd.f32 %v2595, %v2463
        %v2704 = vadd.f32 %v2596, %v2464
        %v2705 = vadd.f32 %v2597, %v2465
        %v2706 = vadd.f32 %v2598, %v2466
        %v2707 = vadd.f32 %v2599, %v2467
        %v2708 = vadd.f32 %v2600, %v2468
        %v2709 = vadd.f32 %v2601, %v2469
        %v2710 = vadd.f32 %v2602, %v2470
        %v2711 = vadd.f32 %v2603, %v2471
        %v2712 = vadd.f32 %v2604, %v2472
        %v2713 = vadd.f32 %v2605, %v2473
        %v2714 = vadd.f32 %v2606, %v2474
        %v2715 = vadd.f32 %v2607, %v2475
        %v2716 = vadd.f32 %v2608, %v2476
        %v2717 = vadd.f32 %v2609, %v2477
        %v2718 = vadd.f32 %v2610, %v2478
        %v2719 = vadd.f32 %v2611, %v2461
        %v2720 = vadd.f32 %v2612, %v2462
        %v2721 = vadd.f32 %v2613, %v2463
        %v2722 = vadd.f32 %v2614, %v2464
        %v2723 = vadd.f32 %v2615, %v2465
        %v2724 = vadd.f32 %v2616, %v2466
        %v2725 = vadd.f32 %v2617, %v2467
        %v2726 = vadd.f32 %v2618, %v2468
        %v2727 = vadd.f32 %v2619, %v2469
        %v2728 = vadd.f32 %v2620, %v2470
        %v2729 = vadd.f32 %v2621, %v2471
        %v2730 = vadd.f32 %v2622, %v2472
        %v2731 = vadd.f32 %v2623, %v2473
        %v2732 = vadd.f32 %v2624, %v2474
        %v2733 = vadd.f32 %v2625, %v2475
        %v2734 = vadd.f32 %v2626, %v2476
        %v2735 = vadd.f32 %v2627, %v2477
        %v2736 = vadd.f32 %v2628, %v2478
        %2737 = vst [vmem:[%s408] sm:$0xff] %v2629
        %2738 = vst [vmem:[%s408 + $0x8] sm:$0xff] %v2630
        %2739 = vst [vmem:[%s408 + $0x10] sm:$0xff] %v2631
        %2740 = vst [vmem:[%s408 + $0x18] sm:$0xff] %v2632
        %2741 = vst [vmem:[%s408 + $0x20] sm:$0xff] %v2633
        %2742 = vst [vmem:[%s408 + $0x28] sm:$0xff] %v2634
        %2743 = vst [vmem:[%s408 + $0x30] sm:$0xff] %v2635
        %2744 = vst [vmem:[%s408 + $0x38] sm:$0xff] %v2636
        %2745 = vst [vmem:[%s408 + $0x40] sm:$0xff] %v2637
        %2746 = vst [vmem:[%s408 + $0x48] sm:$0xff] %v2638
        %2747 = vst [vmem:[%s408 + $0x50] sm:$0xff] %v2639
        %2748 = vst [vmem:[%s408 + $0x58] sm:$0xff] %v2640
        %2749 = vst [vmem:[%s408 + $0x60] sm:$0xff] %v2641
        %2750 = vst [vmem:[%s408 + $0x68] sm:$0xff] %v2642
        %2751 = vst [vmem:[%s408 + $0x70] sm:$0xff] %v2643
        %2752 = vst [vmem:[%s408 + $0x78] sm:$0xff] %v2644
        %2753 = vst [vmem:[%s408 + $0x80] sm:$0xff] %v2645
        %2754 = vst [vmem:[%s408 + $0x88] sm:$0xff] %v2646
        %2755 = vst [vmem:[%s408 + $0x90] sm:$0xff] %v2647
        %2756 = vst [vmem:[%s408 + $0x98] sm:$0xff] %v2648
        %2757 = vst [vmem:[%s408 + $0xa0] sm:$0xff] %v2649
        %2758 = vst [vmem:[%s408 + $0xa8] sm:$0xff] %v2650
        %2759 = vst [vmem:[%s408 + $0xb0] sm:$0xff] %v2651
        %2760 = vst [vmem:[%s408 + $0xb8] sm:$0xff] %v2652
        %2761 = vst [vmem:[%s408 + $0xc0] sm:$0xff] %v2653
        %2762 = vst [vmem:[%s408 + $0xc8] sm:$0xff] %v2654
        %2763 = vst [vmem:[%s408 + $0xd0] sm:$0xff] %v2655
        %2764 = vst [vmem:[%s408 + $0xd8] sm:$0xff] %v2656
        %2765 = vst [vmem:[%s408 + $0xe0] sm:$0xff] %v2657
        %2766 = vst [vmem:[%s408 + $0xe8] sm:$0xff] %v2658
        %2767 = vst [vmem:[%s408 + $0xf0] sm:$0xff] %v2659
        %2768 = vst [vmem:[%s408 + $0xf8] sm:$0xff] %v2660
        %2769 = vst [vmem:[%s408 + $0x100] sm:$0xff] %v2661
        %2770 = vst [vmem:[%s408 + $0x108] sm:$0xff] %v2662
        %2771 = vst [vmem:[%s408 + $0x110] sm:$0xff] %v2663
        %2772 = vst [vmem:[%s408 + $0x118] sm:$0xff] %v2664
        %2773 = vst [vmem:[%s408 + $0x120] sm:$0xff] %v2665
        %2774 = vst [vmem:[%s408 + $0x128] sm:$0xff] %v2666
        %2775 = vst [vmem:[%s408 + $0x130] sm:$0xff] %v2667
        %2776 = vst [vmem:[%s408 + $0x138] sm:$0xff] %v2668
        %2777 = vst [vmem:[%s408 + $0x140] sm:$0xff] %v2669
        %2778 = vst [vmem:[%s408 + $0x148] sm:$0xff] %v2670
        %2779 = vst [vmem:[%s408 + $0x150] sm:$0xff] %v2671
        %2780 = vst [vmem:[%s408 + $0x158] sm:$0xff] %v2672
        %2781 = vst [vmem:[%s408 + $0x160] sm:$0xff] %v2673
        %2782 = vst [vmem:[%s408 + $0x168] sm:$0xff] %v2674
        %2783 = vst [vmem:[%s408 + $0x170] sm:$0xff] %v2675
        %2784 = vst [vmem:[%s408 + $0x178] sm:$0xff] %v2676
        %2785 = vst [vmem:[%s408 + $0x180] sm:$0xff] %v2677
        %2786 = vst [vmem:[%s408 + $0x188] sm:$0xff] %v2678
        %2787 = vst [vmem:[%s408 + $0x190] sm:$0xff] %v2679
        %2788 = vst [vmem:[%s408 + $0x198] sm:$0xff] %v2680
        %2789 = vst [vmem:[%s408 + $0x1a0] sm:$0xff] %v2681
        %2790 = vst [vmem:[%s408 + $0x1a8] sm:$0xff] %v2682
        %2791 = vst [vmem:[%s408 + $0x1b0] sm:$0xff] %v2683
        %2792 = vst [vmem:[%s408 + $0x1b8] sm:$0xff] %v2684
        %2793 = vst [vmem:[%s408 + $0x1c0] sm:$0xff] %v2685
        %2794 = vst [vmem:[%s408 + $0x1c8] sm:$0xff] %v2686
        %2795 = vst [vmem:[%s408 + $0x1d0] sm:$0xff] %v2687
        %2796 = vst [vmem:[%s408 + $0x1d8] sm:$0xff] %v2688
        %2797 = vst [vmem:[%s408 + $0x1e0] sm:$0xff] %v2689
        %2798 = vst [vmem:[%s408 + $0x1e8] sm:$0xff] %v2690
        %2799 = vst [vmem:[%s408 + $0x1f0] sm:$0xff] %v2691
        %2800 = vst [vmem:[%s408 + $0x1f8] sm:$0xff] %v2692
        %2801 = vst [vmem:[%s408 + $0x200] sm:$0xff] %v2693
        %2802 = vst [vmem:[%s408 + $0x208] sm:$0xff] %v2694
        %2803 = vst [vmem:[%s408 + $0x210] sm:$0xff] %v2695
        %2804 = vst [vmem:[%s408 + $0x218] sm:$0xff] %v2696
        %2805 = vst [vmem:[%s408 + $0x220] sm:$0xff] %v2697
        %2806 = vst [vmem:[%s408 + $0x228] sm:$0xff] %v2698
        %2807 = vst [vmem:[%s408 + $0x230] sm:$0xff] %v2699
        %2808 = vst [vmem:[%s408 + $0x238] sm:$0xff] %v2700
        %2809 = vst [vmem:[%s408 + $0x240] sm:$0xff] %v2701
        %2810 = vst [vmem:[%s408 + $0x248] sm:$0xff] %v2702
        %2811 = vst [vmem:[%s408 + $0x250] sm:$0xff] %v2703
        %2812 = vst [vmem:[%s408 + $0x258] sm:$0xff] %v2704
        %2813 = vst [vmem:[%s408 + $0x260] sm:$0xff] %v2705
        %2814 = vst [vmem:[%s408 + $0x268] sm:$0xff] %v2706
        %2815 = vst [vmem:[%s408 + $0x270] sm:$0xff] %v2707
        %2816 = vst [vmem:[%s408 + $0x278] sm:$0xff] %v2708
        %2817 = vst [vmem:[%s408 + $0x280] sm:$0xff] %v2709
        %2818 = vst [vmem:[%s408 + $0x288] sm:$0xff] %v2710
        %2819 = vst [vmem:[%s408 + $0x290] sm:$0xff] %v2711
        %2820 = vst [vmem:[%s408 + $0x298] sm:$0xff] %v2712
        %2821 = vst [vmem:[%s408 + $0x2a0] sm:$0xff] %v2713
        %2822 = vst [vmem:[%s408 + $0x2a8] sm:$0xff] %v2714
        %2823 = vst [vmem:[%s408 + $0x2b0] sm:$0xff] %v2715
        %2824 = vst [vmem:[%s408 + $0x2b8] sm:$0xff] %v2716
        %2825 = vst [vmem:[%s408 + $0x2c0] sm:$0xff] %v2717
        %2826 = vst [vmem:[%s408 + $0x2c8] sm:$0xff] %v2718
        %2827 = vst [vmem:[%s408 + $0x2d0] sm:$0xff] %v2719
        %2828 = vst [vmem:[%s408 + $0x2d8] sm:$0xff] %v2720
        %2829 = vst [vmem:[%s408 + $0x2e0] sm:$0xff] %v2721
        %2830 = vst [vmem:[%s408 + $0x2e8] sm:$0xff] %v2722
        %2831 = vst [vmem:[%s408 + $0x2f0] sm:$0xff] %v2723
        %2832 = vst [vmem:[%s408 + $0x2f8] sm:$0xff] %v2724
        %2833 = vst [vmem:[%s408 + $0x300] sm:$0xff] %v2725
        %2834 = vst [vmem:[%s408 + $0x308] sm:$0xff] %v2726
        %2835 = vst [vmem:[%s408 + $0x310] sm:$0xff] %v2727
        %2836 = vst [vmem:[%s408 + $0x318] sm:$0xff] %v2728
        %2837 = vst [vmem:[%s408 + $0x320] sm:$0xff] %v2729
        %2838 = vst [vmem:[%s408 + $0x328] sm:$0xff] %v2730
        %2839 = vst [vmem:[%s408 + $0x330] sm:$0xff] %v2731
        %2840 = vst [vmem:[%s408 + $0x338] sm:$0xff] %v2732
        %2841 = vst [vmem:[%s408 + $0x340] sm:$0xff] %v2733
        %2842 = vst [vmem:[%s408 + $0x348] sm:$0xff] %v2734
        %2843 = vst [vmem:[%s408 + $0x350] sm:$0xff] %v2735
        %2844 = vst [vmem:[%s408 + $0x358] sm:$0xff] %v2736
        %v2845 = vld [vmem:[#allocation13] sm:$0xff]
        %v2846 = vld [vmem:[#allocation13 + $0x8] sm:$0xff]
        %v2847 = vld [vmem:[#allocation13 + $0x10] sm:$0xff]
        %v2848 = vld [vmem:[#allocation13 + $0x18] sm:$0xff]
        %v2849 = vld [vmem:[#allocation13 + $0x20] sm:$0xff]
        %v2850 = vld [vmem:[#allocation13 + $0x28] sm:$0xff]
        %v2851 = vld [vmem:[#allocation13 + $0x30] sm:$0xff]
        %v2852 = vld [vmem:[#allocation13 + $0x38] sm:$0xff]
        %v2853 = vld [vmem:[#allocation13 + $0x40] sm:$0xff]
        %v2854 = vld [vmem:[#allocation13 + $0x48] sm:$0xff]
        %v2855 = vld [vmem:[#allocation13 + $0x50] sm:$0xff]
        %v2856 = vld [vmem:[#allocation13 + $0x58] sm:$0xff]
        %v2857 = vld [vmem:[#allocation13 + $0x60] sm:$0xff]
        %v2858 = vld [vmem:[#allocation13 + $0x68] sm:$0xff]
        %v2859 = vld [vmem:[#allocation13 + $0x70] sm:$0xff]
        %v2860 = vld [vmem:[#allocation13 + $0x78] sm:$0xff]
        %v2861 = vld [vmem:[#allocation13 + $0x80] sm:$0xff]
        %v2862 = vld [vmem:[#allocation13 + $0x88] sm:$0xff]
        %v2863 = vld [vmem:[#allocation13 + $0x90] sm:$0xff]
        %v2864 = vld [vmem:[#allocation13 + $0x98] sm:$0xff]
        %v2865 = vld [vmem:[#allocation13 + $0xa0] sm:$0xff]
        %v2866 = vld [vmem:[#allocation13 + $0xa8] sm:$0xff]
        %v2867 = vld [vmem:[#allocation13 + $0xb0] sm:$0xff]
        %v2868 = vld [vmem:[#allocation13 + $0xb8] sm:$0xff]
        %v2869 = vld [vmem:[#allocation13 + $0xc0] sm:$0xff]
        %v2870 = vld [vmem:[#allocation13 + $0xc8] sm:$0xff]
        %v2871 = vld [vmem:[#allocation13 + $0xd0] sm:$0xff]
        %v2872 = vld [vmem:[#allocation13 + $0xd8] sm:$0xff]
        %v2873 = vld [vmem:[#allocation13 + $0xe0] sm:$0xff]
        %v2874 = vld [vmem:[#allocation13 + $0xe8] sm:$0xff]
        %v2875 = vld [vmem:[#allocation13 + $0xf0] sm:$0xff]
        %v2876 = vld [vmem:[#allocation13 + $0xf8] sm:$0xff]
        %v2877 = vld [vmem:[#allocation13 + $0x100] sm:$0xff]
        %v2878 = vld [vmem:[#allocation13 + $0x108] sm:$0xff]
        %v2879 = vld [vmem:[#allocation13 + $0x110] sm:$0xff]
        %v2880 = vld [vmem:[#allocation13 + $0x118] sm:$0xff]
        %v2881 = vld [vmem:[#allocation13 + $0x120] sm:$0xff]
        %v2882 = vld [vmem:[#allocation13 + $0x128] sm:$0xff]
        %v2883 = vld [vmem:[#allocation13 + $0x130] sm:$0xff]
        %v2884 = vld [vmem:[#allocation13 + $0x138] sm:$0xff]
        %v2885 = vld [vmem:[#allocation13 + $0x140] sm:$0xff]
        %v2886 = vld [vmem:[#allocation13 + $0x148] sm:$0xff]
        %v2887 = vld [vmem:[#allocation13 + $0x150] sm:$0xff]
        %v2888 = vld [vmem:[#allocation13 + $0x158] sm:$0xff]
        %v2889 = vld [vmem:[#allocation13 + $0x160] sm:$0xff]
        %v2890 = vld [vmem:[#allocation13 + $0x168] sm:$0xff]
        %v2891 = vld [vmem:[#allocation13 + $0x170] sm:$0xff]
        %v2892 = vld [vmem:[#allocation13 + $0x178] sm:$0xff]
        %v2893 = vld [vmem:[#allocation13 + $0x180] sm:$0xff]
        %v2894 = vld [vmem:[#allocation13 + $0x188] sm:$0xff]
        %v2895 = vld [vmem:[#allocation13 + $0x190] sm:$0xff]
        %v2896 = vld [vmem:[#allocation13 + $0x198] sm:$0xff]
        %v2897 = vld [vmem:[#allocation13 + $0x1a0] sm:$0xff]
        %v2898 = vld [vmem:[#allocation13 + $0x1a8] sm:$0xff]
        %v2899 = vld [vmem:[#allocation13 + $0x1b0] sm:$0xff]
        %v2900 = vld [vmem:[#allocation13 + $0x1b8] sm:$0xff]
        %v2901 = vld [vmem:[#allocation13 + $0x1c0] sm:$0xff]
        %v2902 = vld [vmem:[#allocation13 + $0x1c8] sm:$0xff]
        %v2903 = vld [vmem:[#allocation13 + $0x1d0] sm:$0xff]
        %v2904 = vld [vmem:[#allocation13 + $0x1d8] sm:$0xff]
        %v2905 = vld [vmem:[#allocation13 + $0x1e0] sm:$0xff]
        %v2906 = vld [vmem:[#allocation13 + $0x1e8] sm:$0xff]
        %v2907 = vld [vmem:[#allocation13 + $0x1f0] sm:$0xff]
        %v2908 = vld [vmem:[#allocation13 + $0x1f8] sm:$0xff]
        %v2909 = vld [vmem:[#allocation13 + $0x200] sm:$0xff]
        %v2910 = vld [vmem:[#allocation13 + $0x208] sm:$0xff]
        %v2911 = vld [vmem:[#allocation13 + $0x210] sm:$0xff]
        %v2912 = vld [vmem:[#allocation13 + $0x218] sm:$0xff]
        %v2913 = vld [vmem:[#allocation13 + $0x220] sm:$0xff]
        %v2914 = vld [vmem:[#allocation13 + $0x228] sm:$0xff]
        %v2915 = vld [vmem:[#allocation13 + $0x230] sm:$0xff]
        %v2916 = vld [vmem:[#allocation13 + $0x238] sm:$0xff]
        %v2917 = vld [vmem:[#allocation13 + $0x240] sm:$0xff]
        %v2918 = vld [vmem:[#allocation13 + $0x248] sm:$0xff]
        %v2919 = vld [vmem:[#allocation13 + $0x250] sm:$0xff]
        %v2920 = vld [vmem:[#allocation13 + $0x258] sm:$0xff]
        %v2921 = vld [vmem:[#allocation13 + $0x260] sm:$0xff]
        %v2922 = vld [vmem:[#allocation13 + $0x268] sm:$0xff]
        %v2923 = vld [vmem:[#allocation13 + $0x270] sm:$0xff]
        %v2924 = vld [vmem:[#allocation13 + $0x278] sm:$0xff]
        %v2925 = vld [vmem:[#allocation13 + $0x280] sm:$0xff]
        %v2926 = vld [vmem:[#allocation13 + $0x288] sm:$0xff]
        %v2927 = vld [vmem:[#allocation13 + $0x290] sm:$0xff]
        %v2928 = vld [vmem:[#allocation13 + $0x298] sm:$0xff]
        %v2929 = vld [vmem:[#allocation13 + $0x2a0] sm:$0xff]
        %v2930 = vld [vmem:[#allocation13 + $0x2a8] sm:$0xff]
        %v2931 = vld [vmem:[#allocation13 + $0x2b0] sm:$0xff]
        %v2932 = vld [vmem:[#allocation13 + $0x2b8] sm:$0xff]
        %v2933 = vld [vmem:[#allocation13 + $0x2c0] sm:$0xff]
        %v2934 = vld [vmem:[#allocation13 + $0x2c8] sm:$0xff]
        %v2935 = vld [vmem:[#allocation13 + $0x2d0] sm:$0xff]
        %v2936 = vld [vmem:[#allocation13 + $0x2d8] sm:$0xff]
        %v2937 = vld [vmem:[#allocation13 + $0x2e0] sm:$0xff]
        %v2938 = vld [vmem:[#allocation13 + $0x2e8] sm:$0xff]
        %v2939 = vld [vmem:[#allocation13 + $0x2f0] sm:$0xff]
        %v2940 = vld [vmem:[#allocation13 + $0x2f8] sm:$0xff]
        %v2941 = vld [vmem:[#allocation13 + $0x300] sm:$0xff]
        %v2942 = vld [vmem:[#allocation13 + $0x308] sm:$0xff]
        %v2943 = vld [vmem:[#allocation13 + $0x310] sm:$0xff]
        %v2944 = vld [vmem:[#allocation13 + $0x318] sm:$0xff]
        %v2945 = vld [vmem:[#allocation13 + $0x320] sm:$0xff]
        %v2946 = vld [vmem:[#allocation13 + $0x328] sm:$0xff]
        %v2947 = vld [vmem:[#allocation13 + $0x330] sm:$0xff]
        %v2948 = vld [vmem:[#allocation13 + $0x338] sm:$0xff]
        %v2949 = vld [vmem:[#allocation13 + $0x340] sm:$0xff]
        %v2950 = vld [vmem:[#allocation13 + $0x348] sm:$0xff]
        %v2951 = vld [vmem:[#allocation13 + $0x350] sm:$0xff]
        %v2952 = vld [vmem:[#allocation13 + $0x358] sm:$0xff]
        %v2953 = vadd.f32 %v2845, %v2503
        %v2954 = vadd.f32 %v2846, %v2504
        %v2955 = vadd.f32 %v2847, %v2505
        %v2956 = vadd.f32 %v2848, %v2506
        %v2957 = vadd.f32 %v2849, %v2507
        %v2958 = vadd.f32 %v2850, %v2508
        %v2959 = vadd.f32 %v2851, %v2509
        %v2960 = vadd.f32 %v2852, %v2510
        %v2961 = vadd.f32 %v2853, %v2511
        %v2962 = vadd.f32 %v2854, %v2512
        %v2963 = vadd.f32 %v2855, %v2513
        %v2964 = vadd.f32 %v2856, %v2514
        %v2965 = vadd.f32 %v2857, %v2515
        %v2966 = vadd.f32 %v2858, %v2516
        %v2967 = vadd.f32 %v2859, %v2517
        %v2968 = vadd.f32 %v2860, %v2518
        %v2969 = vadd.f32 %v2861, %v2519
        %v2970 = vadd.f32 %v2862, %v2520
        %v2971 = vadd.f32 %v2863, %v2503
        %v2972 = vadd.f32 %v2864, %v2504
        %v2973 = vadd.f32 %v2865, %v2505
        %v2974 = vadd.f32 %v2866, %v2506
        %v2975 = vadd.f32 %v2867, %v2507
        %v2976 = vadd.f32 %v2868, %v2508
        %v2977 = vadd.f32 %v2869, %v2509
        %v2978 = vadd.f32 %v2870, %v2510
        %v2979 = vadd.f32 %v2871, %v2511
        %v2980 = vadd.f32 %v2872, %v2512
        %v2981 = vadd.f32 %v2873, %v2513
        %v2982 = vadd.f32 %v2874, %v2514
        %v2983 = vadd.f32 %v2875, %v2515
        %v2984 = vadd.f32 %v2876, %v2516
        %v2985 = vadd.f32 %v2877, %v2517
        %v2986 = vadd.f32 %v2878, %v2518
        %v2987 = vadd.f32 %v2879, %v2519
        %v2988 = vadd.f32 %v2880, %v2520
        %v2989 = vadd.f32 %v2881, %v2503
        %v2990 = vadd.f32 %v2882, %v2504
        %v2991 = vadd.f32 %v2883, %v2505
        %v2992 = vadd.f32 %v2884, %v2506
        %v2993 = vadd.f32 %v2885, %v2507
        %v2994 = vadd.f32 %v2886, %v2508
        %v2995 = vadd.f32 %v2887, %v2509
        %v2996 = vadd.f32 %v2888, %v2510
        %v2997 = vadd.f32 %v2889, %v2511
        %v2998 = vadd.f32 %v2890, %v2512
        %v2999 = vadd.f32 %v2891, %v2513
        %v3000 = vadd.f32 %v2892, %v2514
        %v3001 = vadd.f32 %v2893, %v2515
        %v3002 = vadd.f32 %v2894, %v2516
        %v3003 = vadd.f32 %v2895, %v2517
        %v3004 = vadd.f32 %v2896, %v2518
        %v3005 = vadd.f32 %v2897, %v2519
        %v3006 = vadd.f32 %v2898, %v2520
        %v3007 = vadd.f32 %v2899, %v2503
        %v3008 = vadd.f32 %v2900, %v2504
        %v3009 = vadd.f32 %v2901, %v2505
        %v3010 = vadd.f32 %v2902, %v2506
        %v3011 = vadd.f32 %v2903, %v2507
        %v3012 = vadd.f32 %v2904, %v2508
        %v3013 = vadd.f32 %v2905, %v2509
        %v3014 = vadd.f32 %v2906, %v2510
        %v3015 = vadd.f32 %v2907, %v2511
        %v3016 = vadd.f32 %v2908, %v2512
        %v3017 = vadd.f32 %v2909, %v2513
        %v3018 = vadd.f32 %v2910, %v2514
        %v3019 = vadd.f32 %v2911, %v2515
        %v3020 = vadd.f32 %v2912, %v2516
        %v3021 = vadd.f32 %v2913, %v2517
        %v3022 = vadd.f32 %v2914, %v2518
        %v3023 = vadd.f32 %v2915, %v2519
        %v3024 = vadd.f32 %v2916, %v2520
        %v3025 = vadd.f32 %v2917, %v2503
        %v3026 = vadd.f32 %v2918, %v2504
        %v3027 = vadd.f32 %v2919, %v2505
        %v3028 = vadd.f32 %v2920, %v2506
        %v3029 = vadd.f32 %v2921, %v2507
        %v3030 = vadd.f32 %v2922, %v2508
        %v3031 = vadd.f32 %v2923, %v2509
        %v3032 = vadd.f32 %v2924, %v2510
        %v3033 = vadd.f32 %v2925, %v2511
        %v3034 = vadd.f32 %v2926, %v2512
        %v3035 = vadd.f32 %v2927, %v2513
        %v3036 = vadd.f32 %v2928, %v2514
        %v3037 = vadd.f32 %v2929, %v2515
        %v3038 = vadd.f32 %v2930, %v2516
        %v3039 = vadd.f32 %v2931, %v2517
        %v3040 = vadd.f32 %v2932, %v2518
        %v3041 = vadd.f32 %v2933, %v2519
        %v3042 = vadd.f32 %v2934, %v2520
        %v3043 = vadd.f32 %v2935, %v2503
        %v3044 = vadd.f32 %v2936, %v2504
        %v3045 = vadd.f32 %v2937, %v2505
        %v3046 = vadd.f32 %v2938, %v2506
        %v3047 = vadd.f32 %v2939, %v2507
        %v3048 = vadd.f32 %v2940, %v2508
        %v3049 = vadd.f32 %v2941, %v2509
        %v3050 = vadd.f32 %v2942, %v2510
        %v3051 = vadd.f32 %v2943, %v2511
        %v3052 = vadd.f32 %v2944, %v2512
        %v3053 = vadd.f32 %v2945, %v2513
        %v3054 = vadd.f32 %v2946, %v2514
        %v3055 = vadd.f32 %v2947, %v2515
        %v3056 = vadd.f32 %v2948, %v2516
        %v3057 = vadd.f32 %v2949, %v2517
        %v3058 = vadd.f32 %v2950, %v2518
        %v3059 = vadd.f32 %v2951, %v2519
        %v3060 = vadd.f32 %v2952, %v2520
        %3061 = vst [vmem:[%s415] sm:$0xff] %v2953
        %3062 = vst [vmem:[%s415 + $0x8] sm:$0xff] %v2954
        %3063 = vst [vmem:[%s415 + $0x10] sm:$0xff] %v2955
        %3064 = vst [vmem:[%s415 + $0x18] sm:$0xff] %v2956
        %3065 = vst [vmem:[%s415 + $0x20] sm:$0xff] %v2957
        %3066 = vst [vmem:[%s415 + $0x28] sm:$0xff] %v2958
        %3067 = vst [vmem:[%s415 + $0x30] sm:$0xff] %v2959
        %3068 = vst [vmem:[%s415 + $0x38] sm:$0xff] %v2960
        %3069 = vst [vmem:[%s415 + $0x40] sm:$0xff] %v2961
        %3070 = vst [vmem:[%s415 + $0x48] sm:$0xff] %v2962
        %3071 = vst [vmem:[%s415 + $0x50] sm:$0xff] %v2963
        %3072 = vst [vmem:[%s415 + $0x58] sm:$0xff] %v2964
        %3073 = vst [vmem:[%s415 + $0x60] sm:$0xff] %v2965
        %3074 = vst [vmem:[%s415 + $0x68] sm:$0xff] %v2966
        %3075 = vst [vmem:[%s415 + $0x70] sm:$0xff] %v2967
        %3076 = vst [vmem:[%s415 + $0x78] sm:$0xff] %v2968
        %3077 = vst [vmem:[%s415 + $0x80] sm:$0xff] %v2969
        %3078 = vst [vmem:[%s415 + $0x88] sm:$0xff] %v2970
        %3079 = vst [vmem:[%s415 + $0x90] sm:$0xff] %v2971
        %3080 = vst [vmem:[%s415 + $0x98] sm:$0xff] %v2972
        %3081 = vst [vmem:[%s415 + $0xa0] sm:$0xff] %v2973
        %3082 = vst [vmem:[%s415 + $0xa8] sm:$0xff] %v2974
        %3083 = vst [vmem:[%s415 + $0xb0] sm:$0xff] %v2975
        %3084 = vst [vmem:[%s415 + $0xb8] sm:$0xff] %v2976
        %3085 = vst [vmem:[%s415 + $0xc0] sm:$0xff] %v2977
        %3086 = vst [vmem:[%s415 + $0xc8] sm:$0xff] %v2978
        %3087 = vst [vmem:[%s415 + $0xd0] sm:$0xff] %v2979
        %3088 = vst [vmem:[%s415 + $0xd8] sm:$0xff] %v2980
        %3089 = vst [vmem:[%s415 + $0xe0] sm:$0xff] %v2981
        %3090 = vst [vmem:[%s415 + $0xe8] sm:$0xff] %v2982
        %3091 = vst [vmem:[%s415 + $0xf0] sm:$0xff] %v2983
        %3092 = vst [vmem:[%s415 + $0xf8] sm:$0xff] %v2984
        %3093 = vst [vmem:[%s415 + $0x100] sm:$0xff] %v2985
        %3094 = vst [vmem:[%s415 + $0x108] sm:$0xff] %v2986
        %3095 = vst [vmem:[%s415 + $0x110] sm:$0xff] %v2987
        %3096 = vst [vmem:[%s415 + $0x118] sm:$0xff] %v2988
        %3097 = vst [vmem:[%s415 + $0x120] sm:$0xff] %v2989
        %3098 = vst [vmem:[%s415 + $0x128] sm:$0xff] %v2990
        %3099 = vst [vmem:[%s415 + $0x130] sm:$0xff] %v2991
        %3100 = vst [vmem:[%s415 + $0x138] sm:$0xff] %v2992
        %3101 = vst [vmem:[%s415 + $0x140] sm:$0xff] %v2993
        %3102 = vst [vmem:[%s415 + $0x148] sm:$0xff] %v2994
        %3103 = vst [vmem:[%s415 + $0x150] sm:$0xff] %v2995
        %3104 = vst [vmem:[%s415 + $0x158] sm:$0xff] %v2996
        %3105 = vst [vmem:[%s415 + $0x160] sm:$0xff] %v2997
        %3106 = vst [vmem:[%s415 + $0x168] sm:$0xff] %v2998
        %3107 = vst [vmem:[%s415 + $0x170] sm:$0xff] %v2999
        %3108 = vst [vmem:[%s415 + $0x178] sm:$0xff] %v3000
        %3109 = vst [vmem:[%s415 + $0x180] sm:$0xff] %v3001
        %3110 = vst [vmem:[%s415 + $0x188] sm:$0xff] %v3002
        %3111 = vst [vmem:[%s415 + $0x190] sm:$0xff] %v3003
        %3112 = vst [vmem:[%s415 + $0x198] sm:$0xff] %v3004
        %3113 = vst [vmem:[%s415 + $0x1a0] sm:$0xff] %v3005
        %3114 = vst [vmem:[%s415 + $0x1a8] sm:$0xff] %v3006
        %3115 = vst [vmem:[%s415 + $0x1b0] sm:$0xff] %v3007
        %3116 = vst [vmem:[%s415 + $0x1b8] sm:$0xff] %v3008
        %3117 = vst [vmem:[%s415 + $0x1c0] sm:$0xff] %v3009
        %3118 = vst [vmem:[%s415 + $0x1c8] sm:$0xff] %v3010
        %3119 = vst [vmem:[%s415 + $0x1d0] sm:$0xff] %v3011
        %3120 = vst [vmem:[%s415 + $0x1d8] sm:$0xff] %v3012
        %3121 = vst [vmem:[%s415 + $0x1e0] sm:$0xff] %v3013
        %3122 = vst [vmem:[%s415 + $0x1e8] sm:$0xff] %v3014
        %3123 = vst [vmem:[%s415 + $0x1f0] sm:$0xff] %v3015
        %3124 = vst [vmem:[%s415 + $0x1f8] sm:$0xff] %v3016
        %3125 = vst [vmem:[%s415 + $0x200] sm:$0xff] %v3017
        %3126 = vst [vmem:[%s415 + $0x208] sm:$0xff] %v3018
        %3127 = vst [vmem:[%s415 + $0x210] sm:$0xff] %v3019
        %3128 = vst [vmem:[%s415 + $0x218] sm:$0xff] %v3020
        %3129 = vst [vmem:[%s415 + $0x220] sm:$0xff] %v3021
        %3130 = vst [vmem:[%s415 + $0x228] sm:$0xff] %v3022
        %3131 = vst [vmem:[%s415 + $0x230] sm:$0xff] %v3023
        %3132 = vst [vmem:[%s415 + $0x238] sm:$0xff] %v3024
        %3133 = vst [vmem:[%s415 + $0x240] sm:$0xff] %v3025
        %3134 = vst [vmem:[%s415 + $0x248] sm:$0xff] %v3026
        %3135 = vst [vmem:[%s415 + $0x250] sm:$0xff] %v3027
        %3136 = vst [vmem:[%s415 + $0x258] sm:$0xff] %v3028
        %3137 = vst [vmem:[%s415 + $0x260] sm:$0xff] %v3029
        %3138 = vst [vmem:[%s415 + $0x268] sm:$0xff] %v3030
        %3139 = vst [vmem:[%s415 + $0x270] sm:$0xff] %v3031
        %3140 = vst [vmem:[%s415 + $0x278] sm:$0xff] %v3032
        %3141 = vst [vmem:[%s415 + $0x280] sm:$0xff] %v3033
        %3142 = vst [vmem:[%s415 + $0x288] sm:$0xff] %v3034
        %3143 = vst [vmem:[%s415 + $0x290] sm:$0xff] %v3035
        %3144 = vst [vmem:[%s415 + $0x298] sm:$0xff] %v3036
        %3145 = vst [vmem:[%s415 + $0x2a0] sm:$0xff] %v3037
        %3146 = vst [vmem:[%s415 + $0x2a8] sm:$0xff] %v3038
        %3147 = vst [vmem:[%s415 + $0x2b0] sm:$0xff] %v3039
        %3148 = vst [vmem:[%s415 + $0x2b8] sm:$0xff] %v3040
        %3149 = vst [vmem:[%s415 + $0x2c0] sm:$0xff] %v3041
        %3150 = vst [vmem:[%s415 + $0x2c8] sm:$0xff] %v3042
        %3151 = vst [vmem:[%s415 + $0x2d0] sm:$0xff] %v3043
        %3152 = vst [vmem:[%s415 + $0x2d8] sm:$0xff] %v3044
        %3153 = vst [vmem:[%s415 + $0x2e0] sm:$0xff] %v3045
        %3154 = vst [vmem:[%s415 + $0x2e8] sm:$0xff] %v3046
        %3155 = vst [vmem:[%s415 + $0x2f0] sm:$0xff] %v3047
        %3156 = vst [vmem:[%s415 + $0x2f8] sm:$0xff] %v3048
        %3157 = vst [vmem:[%s415 + $0x300] sm:$0xff] %v3049
        %3158 = vst [vmem:[%s415 + $0x308] sm:$0xff] %v3050
        %3159 = vst [vmem:[%s415 + $0x310] sm:$0xff] %v3051
        %3160 = vst [vmem:[%s415 + $0x318] sm:$0xff] %v3052
        %3161 = vst [vmem:[%s415 + $0x320] sm:$0xff] %v3053
        %3162 = vst [vmem:[%s415 + $0x328] sm:$0xff] %v3054
        %3163 = vst [vmem:[%s415 + $0x330] sm:$0xff] %v3055
        %3164 = vst [vmem:[%s415 + $0x338] sm:$0xff] %v3056
        %3165 = vst [vmem:[%s415 + $0x340] sm:$0xff] %v3057
        %3166 = vst [vmem:[%s415 + $0x348] sm:$0xff] %v3058
        %3167 = vst [vmem:[%s415 + $0x350] sm:$0xff] %v3059
        %3168 = vst [vmem:[%s415 + $0x358] sm:$0xff] %v3060
        %s3169 = sand.u32 %s192, 1
        %s3170 = scalar_lea.sflag [#allocation4], %s3169
        %s3171 = sand.u32 %s192, 1
        %s3172 = smul.addr %s3171, 864
        %s3173 = scalar_lea.vmem [#allocation14], %s3172
        %s3174 = sand.u32 %s218, 1
        %s3175 = scalar_lea.sflag [#allocation16], %s3174
        %s3176 = sand.u32 %s218, 1
        %s3177 = smul.addr %s3176, 864
        %s3178 = scalar_lea.vmem [#allocation15], %s3177
        // Predicated region
        $region77: #{tpu_custom_call.1} parent=47 // pred_check
          %p3179 = pneg %p202
        $region78: #{tpu_custom_call.1} parent=47 // pred_check_branch
          %3181 = sbr.rel (%p3179) target = $region80
        $region79: #{tpu_custom_call.1} parent=47 // pred_region
          %s3182 = smul.u32 6, %s32
          %s3184 = ssub.s32 13824, 13824
          %3185 = vsyncadd %s3170, %s3184
          %s3186 = smul.addr %s3182, 18
          %s3187 = smul.addr %s3186, 128
          %s3188 = scalar_lea.hbm %s7, %s3187
          %s3189 = sshll.u32 %s3173, 4
          %s3190 = int_to_ptr.vmem [resolvable:$true] %s3189
          %3195 = dma.vmem_to_hbm [thread:$0]  %s3190, 13824, %s3188, %s3170, 768, 768, 48
        $region80: #{tpu_custom_call.1} parent=47 // pred_fallthru
          _
        // Predicated region
        $region81: #{tpu_custom_call.1} parent=47 // pred_check
          %p3196 = pneg %p228
        $region82: #{tpu_custom_call.1} parent=47 // pred_check_branch
          %3198 = sbr.rel (%p3196) target = $region84
        $region83: #{tpu_custom_call.1} parent=47 // pred_region
          %s3199 = smul.u32 6, %s32
          %s3201 = ssub.s32 13824, 13824
          %3202 = vsyncadd %s3175, %s3201
          %s3203 = smul.addr %s3199, 18
          %s3204 = smul.addr %s3203, 128
          %s3205 = scalar_lea.hbm %s8, %s3204
          %s3206 = sshll.u32 %s3178, 4
          %s3207 = int_to_ptr.vmem [resolvable:$true] %s3206
          %3212 = dma.vmem_to_hbm [thread:$0]  %s3207, 13824, %s3205, %s3175, 768, 768, 48
        $region84: #{tpu_custom_call.1} parent=47 // pred_fallthru
          _
      $region48: #{tpu_custom_call.1} parent=5 // pred_fallthru
        _
      %p3213 = scmp.le.s32.totalorder 2, %s27
      // Predicated region
      $region85: #{tpu_custom_call.1} parent=5 // pred_check
        %p3214 = pneg %p3213
      $region86: #{tpu_custom_call.1} parent=5 // pred_check_branch
        %3216 = sbr.rel (%p3214) target = $region88
      $region87: #{tpu_custom_call.1} parent=5 // pred_region
        %s3217 = ssub.s32 %s27, 2
        // Predicated region
        $region89: #{tpu_custom_call.1} parent=87 // pred_check
          %p3218 = pneg %p208
        $region90: #{tpu_custom_call.1} parent=87 // pred_check_branch
          %3220 = sbr.rel (%p3218) target = $region92
        $region91: #{tpu_custom_call.1} parent=87 // pred_region
          %s3221 = sand.u32 %s193, 1
          %s3222 = scalar_lea.sflag [#allocation4], %s3221
          %s3223 = sand.u32 %s193, 1
          %s3224 = smul.addr %s3223, 864
          %s3225 = scalar_lea.vmem [#allocation14], %s3224
          %3226 = dma.done %s3222, 13824
        $region92: #{tpu_custom_call.1} parent=87 // pred_fallthru
          _
        // Predicated region
        $region93: #{tpu_custom_call.1} parent=87 // pred_check
          %p3227 = pneg %p234
        $region94: #{tpu_custom_call.1} parent=87 // pred_check_branch
          %3229 = sbr.rel (%p3227) target = $region96
        $region95: #{tpu_custom_call.1} parent=87 // pred_region
          %s3230 = sand.u32 %s219, 1
          %s3231 = scalar_lea.sflag [#allocation16], %s3230
          %s3232 = sand.u32 %s219, 1
          %s3233 = smul.addr %s3232, 864
          %s3234 = scalar_lea.vmem [#allocation15], %s3233
          %3235 = dma.done %s3231, 13824
        $region96: #{tpu_custom_call.1} parent=87 // pred_fallthru
          _
      $region88: #{tpu_custom_call.1} parent=5 // pred_fallthru
        _
    $region6: #{tpu_custom_call.1} parent=1 // loop_footer
      %s31 = sadd.s32 1, %s27
    $region7: #{tpu_custom_call.1} parent=1 // loop_footer_branch
      %26 = sbr.rel target = $region3
    $region8: #{tpu_custom_call.1} parent=1 // loop_exit
      _
    %3236 = vsyncpa [#allocation3], 1
    %s3237 = scalar_lea.sflag [#allocation3], 1
    %3238 = vsyncpa %s3237, 1
    %3239 = vsyncpa [#allocation6], 1
    %3240 = vsyncpa [#allocation9], 1
    %3241 = vsyncpa [#allocation12], 1
    %3242 = vsyncpa [#allocation4], 1
    %s3243 = scalar_lea.sflag [#allocation4], 1
    %3244 = vsyncpa %s3243, 1
    %3245 = vsyncpa [#allocation16], 1
    %s3246 = scalar_lea.sflag [#allocation16], 1
    %3247 = vsyncpa %s3246, 1

</llo_original>
